<compile_context>
chip_gen: v7x
topology: tpu7x:2x2x1
jax: 0.10.0
libtpu: 0.0.40
codegen_flags: <defaults>
</compile_context>

<pallas_src>
import functools

import jax
import jax.numpy as jnp
from jax.experimental import pallas as pl
from jax.experimental.pallas import tpu as pltpu

F32 = jnp.float32
BF16 = jnp.bfloat16


def _ru(n, m):
    return ((n + m - 1) // m) * m


_NUM_M_TILES = None


def _num_m_tiles():
    """1 grid step on single-TC chips (v5e/v6e), 2 parallel steps on dual-TC v7x."""
    global _NUM_M_TILES
    if _NUM_M_TILES is None:
        try:
            kind = jax.devices()[0].device_kind.lower()
        except Exception:
            kind = ""
        _NUM_M_TILES = 2 if ("v7" in kind or "tpu7" in kind) else 1
    return _NUM_M_TILES


def _tile_m(M):
    nt = _num_m_tiles()
    m8 = _ru(M, 8)
    if nt <= 1 or m8 <= 8:
        return m8
    return _ru((M + nt - 1) // nt, 8)


def _pad2(x, rows, cols):
    r, c = x.shape
    if rows == r and cols == c:
        return x
    return jnp.pad(x, ((0, rows - r), (0, cols - c)))


# --------------------------- Pallas kernels ---------------------------------

def _conv_bias_kernel(a_ref, b_ref, t_ref, o_ref, *, relu):
    """o = relu?(a) @ b + bias_row  (BN scale folded into b; f32 accumulation)."""
    a = a_ref[...]
    if relu:
        a = jnp.maximum(a, 0)
    acc = jnp.dot(a, b_ref[...], preferred_element_type=jnp.float32)
    o_ref[...] = acc + t_ref[...]


def _edge_kernel(a_ref, b_ref, c_ref, d_ref, t_ref, o_ref):
    """All NAS edges sharing one source node, fused into one launch:
         o = patches_bf16 @ w_folded_bf16     (1x1+3x3 convs, BN scale & mixture folded)
           + [skip|pool]_f32 @ placement_f32  (skip / avg-pool mixture, kept in f32)
           + bias_row                          (folded BN biases)."""
    acc = jnp.dot(a_ref[...], b_ref[...], preferred_element_type=jnp.float32)
    acc = acc + jnp.dot(c_ref[...], d_ref[...], preferred_element_type=jnp.float32)
    o_ref[...] = acc + t_ref[...]


# --------------------------- Pallas wrappers ---------------------------------

def pallas_conv_matmul(a_bf16, b_f32, bias, *, relu):
    """(M,K) bf16 patches @ (K,N) folded weights + bias(N,); N lane-padded to 128."""
    M, K = a_bf16.shape
    N = b_f32.shape[1]
    TM = _tile_m(M)
    Mp, Kp, Np = _ru(M, TM), _ru(K, 8), _ru(N, 128)
    a = _pad2(a_bf16, Mp, Kp)
    b = _pad2(b_f32, Kp, Np).astype(BF16)          # fold done in f32, cast once here
    t = _pad2(bias.astype(F32).reshape(1, N), 1, Np)
    cost = pl.CostEstimate(
        flops=2 * Mp * Kp * Np, transcendentals=0,
        bytes_accessed=2 * (Mp * Kp + Kp * Np) + 4 * (Np + Mp * Np))
    out = pl.pallas_call(
        functools.partial(_conv_bias_kernel, relu=relu),
        out_shape=jax.ShapeDtypeStruct((Mp, Np), F32),
        grid=(Mp // TM,),
        in_specs=[
            pl.BlockSpec((TM, Kp), lambda i: (i, 0)),
            pl.BlockSpec((Kp, Np), lambda i: (0, 0)),
            pl.BlockSpec((1, Np), lambda i: (0, 0)),
        ],
        out_specs=pl.BlockSpec((TM, Np), lambda i: (i, 0)),
        compiler_params=pltpu.CompilerParams(dimension_semantics=("parallel",)),
        cost_estimate=cost,
    )(a, b, t)
    return out[:M, :N]


def pallas_edge_matmul(patches_bf16, w_f32, sp_f32, d_f32, bias):
    """Fused per-source-node edge mixture (see _edge_kernel).  Returns (M, Np>=E*C)."""
    M, K1 = patches_bf16.shape
    K2 = sp_f32.shape[1]
    N = w_f32.shape[1]
    TM = _tile_m(M)
    Mp, K1p, K2p, Np = _ru(M, TM), _ru(K1, 8), _ru(K2, 8), _ru(N, 128)
    a = _pad2(patches_bf16, Mp, K1p)
    b = _pad2(w_f32, K1p, Np).astype(BF16)
    c = _pad2(sp_f32, Mp, K2p)
    d = _pad2(d_f32, K2p, Np)
    t = _pad2(bias.astype(F32).reshape(1, N), 1, Np)
    cost = pl.CostEstimate(
        flops=2 * Mp * Np * (K1p + K2p), transcendentals=0,
        bytes_accessed=2 * (Mp * K1p + K1p * Np)
        + 4 * (Mp * K2p + K2p * Np + Np + Mp * Np))
    out = pl.pallas_call(
        _edge_kernel,
        out_shape=jax.ShapeDtypeStruct((Mp, Np), F32),
        grid=(Mp // TM,),
        in_specs=[
            pl.BlockSpec((TM, K1p), lambda i: (i, 0)),
            pl.BlockSpec((K1p, Np), lambda i: (0, 0)),
            pl.BlockSpec((TM, K2p), lambda i: (i, 0)),
            pl.BlockSpec((K2p, Np), lambda i: (0, 0)),
            pl.BlockSpec((1, Np), lambda i: (0, 0)),
        ],
        out_specs=pl.BlockSpec((TM, Np), lambda i: (i, 0)),
        compiler_params=pltpu.CompilerParams(dimension_semantics=("parallel",)),
        cost_estimate=cost,
    )(a, b, c, d, t)
    # keep the (zero) lane padding; callers slice per-edge column blocks
    return out[:M]


# --------------------------- JAX glue (im2col, pooling) ----------------------

def _im2col(x, kh, kw, stride, padding):
    n, h, wd, c = x.shape
    ho = (h + 2 * padding - kh) // stride + 1
    wo = (wd + 2 * padding - kw) // stride + 1
    xp = jnp.pad(x, ((0, 0), (padding, padding), (padding, padding), (0, 0))) if padding else x
    cols = []
    for i in range(kh):
        for j in range(kw):
            cols.append(xp[:, i:i + stride * ho:stride, j:j + stride * wo:stride, :])
    patches = jnp.concatenate(cols, axis=-1).reshape(n * ho * wo, kh * kw * c)
    return patches, ho, wo


def avg_pool3x3(x):
    """AvgPool2d(3, stride=1, padding=1, count_include_pad=False)."""
    n, h, w, c = x.shape
    xp = jnp.pad(x, ((0, 0), (1, 1), (1, 1), (0, 0)))
    op = jnp.pad(jnp.ones((1, h, w, 1), F32), ((0, 0), (1, 1), (1, 1), (0, 0)))
    s = jnp.zeros_like(x)
    cnt = jnp.zeros((1, h, w, 1), F32)
    for i in range(3):
        for j in range(3):
            s = s + xp[:, i:i + h, j:j + w, :]
            cnt = cnt + op[:, i:i + h, j:j + w, :]
    return s / cnt


def avg_pool2x2(x):
    n, h, w, c = x.shape
    return x.reshape(n, h // 2, 2, w // 2, 2, c).mean(axis=(2, 4))


# --------------------------- model pieces ------------------------------------

def conv2d_bn(x, w, stride, padding, scale, bias, relu_in=False):
    """NHWC conv (bias=False) + folded eval-mode BN via im2col + Pallas MXU matmul.
    The optional ReLU (ReLUConvBN) runs inside the kernel on the bf16 patches."""
    kh, kw, cin, cout = w.shape
    n = x.shape[0]
    patches, ho, wo = _im2col(x.astype(BF16), kh, kw, stride, padding)
    wm = w.reshape(kh * kw * cin, cout) * scale        # fold BN scale in f32
    out = pallas_conv_matmul(patches, wm, bias, relu=relu_in)
    return out.reshape(n, ho, wo, cout)


def batched_source_edges(src2d, shape, edge_params, w_rows):
    """All NAS edges consuming one source node with ONE MXU launch.

    Per edge (PRIMITIVES = [none, skip, conv1x1, conv3x3, avgpool3x3]):
        out = w1*src + w2*ReLUConvBN_1x1(src) + w3*ReLUConvBN_3x3(src) + w4*pool(src)
    The 1x1 kernel sits on the centre tap of a 3x3 kernel; eval-BN scales and
    mixture weights are folded into the bf16 weight matrix; skip/pool go through
    a small f32 identity-block matmul; BN biases form a (1, E*C) epilogue row.
    Returns a 2-D slab whose columns [e*C, (e+1)*C) are edge e.
    """
    n, h, w, c = shape
    M = n * h * w
    E = len(edge_params)
    src4d = src2d.reshape(n, h, w, c)

    # ReLU feeds the convs (commutes with bf16 cast & im2col); skip/pool use raw src.
    patches, _, _ = _im2col(
        jnp.maximum(src2d, 0.0).astype(BF16).reshape(n, h, w, c), 3, 3, 1, 1)
    sp = jnp.concatenate([src2d, avg_pool3x3(src4d).reshape(M, c)], axis=1)  # (M, 2C) f32

    eye = jnp.eye(c, dtype=F32)
    w_cols, d_cols, biases = [], [], []
    for ep, wr in zip(edge_params, w_rows):
        # embed the 1x1 kernel at the centre tap so its K-ordering matches im2col
        w1_as_3x3 = jnp.pad(ep['w1'], ((1, 1), (1, 1), (0, 0), (0, 0)))
        w_comb = wr[3] * ep['w3'] * ep['s3'] + wr[2] * w1_as_3x3 * ep['s1']
        w_cols.append(w_comb.reshape(9 * c, c))
        d_cols.append(jnp.concatenate([wr[1] * eye, wr[4] * eye], axis=0))  # w[0]*none == 0
        biases.append(wr[3] * ep['b3'] + wr[2] * ep['b1'])
    b_mat = jnp.concatenate(w_cols, axis=1)     # (9C, E*C), folded in f32
    d_mat = jnp.concatenate(d_cols, axis=1)     # (2C, E*C)
    bias = jnp.concatenate(biases, axis=0)      # (E*C,)

    if M >= 64 or E * c >= 128:
        return pallas_edge_matmul(patches, b_mat, sp, d_mat, bias)
    # tiny, heavily lane-padded call: plain jnp beats a kernel launch
    return (jnp.dot(patches, b_mat.astype(BF16), preferred_element_type=F32)
            + jnp.dot(sp, d_mat) + bias[None, :])


def search_cell(x2d, shape, weights, edges):
    """NAS-Bench-201 cell; activations stay 2-D (M, C), nodes are column slices."""
    c = shape[3]
    # edge2index: 0:(1<-0) 1:(2<-0) 2:(2<-1) 3:(3<-0) 4:(3<-1) 5:(3<-2)
    out0 = batched_source_edges(x2d, shape, [edges[0], edges[1], edges[3]],
                                [weights[0], weights[1], weights[3]])
    n1 = out0[:, :c]
    out1 = batched_source_edges(n1, shape, [edges[2], edges[4]],
                                [weights[2], weights[4]])
    n2 = out0[:, c:2 * c] + out1[:, :c]
    out2 = batched_source_edges(n2, shape, [edges[5]], [weights[5]])
    return out0[:, 2 * c:3 * c] + out1[:, c:2 * c] + out2[:, :c]


def reduction_block(x, p):
    """ResNet basic block, stride 2: ReLUConvBN(s2)->ReLUConvBN(s1) + avgpool/1x1 shortcut."""
    a = conv2d_bn(x, p['wa'], 2, 1, p['sa'], p['ba'], relu_in=True)
    b = conv2d_bn(a, p['wb'], 1, 1, p['sb'], p['bb'], relu_in=True)
    d = avg_pool2x2(x)
    n, h, w, cin = d.shape
    cout = p['wd'].shape[-1]
    # 1x1 shortcut: tiny & heavily lane-padded -> plain jnp is cheaper than a launch
    d = jnp.dot(d.reshape(n * h * w, cin), p['wd'].reshape(cin, cout)).reshape(n, h, w, cout)
    return d + b


def forward(params, x_nchw):
    x = jnp.transpose(x_nchw, (0, 2, 3, 1)).astype(F32)         # NCHW -> NHWC

    # stem: Conv3x3 -> BN (eval-mode BN folded into weights + bias row)
    x = conv2d_bn(x, params['stem_w'], 1, 1, params['stem_s'], params['stem_b'])

    # self.weights = softmax(alphas, -1); cells consume weights * c
    weights = jax.nn.softmax(params['alphas'], axis=-1) * params['c']

    for stage in range(3):
        n, h, w, c = x.shape
        shape = (n, h, w, c)
        cells = params['stages'][stage]        # pytree, leading axis 5 (stacked cells)

        def body(h2d, cp, _shape=shape):
            return search_cell(h2d, _shape, weights, cp), None

        x2d, _ = jax.lax.scan(body, x.reshape(n * h * w, c), cells)
        x = x2d.reshape(shape)
        if stage < 2:
            x = reduction_block(x, params['reductions'][stage])

    # top: BN -> ReLU -> AdaptiveAvgPool2d(1) -> Flatten -> Linear (tiny: plain jnp)
    x = jnp.maximum(x * params['top_s'] + params['top_b'], 0.0)
    x = x.mean(axis=(1, 2))
    return x @ params['wl'] + params['bl']


# --------------------------- deterministic parameter init --------------------

def init_params(key, stem_ch=16, num_classes=10):
    kit = iter(jax.random.split(key, 256))

    def nk():
        return next(kit)

    def conv_w(kh, kw, cin, cout):
        fan_in = kh * kw * cin
        return jax.random.normal(nk(), (kh, kw, cin, cout), F32) * (1.0 / fan_in ** 0.5)

    def bn_affine(c, eps=1e-5):
        # Freshly-initialized eval-mode BatchNorm2d (gamma=1, beta=0, mean=0, var=1)
        # folded into per-channel scale/bias.
        return jnp.full((c,), 1.0 / (1.0 + eps) ** 0.5, F32), jnp.zeros((c,), F32)

    params = {}
    params['stem_w'] = conv_w(3, 3, 3, stem_ch)
    params['stem_s'], params['stem_b'] = bn_affine(stem_ch)

    def make_edge(c):
        s1, b1 = bn_affine(c)
        s3, b3 = bn_affine(c)
        return {'w1': conv_w(1, 1, c, c), 's1': s1, 'b1': b1,
                'w3': conv_w(3, 3, c, c), 's3': s3, 'b3': b3}

    stages = []
    for s in range(3):
        c = stem_ch * (2 ** s)
        cells = [[make_edge(c) for _ in range(6)] for _ in range(5)]
        # stack the 5 cells of the stage along a leading axis (for lax.scan)
        stages.append(jax.tree_util.tree_map(lambda *xs: jnp.stack(xs, 0), *cells))
    params['stages'] = stages

    reductions = []
    for s in range(2):
        cin = stem_ch * (2 ** s)
        cout = cin * 2
        sa, ba = bn_affine(cout)
        sb, bb = bn_affine(cout)
        reductions.append({'wa': conv_w(3, 3, cin, cout), 'sa': sa, 'ba': ba,
                           'wb': conv_w(3, 3, cout, cout), 'sb': sb, 'bb': bb,
                           'wd': conv_w(1, 1, cin, cout)})
    params['reductions'] = reductions

    params['top_s'], params['top_b'] = bn_affine(stem_ch * 4)
    params['wl'] = jax.random.normal(nk(), (stem_ch * 4, num_classes), F32) * (
        1.0 / (stem_ch * 4) ** 0.5)
    params['bl'] = jnp.zeros((num_classes,), F32)

    # init_additional_para: alphas = 0.001*randn(6, len(PRIMITIVES)), c = ones
    params['alphas'] = 0.001 * jax.random.normal(nk(), (6, 5), F32)
    params['c'] = jnp.ones((6, 5), F32)
    return params


# --------------------------- main ---------------------------------------------

if __name__ == "__main__":
    key = jax.random.PRNGKey(0)
    pkey, xkey = jax.random.split(key)

    params = init_params(pkey, stem_ch=16, num_classes=10)
    x = jax.random.normal(xkey, (2, 3, 16, 16), F32)  # NCHW input, like PyTorch

    fwd = jax.jit(forward)
    logits = jax.block_until_ready(fwd(params, x))

    assert logits.shape == (2, 10), logits.shape
    assert bool(jnp.all(jnp.isfinite(logits)))
    print("KERNEL_OK")
</pallas_src>

<mosaic_0001>
module attributes {stable_mosaic.version = 11 : i64} {
  func.func @_conv_bias_kernel(%arg0: i32, %arg1: memref<512x32xbf16, #tpu.memory_space<vmem>>, %arg2: memref<32x128xbf16, #tpu.memory_space<vmem>>, %arg3: memref<1x128xf32, #tpu.memory_space<vmem>>, %arg4: memref<512x128xf32, #tpu.memory_space<vmem>>) attributes {dimension_semantics = [#tpu.dimension_semantics<parallel>], iteration_bounds = array<i64: 1>, scalar_prefetch = 0 : i64, scratch_operands = 0 : i64, tpu.core_type = #tpu.core_type<tc>, window_params = [{transform_indices = @transform_0, window_bounds = array<i64: 512, 32>}, {pipeline_mode = #tpu.pipeline_mode<synchronous>, transform_indices = @transform_1, window_bounds = array<i64: 32, 128>}, {pipeline_mode = #tpu.pipeline_mode<synchronous>, transform_indices = @transform_2, window_bounds = array<i64: 1, 128>}, {transform_indices = @transform_3, window_bounds = array<i64: 512, 128>}]} {
    %c0 = arith.constant 0 : index
    %c0_0 = arith.constant 0 : index
    %0 = vector.load %arg1[%c0, %c0_0] : memref<512x32xbf16, #tpu.memory_space<vmem>>, vector<512x32xbf16>
    %c0_1 = arith.constant 0 : index
    %c0_2 = arith.constant 0 : index
    %1 = vector.load %arg2[%c0_1, %c0_2] : memref<32x128xbf16, #tpu.memory_space<vmem>>, vector<32x128xbf16>
    %cst = arith.constant dense<0.000000e+00> : vector<512x128xf32>
    %2 = tpu.matmul %0, %1, %cst {dimension_numbers = #tpu.dot_dimension_numbers<[1], [0], [0], [1], [0, 0, 1, 1], [], []>} : vector<512x32xbf16>, vector<32x128xbf16>, vector<512x128xf32> -> vector<512x128xf32>
    %c0_3 = arith.constant 0 : index
    %c0_4 = arith.constant 0 : index
    %3 = vector.load %arg3[%c0_3, %c0_4] : memref<1x128xf32, #tpu.memory_space<vmem>>, vector<1x128xf32>
    %4 = vector.broadcast %3 : vector<1x128xf32> to vector<512x128xf32>
    %5 = arith.addf %2, %4 : vector<512x128xf32>
    %c0_5 = arith.constant 0 : index
    %c0_6 = arith.constant 0 : index
    %6 = vector.load %arg4[%c0_5, %c0_6] : memref<512x128xf32, #tpu.memory_space<vmem>>, vector<512x128xf32>
    tpu.vector_store %arg4[%c0_5, %c0_6], %5 {strides = array<i32>} : memref<512x128xf32, #tpu.memory_space<vmem>>, vector<512x128xf32>,
    return
  }
  func.func @transform_0(%arg0: i32) -> (i32, i32) {
    %c0_i32 = arith.constant 0 : i32
    %c0_i32_0 = arith.constant 0 : i32
    return %arg0, %c0_i32 : i32, i32
  }
  func.func @transform_1(%arg0: i32) -> (i32, i32) {
    %c0_i32 = arith.constant 0 : i32
    %c0_i32_0 = arith.constant 0 : i32
    %c0_i32_1 = arith.constant 0 : i32
    return %c0_i32, %c0_i32_0 : i32, i32
  }
  func.func @transform_2(%arg0: i32) -> (i32, i32) {
    %c0_i32 = arith.constant 0 : i32
    %c0_i32_0 = arith.constant 0 : i32
    %c0_i32_1 = arith.constant 0 : i32
    return %c0_i32, %c0_i32_0 : i32, i32
  }
  func.func @transform_3(%arg0: i32) -> (i32, i32) {
    %c0_i32 = arith.constant 0 : i32
    %c0_i32_0 = arith.constant 0 : i32
    return %arg0, %c0_i32 : i32, i32
  }
}

module attributes {stable_mosaic.version = 11 : i64} {
  func.func @_edge_kernel(%arg0: i32, %arg1: memref<512x144xbf16, #tpu.memory_space<vmem>>, %arg2: memref<144x128xbf16, #tpu.memory_space<vmem>>, %arg3: memref<512x32xf32, #tpu.memory_space<vmem>>, %arg4: memref<32x128xf32, #tpu.memory_space<vmem>>, %arg5: memref<1x128xf32, #tpu.memory_space<vmem>>, %arg6: memref<512x128xf32, #tpu.memory_space<vmem>>) attributes {dimension_semantics = [#tpu.dimension_semantics<parallel>], iteration_bounds = array<i64: 1>, scalar_prefetch = 0 : i64, scratch_operands = 0 : i64, tpu.core_type = #tpu.core_type<tc>, window_params = [{transform_indices = @transform_0, window_bounds = array<i64: 512, 144>}, {pipeline_mode = #tpu.pipeline_mode<synchronous>, transform_indices = @transform_1, window_bounds = array<i64: 144, 128>}, {transform_indices = @transform_2, window_bounds = array<i64: 512, 32>}, {pipeline_mode = #tpu.pipeline_mode<synchronous>, transform_indices = @transform_3, window_bounds = array<i64: 32, 128>}, {pipeline_mode = #tpu.pipeline_mode<synchronous>, transform_indices = @transform_4, window_bounds = array<i64: 1, 128>}, {transform_indices = @transform_5, window_bounds = array<i64: 512, 128>}]} {
    %c0 = arith.constant 0 : index
    %c0_0 = arith.constant 0 : index
    %0 = vector.load %arg1[%c0, %c0_0] : memref<512x144xbf16, #tpu.memory_space<vmem>>, vector<512x144xbf16>
    %c0_1 = arith.constant 0 : index
    %c0_2 = arith.constant 0 : index
    %1 = vector.load %arg2[%c0_1, %c0_2] : memref<144x128xbf16, #tpu.memory_space<vmem>>, vector<144x128xbf16>
    %cst = arith.constant dense<0.000000e+00> : vector<512x128xf32>
    %2 = tpu.matmul %0, %1, %cst {dimension_numbers = #tpu.dot_dimension_numbers<[1], [0], [0], [1], [0, 0, 1, 1], [], []>} : vector<512x144xbf16>, vector<144x128xbf16>, vector<512x128xf32> -> vector<512x128xf32>
    %c0_3 = arith.constant 0 : index
    %c0_4 = arith.constant 0 : index
    %3 = vector.load %arg3[%c0_3, %c0_4] : memref<512x32xf32, #tpu.memory_space<vmem>>, vector<512x32xf32>
    %c0_5 = arith.constant 0 : index
    %c0_6 = arith.constant 0 : index
    %4 = vector.load %arg4[%c0_5, %c0_6] : memref<32x128xf32, #tpu.memory_space<vmem>>, vector<32x128xf32>
    %cst_7 = arith.constant dense<0.000000e+00> : vector<512x128xf32>
    %5 = tpu.matmul %3, %4, %cst_7 {dimension_numbers = #tpu.dot_dimension_numbers<[1], [0], [0], [1], [0, 0, 1, 1], [], []>} : vector<512x32xf32>, vector<32x128xf32>, vector<512x128xf32> -> vector<512x128xf32>
    %6 = arith.addf %2, %5 : vector<512x128xf32>
    %c0_8 = arith.constant 0 : index
    %c0_9 = arith.constant 0 : index
    %7 = vector.load %arg5[%c0_8, %c0_9] : memref<1x128xf32, #tpu.memory_space<vmem>>, vector<1x128xf32>
    %8 = vector.broadcast %7 : vector<1x128xf32> to vector<512x128xf32>
    %9 = arith.addf %6, %8 : vector<512x128xf32>
    %c0_10 = arith.constant 0 : index
    %c0_11 = arith.constant 0 : index
    %10 = vector.load %arg6[%c0_10, %c0_11] : memref<512x128xf32, #tpu.memory_space<vmem>>, vector<512x128xf32>
    tpu.vector_store %arg6[%c0_10, %c0_11], %9 {strides = array<i32>} : memref<512x128xf32, #tpu.memory_space<vmem>>, vector<512x128xf32>,
    return
  }
  func.func @transform_0(%arg0: i32) -> (i32, i32) {
    %c0_i32 = arith.constant 0 : i32
    %c0_i32_0 = arith.constant 0 : i32
    return %arg0, %c0_i32 : i32, i32
  }
  func.func @transform_1(%arg0: i32) -> (i32, i32) {
    %c0_i32 = arith.constant 0 : i32
    %c0_i32_0 = arith.constant 0 : i32
    %c0_i32_1 = arith.constant 0 : i32
    return %c0_i32, %c0_i32_0 : i32, i32
  }
  func.func @transform_2(%arg0: i32) -> (i32, i32) {
    %c0_i32 = arith.constant 0 : i32
    %c0_i32_0 = arith.constant 0 : i32
    return %arg0, %c0_i32 : i32, i32
  }
  func.func @transform_3(%arg0: i32) -> (i32, i32) {
    %c0_i32 = arith.constant 0 : i32
    %c0_i32_0 = arith.constant 0 : i32
    %c0_i32_1 = arith.constant 0 : i32
    return %c0_i32, %c0_i32_0 : i32, i32
  }
  func.func @transform_4(%arg0: i32) -> (i32, i32) {
    %c0_i32 = arith.constant 0 : i32
    %c0_i32_0 = arith.constant 0 : i32
    %c0_i32_1 = arith.constant 0 : i32
    return %c0_i32, %c0_i32_0 : i32, i32
  }
  func.func @transform_5(%arg0: i32) -> (i32, i32) {
    %c0_i32 = arith.constant 0 : i32
    %c0_i32_0 = arith.constant 0 : i32
    return %arg0, %c0_i32 : i32, i32
  }
}

module attributes {stable_mosaic.version = 11 : i64} {
  func.func @_conv_bias_kernel(%arg0: i32, %arg1: memref<128x144xbf16, #tpu.memory_space<vmem>>, %arg2: memref<144x128xbf16, #tpu.memory_space<vmem>>, %arg3: memref<1x128xf32, #tpu.memory_space<vmem>>, %arg4: memref<128x128xf32, #tpu.memory_space<vmem>>) attributes {dimension_semantics = [#tpu.dimension_semantics<parallel>], iteration_bounds = array<i64: 1>, scalar_prefetch = 0 : i64, scratch_operands = 0 : i64, tpu.core_type = #tpu.core_type<tc>, window_params = [{transform_indices = @transform_0, window_bounds = array<i64: 128, 144>}, {pipeline_mode = #tpu.pipeline_mode<synchronous>, transform_indices = @transform_1, window_bounds = array<i64: 144, 128>}, {pipeline_mode = #tpu.pipeline_mode<synchronous>, transform_indices = @transform_2, window_bounds = array<i64: 1, 128>}, {transform_indices = @transform_3, window_bounds = array<i64: 128, 128>}]} {
    %c0 = arith.constant 0 : index
    %c0_0 = arith.constant 0 : index
    %0 = vector.load %arg1[%c0, %c0_0] : memref<128x144xbf16, #tpu.memory_space<vmem>>, vector<128x144xbf16>
    %cst = arith.constant 0.000000e+00 : bf16
    %1 = vector.broadcast %cst : bf16 to vector<128x144xbf16>
    %2 = arith.maximumf %0, %1 : vector<128x144xbf16>
    %c0_1 = arith.constant 0 : index
    %c0_2 = arith.constant 0 : index
    %3 = vector.load %arg2[%c0_1, %c0_2] : memref<144x128xbf16, #tpu.memory_space<vmem>>, vector<144x128xbf16>
    %cst_3 = arith.constant dense<0.000000e+00> : vector<128x128xf32>
    %4 = tpu.matmul %2, %3, %cst_3 {dimension_numbers = #tpu.dot_dimension_numbers<[1], [0], [0], [1], [0, 0, 1, 1], [], []>} : vector<128x144xbf16>, vector<144x128xbf16>, vector<128x128xf32> -> vector<128x128xf32>
    %c0_4 = arith.constant 0 : index
    %c0_5 = arith.constant 0 : index
    %5 = vector.load %arg3[%c0_4, %c0_5] : memref<1x128xf32, #tpu.memory_space<vmem>>, vector<1x128xf32>
    %6 = vector.broadcast %5 : vector<1x128xf32> to vector<128x128xf32>
    %7 = arith.addf %4, %6 : vector<128x128xf32>
    %c0_6 = arith.constant 0 : index
    %c0_7 = arith.constant 0 : index
    %8 = vector.load %arg4[%c0_6, %c0_7] : memref<128x128xf32, #tpu.memory_space<vmem>>, vector<128x128xf32>
    tpu.vector_store %arg4[%c0_6, %c0_7], %7 {strides = array<i32>} : memref<128x128xf32, #tpu.memory_space<vmem>>, vector<128x128xf32>,
    return
  }
  func.func @transform_0(%arg0: i32) -> (i32, i32) {
    %c0_i32 = arith.constant 0 : i32
    %c0_i32_0 = arith.constant 0 : i32
    return %arg0, %c0_i32 : i32, i32
  }
  func.func @transform_1(%arg0: i32) -> (i32, i32) {
    %c0_i32 = arith.constant 0 : i32
    %c0_i32_0 = arith.constant 0 : i32
    %c0_i32_1 = arith.constant 0 : i32
    return %c0_i32, %c0_i32_0 : i32, i32
  }
  func.func @transform_2(%arg0: i32) -> (i32, i32) {
    %c0_i32 = arith.constant 0 : i32
    %c0_i32_0 = arith.constant 0 : i32
    %c0_i32_1 = arith.constant 0 : i32
    return %c0_i32, %c0_i32_0 : i32, i32
  }
  func.func @transform_3(%arg0: i32) -> (i32, i32) {
    %c0_i32 = arith.constant 0 : i32
    %c0_i32_0 = arith.constant 0 : i32
    return %arg0, %c0_i32 : i32, i32
  }
}

module attributes {stable_mosaic.version = 11 : i64} {
  func.func @_conv_bias_kernel(%arg0: i32, %arg1: memref<128x288xbf16, #tpu.memory_space<vmem>>, %arg2: memref<288x128xbf16, #tpu.memory_space<vmem>>, %arg3: memref<1x128xf32, #tpu.memory_space<vmem>>, %arg4: memref<128x128xf32, #tpu.memory_space<vmem>>) attributes {dimension_semantics = [#tpu.dimension_semantics<parallel>], iteration_bounds = array<i64: 1>, scalar_prefetch = 0 : i64, scratch_operands = 0 : i64, tpu.core_type = #tpu.core_type<tc>, window_params = [{transform_indices = @transform_0, window_bounds = array<i64: 128, 288>}, {pipeline_mode = #tpu.pipeline_mode<synchronous>, transform_indices = @transform_1, window_bounds = array<i64: 288, 128>}, {pipeline_mode = #tpu.pipeline_mode<synchronous>, transform_indices = @transform_2, window_bounds = array<i64: 1, 128>}, {transform_indices = @transform_3, window_bounds = array<i64: 128, 128>}]} {
    %c0 = arith.constant 0 : index
    %c0_0 = arith.constant 0 : index
    %0 = vector.load %arg1[%c0, %c0_0] : memref<128x288xbf16, #tpu.memory_space<vmem>>, vector<128x288xbf16>
    %cst = arith.constant 0.000000e+00 : bf16
    %1 = vector.broadcast %cst : bf16 to vector<128x288xbf16>
    %2 = arith.maximumf %0, %1 : vector<128x288xbf16>
    %c0_1 = arith.constant 0 : index
    %c0_2 = arith.constant 0 : index
    %3 = vector.load %arg2[%c0_1, %c0_2] : memref<288x128xbf16, #tpu.memory_space<vmem>>, vector<288x128xbf16>
    %cst_3 = arith.constant dense<0.000000e+00> : vector<128x128xf32>
    %4 = tpu.matmul %2, %3, %cst_3 {dimension_numbers = #tpu.dot_dimension_numbers<[1], [0], [0], [1], [0, 0, 1, 1], [], []>} : vector<128x288xbf16>, vector<288x128xbf16>, vector<128x128xf32> -> vector<128x128xf32>
    %c0_4 = arith.constant 0 : index
    %c0_5 = arith.constant 0 : index
    %5 = vector.load %arg3[%c0_4, %c0_5] : memref<1x128xf32, #tpu.memory_space<vmem>>, vector<1x128xf32>
    %6 = vector.broadcast %5 : vector<1x128xf32> to vector<128x128xf32>
    %7 = arith.addf %4, %6 : vector<128x128xf32>
    %c0_6 = arith.constant 0 : index
    %c0_7 = arith.constant 0 : index
    %8 = vector.load %arg4[%c0_6, %c0_7] : memref<128x128xf32, #tpu.memory_space<vmem>>, vector<128x128xf32>
    tpu.vector_store %arg4[%c0_6, %c0_7], %7 {strides = array<i32>} : memref<128x128xf32, #tpu.memory_space<vmem>>, vector<128x128xf32>,
    return
  }
  func.func @transform_0(%arg0: i32) -> (i32, i32) {
    %c0_i32 = arith.constant 0 : i32
    %c0_i32_0 = arith.constant 0 : i32
    return %arg0, %c0_i32 : i32, i32
  }
  func.func @transform_1(%arg0: i32) -> (i32, i32) {
    %c0_i32 = arith.constant 0 : i32
    %c0_i32_0 = arith.constant 0 : i32
    %c0_i32_1 = arith.constant 0 : i32
    return %c0_i32, %c0_i32_0 : i32, i32
  }
  func.func @transform_2(%arg0: i32) -> (i32, i32) {
    %c0_i32 = arith.constant 0 : i32
    %c0_i32_0 = arith.constant 0 : i32
    %c0_i32_1 = arith.constant 0 : i32
    return %c0_i32, %c0_i32_0 : i32, i32
  }
  func.func @transform_3(%arg0: i32) -> (i32, i32) {
    %c0_i32 = arith.constant 0 : i32
    %c0_i32_0 = arith.constant 0 : i32
    return %arg0, %c0_i32 : i32, i32
  }
}

module attributes {stable_mosaic.version = 11 : i64} {
  func.func @_edge_kernel(%arg0: i32, %arg1: memref<128x288xbf16, #tpu.memory_space<vmem>>, %arg2: memref<288x128xbf16, #tpu.memory_space<vmem>>, %arg3: memref<128x64xf32, #tpu.memory_space<vmem>>, %arg4: memref<64x128xf32, #tpu.memory_space<vmem>>, %arg5: memref<1x128xf32, #tpu.memory_space<vmem>>, %arg6: memref<128x128xf32, #tpu.memory_space<vmem>>) attributes {dimension_semantics = [#tpu.dimension_semantics<parallel>], iteration_bounds = array<i64: 1>, scalar_prefetch = 0 : i64, scratch_operands = 0 : i64, tpu.core_type = #tpu.core_type<tc>, window_params = [{transform_indices = @transform_0, window_bounds = array<i64: 128, 288>}, {pipeline_mode = #tpu.pipeline_mode<synchronous>, transform_indices = @transform_1, window_bounds = array<i64: 288, 128>}, {transform_indices = @transform_2, window_bounds = array<i64: 128, 64>}, {pipeline_mode = #tpu.pipeline_mode<synchronous>, transform_indices = @transform_3, window_bounds = array<i64: 64, 128>}, {pipeline_mode = #tpu.pipeline_mode<synchronous>, transform_indices = @transform_4, window_bounds = array<i64: 1, 128>}, {transform_indices = @transform_5, window_bounds = array<i64: 128, 128>}]} {
    %c0 = arith.constant 0 : index
    %c0_0 = arith.constant 0 : index
    %0 = vector.load %arg1[%c0, %c0_0] : memref<128x288xbf16, #tpu.memory_space<vmem>>, vector<128x288xbf16>
    %c0_1 = arith.constant 0 : index
    %c0_2 = arith.constant 0 : index
    %1 = vector.load %arg2[%c0_1, %c0_2] : memref<288x128xbf16, #tpu.memory_space<vmem>>, vector<288x128xbf16>
    %cst = arith.constant dense<0.000000e+00> : vector<128x128xf32>
    %2 = tpu.matmul %0, %1, %cst {dimension_numbers = #tpu.dot_dimension_numbers<[1], [0], [0], [1], [0, 0, 1, 1], [], []>} : vector<128x288xbf16>, vector<288x128xbf16>, vector<128x128xf32> -> vector<128x128xf32>
    %c0_3 = arith.constant 0 : index
    %c0_4 = arith.constant 0 : index
    %3 = vector.load %arg3[%c0_3, %c0_4] : memref<128x64xf32, #tpu.memory_space<vmem>>, vector<128x64xf32>
    %c0_5 = arith.constant 0 : index
    %c0_6 = arith.constant 0 : index
    %4 = vector.load %arg4[%c0_5, %c0_6] : memref<64x128xf32, #tpu.memory_space<vmem>>, vector<64x128xf32>
    %cst_7 = arith.constant dense<0.000000e+00> : vector<128x128xf32>
    %5 = tpu.matmul %3, %4, %cst_7 {dimension_numbers = #tpu.dot_dimension_numbers<[1], [0], [0], [1], [0, 0, 1, 1], [], []>} : vector<128x64xf32>, vector<64x128xf32>, vector<128x128xf32> -> vector<128x128xf32>
    %6 = arith.addf %2, %5 : vector<128x128xf32>
    %c0_8 = arith.constant 0 : index
    %c0_9 = arith.constant 0 : index
    %7 = vector.load %arg5[%c0_8, %c0_9] : memref<1x128xf32, #tpu.memory_space<vmem>>, vector<1x128xf32>
    %8 = vector.broadcast %7 : vector<1x128xf32> to vector<128x128xf32>
    %9 = arith.addf %6, %8 : vector<128x128xf32>
    %c0_10 = arith.constant 0 : index
    %c0_11 = arith.constant 0 : index
    %10 = vector.load %arg6[%c0_10, %c0_11] : memref<128x128xf32, #tpu.memory_space<vmem>>, vector<128x128xf32>
    tpu.vector_store %arg6[%c0_10, %c0_11], %9 {strides = array<i32>} : memref<128x128xf32, #tpu.memory_space<vmem>>, vector<128x128xf32>,
    return
  }
  func.func @transform_0(%arg0: i32) -> (i32, i32) {
    %c0_i32 = arith.constant 0 : i32
    %c0_i32_0 = arith.constant 0 : i32
    return %arg0, %c0_i32 : i32, i32
  }
  func.func @transform_1(%arg0: i32) -> (i32, i32) {
    %c0_i32 = arith.constant 0 : i32
    %c0_i32_0 = arith.constant 0 : i32
    %c0_i32_1 = arith.constant 0 : i32
    return %c0_i32, %c0_i32_0 : i32, i32
  }
  func.func @transform_2(%arg0: i32) -> (i32, i32) {
    %c0_i32 = arith.constant 0 : i32
    %c0_i32_0 = arith.constant 0 : i32
    return %arg0, %c0_i32 : i32, i32
  }
  func.func @transform_3(%arg0: i32) -> (i32, i32) {
    %c0_i32 = arith.constant 0 : i32
    %c0_i32_0 = arith.constant 0 : i32
    %c0_i32_1 = arith.constant 0 : i32
    return %c0_i32, %c0_i32_0 : i32, i32
  }
  func.func @transform_4(%arg0: i32) -> (i32, i32) {
    %c0_i32 = arith.constant 0 : i32
    %c0_i32_0 = arith.constant 0 : i32
    %c0_i32_1 = arith.constant 0 : i32
    return %c0_i32, %c0_i32_0 : i32, i32
  }
  func.func @transform_5(%arg0: i32) -> (i32, i32) {
    %c0_i32 = arith.constant 0 : i32
    %c0_i32_0 = arith.constant 0 : i32
    return %arg0, %c0_i32 : i32, i32
  }
}

module attributes {stable_mosaic.version = 11 : i64} {
  func.func @_conv_bias_kernel(%arg0: i32, %arg1: memref<32x288xbf16, #tpu.memory_space<vmem>>, %arg2: memref<288x128xbf16, #tpu.memory_space<vmem>>, %arg3: memref<1x128xf32, #tpu.memory_space<vmem>>, %arg4: memref<32x128xf32, #tpu.memory_space<vmem>>) attributes {dimension_semantics = [#tpu.dimension_semantics<parallel>], iteration_bounds = array<i64: 1>, scalar_prefetch = 0 : i64, scratch_operands = 0 : i64, tpu.core_type = #tpu.core_type<tc>, window_params = [{transform_indices = @transform_0, window_bounds = array<i64: 32, 288>}, {pipeline_mode = #tpu.pipeline_mode<synchronous>, transform_indices = @transform_1, window_bounds = array<i64: 288, 128>}, {pipeline_mode = #tpu.pipeline_mode<synchronous>, transform_indices = @transform_2, window_bounds = array<i64: 1, 128>}, {transform_indices = @transform_3, window_bounds = array<i64: 32, 128>}]} {
    %c0 = arith.constant 0 : index
    %c0_0 = arith.constant 0 : index
    %0 = vector.load %arg1[%c0, %c0_0] : memref<32x288xbf16, #tpu.memory_space<vmem>>, vector<32x288xbf16>
    %cst = arith.constant 0.000000e+00 : bf16
    %1 = vector.broadcast %cst : bf16 to vector<32x288xbf16>
    %2 = arith.maximumf %0, %1 : vector<32x288xbf16>
    %c0_1 = arith.constant 0 : index
    %c0_2 = arith.constant 0 : index
    %3 = vector.load %arg2[%c0_1, %c0_2] : memref<288x128xbf16, #tpu.memory_space<vmem>>, vector<288x128xbf16>
    %cst_3 = arith.constant dense<0.000000e+00> : vector<32x128xf32>
    %4 = tpu.matmul %2, %3, %cst_3 {dimension_numbers = #tpu.dot_dimension_numbers<[1], [0], [0], [1], [0, 0, 1, 1], [], []>} : vector<32x288xbf16>, vector<288x128xbf16>, vector<32x128xf32> -> vector<32x128xf32>
    %c0_4 = arith.constant 0 : index
    %c0_5 = arith.constant 0 : index
    %5 = vector.load %arg3[%c0_4, %c0_5] : memref<1x128xf32, #tpu.memory_space<vmem>>, vector<1x128xf32>
    %6 = vector.broadcast %5 : vector<1x128xf32> to vector<32x128xf32>
    %7 = arith.addf %4, %6 : vector<32x128xf32>
    %c0_6 = arith.constant 0 : index
    %c0_7 = arith.constant 0 : index
    %8 = vector.load %arg4[%c0_6, %c0_7] : memref<32x128xf32, #tpu.memory_space<vmem>>, vector<32x128xf32>
    tpu.vector_store %arg4[%c0_6, %c0_7], %7 {strides = array<i32>} : memref<32x128xf32, #tpu.memory_space<vmem>>, vector<32x128xf32>,
    return
  }
  func.func @transform_0(%arg0: i32) -> (i32, i32) {
    %c0_i32 = arith.constant 0 : i32
    %c0_i32_0 = arith.constant 0 : i32
    return %arg0, %c0_i32 : i32, i32
  }
  func.func @transform_1(%arg0: i32) -> (i32, i32) {
    %c0_i32 = arith.constant 0 : i32
    %c0_i32_0 = arith.constant 0 : i32
    %c0_i32_1 = arith.constant 0 : i32
    return %c0_i32, %c0_i32_0 : i32, i32
  }
  func.func @transform_2(%arg0: i32) -> (i32, i32) {
    %c0_i32 = arith.constant 0 : i32
    %c0_i32_0 = arith.constant 0 : i32
    %c0_i32_1 = arith.constant 0 : i32
    return %c0_i32, %c0_i32_0 : i32, i32
  }
  func.func @transform_3(%arg0: i32) -> (i32, i32) {
    %c0_i32 = arith.constant 0 : i32
    %c0_i32_0 = arith.constant 0 : i32
    return %arg0, %c0_i32 : i32, i32
  }
}

module attributes {stable_mosaic.version = 11 : i64} {
  func.func @_conv_bias_kernel(%arg0: i32, %arg1: memref<32x576xbf16, #tpu.memory_space<vmem>>, %arg2: memref<576x128xbf16, #tpu.memory_space<vmem>>, %arg3: memref<1x128xf32, #tpu.memory_space<vmem>>, %arg4: memref<32x128xf32, #tpu.memory_space<vmem>>) attributes {dimension_semantics = [#tpu.dimension_semantics<parallel>], iteration_bounds = array<i64: 1>, scalar_prefetch = 0 : i64, scratch_operands = 0 : i64, tpu.core_type = #tpu.core_type<tc>, window_params = [{transform_indices = @transform_0, window_bounds = array<i64: 32, 576>}, {pipeline_mode = #tpu.pipeline_mode<synchronous>, transform_indices = @transform_1, window_bounds = array<i64: 576, 128>}, {pipeline_mode = #tpu.pipeline_mode<synchronous>, transform_indices = @transform_2, window_bounds = array<i64: 1, 128>}, {transform_indices = @transform_3, window_bounds = array<i64: 32, 128>}]} {
    %c0 = arith.constant 0 : index
    %c0_0 = arith.constant 0 : index
    %0 = vector.load %arg1[%c0, %c0_0] : memref<32x576xbf16, #tpu.memory_space<vmem>>, vector<32x576xbf16>
    %cst = arith.constant 0.000000e+00 : bf16
    %1 = vector.broadcast %cst : bf16 to vector<32x576xbf16>
    %2 = arith.maximumf %0, %1 : vector<32x576xbf16>
    %c0_1 = arith.constant 0 : index
    %c0_2 = arith.constant 0 : index
    %3 = vector.load %arg2[%c0_1, %c0_2] : memref<576x128xbf16, #tpu.memory_space<vmem>>, vector<576x128xbf16>
    %cst_3 = arith.constant dense<0.000000e+00> : vector<32x128xf32>
    %4 = tpu.matmul %2, %3, %cst_3 {dimension_numbers = #tpu.dot_dimension_numbers<[1], [0], [0], [1], [0, 0, 1, 1], [], []>} : vector<32x576xbf16>, vector<576x128xbf16>, vector<32x128xf32> -> vector<32x128xf32>
    %c0_4 = arith.constant 0 : index
    %c0_5 = arith.constant 0 : index
    %5 = vector.load %arg3[%c0_4, %c0_5] : memref<1x128xf32, #tpu.memory_space<vmem>>, vector<1x128xf32>
    %6 = vector.broadcast %5 : vector<1x128xf32> to vector<32x128xf32>
    %7 = arith.addf %4, %6 : vector<32x128xf32>
    %c0_6 = arith.constant 0 : index
    %c0_7 = arith.constant 0 : index
    %8 = vector.load %arg4[%c0_6, %c0_7] : memref<32x128xf32, #tpu.memory_space<vmem>>, vector<32x128xf32>
    tpu.vector_store %arg4[%c0_6, %c0_7], %7 {strides = array<i32>} : memref<32x128xf32, #tpu.memory_space<vmem>>, vector<32x128xf32>,
    return
  }
  func.func @transform_0(%arg0: i32) -> (i32, i32) {
    %c0_i32 = arith.constant 0 : i32
    %c0_i32_0 = arith.constant 0 : i32
    return %arg0, %c0_i32 : i32, i32
  }
  func.func @transform_1(%arg0: i32) -> (i32, i32) {
    %c0_i32 = arith.constant 0 : i32
    %c0_i32_0 = arith.constant 0 : i32
    %c0_i32_1 = arith.constant 0 : i32
    return %c0_i32, %c0_i32_0 : i32, i32
  }
  func.func @transform_2(%arg0: i32) -> (i32, i32) {
    %c0_i32 = arith.constant 0 : i32
    %c0_i32_0 = arith.constant 0 : i32
    %c0_i32_1 = arith.constant 0 : i32
    return %c0_i32, %c0_i32_0 : i32, i32
  }
  func.func @transform_3(%arg0: i32) -> (i32, i32) {
    %c0_i32 = arith.constant 0 : i32
    %c0_i32_0 = arith.constant 0 : i32
    return %arg0, %c0_i32 : i32, i32
  }
}

module attributes {stable_mosaic.version = 11 : i64} {
  func.func @_edge_kernel(%arg0: i32, %arg1: memref<32x576xbf16, #tpu.memory_space<vmem>>, %arg2: memref<576x256xbf16, #tpu.memory_space<vmem>>, %arg3: memref<32x128xf32, #tpu.memory_space<vmem>>, %arg4: memref<128x256xf32, #tpu.memory_space<vmem>>, %arg5: memref<1x256xf32, #tpu.memory_space<vmem>>, %arg6: memref<32x256xf32, #tpu.memory_space<vmem>>) attributes {dimension_semantics = [#tpu.dimension_semantics<parallel>], iteration_bounds = array<i64: 1>, scalar_prefetch = 0 : i64, scratch_operands = 0 : i64, tpu.core_type = #tpu.core_type<tc>, window_params = [{transform_indices = @transform_0, window_bounds = array<i64: 32, 576>}, {pipeline_mode = #tpu.pipeline_mode<synchronous>, transform_indices = @transform_1, window_bounds = array<i64: 576, 256>}, {transform_indices = @transform_2, window_bounds = array<i64: 32, 128>}, {pipeline_mode = #tpu.pipeline_mode<synchronous>, transform_indices = @transform_3, window_bounds = array<i64: 128, 256>}, {pipeline_mode = #tpu.pipeline_mode<synchronous>, transform_indices = @transform_4, window_bounds = array<i64: 1, 256>}, {transform_indices = @transform_5, window_bounds = array<i64: 32, 256>}]} {
    %c0 = arith.constant 0 : index
    %c0_0 = arith.constant 0 : index
    %0 = vector.load %arg1[%c0, %c0_0] : memref<32x576xbf16, #tpu.memory_space<vmem>>, vector<32x576xbf16>
    %c0_1 = arith.constant 0 : index
    %c0_2 = arith.constant 0 : index
    %1 = vector.load %arg2[%c0_1, %c0_2] : memref<576x256xbf16, #tpu.memory_space<vmem>>, vector<576x256xbf16>
    %cst = arith.constant dense<0.000000e+00> : vector<32x256xf32>
    %2 = tpu.matmul %0, %1, %cst {dimension_numbers = #tpu.dot_dimension_numbers<[1], [0], [0], [1], [0, 0, 1, 1], [], []>} : vector<32x576xbf16>, vector<576x256xbf16>, vector<32x256xf32> -> vector<32x256xf32>
    %c0_3 = arith.constant 0 : index
    %c0_4 = arith.constant 0 : index
    %3 = vector.load %arg3[%c0_3, %c0_4] : memref<32x128xf32, #tpu.memory_space<vmem>>, vector<32x128xf32>
    %c0_5 = arith.constant 0 : index
    %c0_6 = arith.constant 0 : index
    %4 = vector.load %arg4[%c0_5, %c0_6] : memref<128x256xf32, #tpu.memory_space<vmem>>, vector<128x256xf32>
    %cst_7 = arith.constant dense<0.000000e+00> : vector<32x256xf32>
    %5 = tpu.matmul %3, %4, %cst_7 {dimension_numbers = #tpu.dot_dimension_numbers<[1], [0], [0], [1], [0, 0, 1, 1], [], []>} : vector<32x128xf32>, vector<128x256xf32>, vector<32x256xf32> -> vector<32x256xf32>
    %6 = arith.addf %2, %5 : vector<32x256xf32>
    %c0_8 = arith.constant 0 : index
    %c0_9 = arith.constant 0 : index
    %7 = vector.load %arg5[%c0_8, %c0_9] : memref<1x256xf32, #tpu.memory_space<vmem>>, vector<1x256xf32>
    %8 = vector.broadcast %7 : vector<1x256xf32> to vector<32x256xf32>
    %9 = arith.addf %6, %8 : vector<32x256xf32>
    %c0_10 = arith.constant 0 : index
    %c0_11 = arith.constant 0 : index
    %10 = vector.load %arg6[%c0_10, %c0_11] : memref<32x256xf32, #tpu.memory_space<vmem>>, vector<32x256xf32>
    tpu.vector_store %arg6[%c0_10, %c0_11], %9 {strides = array<i32>} : memref<32x256xf32, #tpu.memory_space<vmem>>, vector<32x256xf32>,
    return
  }
  func.func @transform_0(%arg0: i32) -> (i32, i32) {
    %c0_i32 = arith.constant 0 : i32
    %c0_i32_0 = arith.constant 0 : i32
    return %arg0, %c0_i32 : i32, i32
  }
  func.func @transform_1(%arg0: i32) -> (i32, i32) {
    %c0_i32 = arith.constant 0 : i32
    %c0_i32_0 = arith.constant 0 : i32
    %c0_i32_1 = arith.constant 0 : i32
    return %c0_i32, %c0_i32_0 : i32, i32
  }
  func.func @transform_2(%arg0: i32) -> (i32, i32) {
    %c0_i32 = arith.constant 0 : i32
    %c0_i32_0 = arith.constant 0 : i32
    return %arg0, %c0_i32 : i32, i32
  }
  func.func @transform_3(%arg0: i32) -> (i32, i32) {
    %c0_i32 = arith.constant 0 : i32
    %c0_i32_0 = arith.constant 0 : i32
    %c0_i32_1 = arith.constant 0 : i32
    return %c0_i32, %c0_i32_0 : i32, i32
  }
  func.func @transform_4(%arg0: i32) -> (i32, i32) {
    %c0_i32 = arith.constant 0 : i32
    %c0_i32_0 = arith.constant 0 : i32
    %c0_i32_1 = arith.constant 0 : i32
    return %c0_i32, %c0_i32_0 : i32, i32
  }
  func.func @transform_5(%arg0: i32) -> (i32, i32) {
    %c0_i32 = arith.constant 0 : i32
    %c0_i32_0 = arith.constant 0 : i32
    return %arg0, %c0_i32 : i32, i32
  }
}

module attributes {stable_mosaic.version = 11 : i64} {
  func.func @_edge_kernel(%arg0: i32, %arg1: memref<32x576xbf16, #tpu.memory_space<vmem>>, %arg2: memref<576x128xbf16, #tpu.memory_space<vmem>>, %arg3: memref<32x128xf32, #tpu.memory_space<vmem>>, %arg4: memref<128x128xf32, #tpu.memory_space<vmem>>, %arg5: memref<1x128xf32, #tpu.memory_space<vmem>>, %arg6: memref<32x128xf32, #tpu.memory_space<vmem>>) attributes {dimension_semantics = [#tpu.dimension_semantics<parallel>], iteration_bounds = array<i64: 1>, scalar_prefetch = 0 : i64, scratch_operands = 0 : i64, tpu.core_type = #tpu.core_type<tc>, window_params = [{transform_indices = @transform_0, window_bounds = array<i64: 32, 576>}, {pipeline_mode = #tpu.pipeline_mode<synchronous>, transform_indices = @transform_1, window_bounds = array<i64: 576, 128>}, {transform_indices = @transform_2, window_bounds = array<i64: 32, 128>}, {pipeline_mode = #tpu.pipeline_mode<synchronous>, transform_indices = @transform_3, window_bounds = array<i64: 128, 128>}, {pipeline_mode = #tpu.pipeline_mode<synchronous>, transform_indices = @transform_4, window_bounds = array<i64: 1, 128>}, {transform_indices = @transform_5, window_bounds = array<i64: 32, 128>}]} {
    %c0 = arith.constant 0 : index
    %c0_0 = arith.constant 0 : index
    %0 = vector.load %arg1[%c0, %c0_0] : memref<32x576xbf16, #tpu.memory_space<vmem>>, vector<32x576xbf16>
    %c0_1 = arith.constant 0 : index
    %c0_2 = arith.constant 0 : index
    %1 = vector.load %arg2[%c0_1, %c0_2] : memref<576x128xbf16, #tpu.memory_space<vmem>>, vector<576x128xbf16>
    %cst = arith.constant dense<0.000000e+00> : vector<32x128xf32>
    %2 = tpu.matmul %0, %1, %cst {dimension_numbers = #tpu.dot_dimension_numbers<[1], [0], [0], [1], [0, 0, 1, 1], [], []>} : vector<32x576xbf16>, vector<576x128xbf16>, vector<32x128xf32> -> vector<32x128xf32>
    %c0_3 = arith.constant 0 : index
    %c0_4 = arith.constant 0 : index
    %3 = vector.load %arg3[%c0_3, %c0_4] : memref<32x128xf32, #tpu.memory_space<vmem>>, vector<32x128xf32>
    %c0_5 = arith.constant 0 : index
    %c0_6 = arith.constant 0 : index
    %4 = vector.load %arg4[%c0_5, %c0_6] : memref<128x128xf32, #tpu.memory_space<vmem>>, vector<128x128xf32>
    %cst_7 = arith.constant dense<0.000000e+00> : vector<32x128xf32>
    %5 = tpu.matmul %3, %4, %cst_7 {dimension_numbers = #tpu.dot_dimension_numbers<[1], [0], [0], [1], [0, 0, 1, 1], [], []>} : vector<32x128xf32>, vector<128x128xf32>, vector<32x128xf32> -> vector<32x128xf32>
    %6 = arith.addf %2, %5 : vector<32x128xf32>
    %c0_8 = arith.constant 0 : index
    %c0_9 = arith.constant 0 : index
    %7 = vector.load %arg5[%c0_8, %c0_9] : memref<1x128xf32, #tpu.memory_space<vmem>>, vector<1x128xf32>
    %8 = vector.broadcast %7 : vector<1x128xf32> to vector<32x128xf32>
    %9 = arith.addf %6, %8 : vector<32x128xf32>
    %c0_10 = arith.constant 0 : index
    %c0_11 = arith.constant 0 : index
    %10 = vector.load %arg6[%c0_10, %c0_11] : memref<32x128xf32, #tpu.memory_space<vmem>>, vector<32x128xf32>
    tpu.vector_store %arg6[%c0_10, %c0_11], %9 {strides = array<i32>} : memref<32x128xf32, #tpu.memory_space<vmem>>, vector<32x128xf32>,
    return
  }
  func.func @transform_0(%arg0: i32) -> (i32, i32) {
    %c0_i32 = arith.constant 0 : i32
    %c0_i32_0 = arith.constant 0 : i32
    return %arg0, %c0_i32 : i32, i32
  }
  func.func @transform_1(%arg0: i32) -> (i32, i32) {
    %c0_i32 = arith.constant 0 : i32
    %c0_i32_0 = arith.constant 0 : i32
    %c0_i32_1 = arith.constant 0 : i32
    return %c0_i32, %c0_i32_0 : i32, i32
  }
  func.func @transform_2(%arg0: i32) -> (i32, i32) {
    %c0_i32 = arith.constant 0 : i32
    %c0_i32_0 = arith.constant 0 : i32
    return %arg0, %c0_i32 : i32, i32
  }
  func.func @transform_3(%arg0: i32) -> (i32, i32) {
    %c0_i32 = arith.constant 0 : i32
    %c0_i32_0 = arith.constant 0 : i32
    %c0_i32_1 = arith.constant 0 : i32
    return %c0_i32, %c0_i32_0 : i32, i32
  }
  func.func @transform_4(%arg0: i32) -> (i32, i32) {
    %c0_i32 = arith.constant 0 : i32
    %c0_i32_0 = arith.constant 0 : i32
    %c0_i32_1 = arith.constant 0 : i32
    return %c0_i32, %c0_i32_0 : i32, i32
  }
  func.func @transform_5(%arg0: i32) -> (i32, i32) {
    %c0_i32 = arith.constant 0 : i32
    %c0_i32_0 = arith.constant 0 : i32
    return %arg0, %c0_i32 : i32, i32
  }
}

</mosaic_0001>

<llo_original>
// kernel: forward.5
$region0: #{forward.5}
  #allocation0 [shape = 'u32[]', space=smem, size = 0x4, offset = 0x4, fixed_abs, tag = 'smem constant byte address 0x4 - core index']
  #allocation1 [shape = 'u32[144,128]{1,0:T(1,128)}', space=vmem, size = 0x12000, scoped, tag = 'internal scratch']
  %s0 = inlined_call_operand.vmem [shape: bf16[512,32], index: 0, kind: input, shape index: {}]
  %s1 = inlined_call_operand.vmem [shape: bf16[32,128], index: 1, kind: input, shape index: {}]
  %s2 = inlined_call_operand.vmem [shape: f32[1,128], index: 2, kind: input, shape index: {}]
  %s3 = inlined_call_operand.vmem [shape: f32[512,128], index: 3, kind: output, shape index: {}]
  %s4 = sld [smem:[#allocation0]]
  $region22: #{forward.5} parent=0
    _
  %s6 = ssub.s32 1, %s4
  %s7 = scalar_select 0, %s6, %s4
  // Predicated region
  $region2: #{forward.5} parent=0 // pred_check
    _
  $region3: #{forward.5} parent=0 // pred_check_branch
    %9 = sbr.rel (0) target = $region5
  $region4: #{forward.5} parent=0 // pred_region
    _
  $region5: #{forward.5} parent=0 // pred_fallthru
    _
  // Predicated region
  $region6: #{forward.5} parent=0 // pred_check
    _
  $region7: #{forward.5} parent=0 // pred_check_branch
    %11 = sbr.rel (0) target = $region9
  $region8: #{forward.5} parent=0 // pred_region
    _
  $region9: #{forward.5} parent=0 // pred_fallthru
    _
  // Predicated region
  $region10: #{forward.5} parent=0 // pred_check
    _
  $region11: #{forward.5} parent=0 // pred_check_branch
    %13 = sbr.rel (0) target = $region13
  $region12: #{forward.5} parent=0 // pred_region
    _
  $region13: #{forward.5} parent=0 // pred_fallthru
    _
  %v15 = vld [vmem:[%s0] sm:$0xf]
  %v16 = vld [vmem:[%s0 + $0x4] sm:$0xf]
  %v17 = vld [vmem:[%s0 + $0x8] sm:$0xf]
  %v18 = vld [vmem:[%s0 + $0xc] sm:$0xf]
  %v19 = vld [vmem:[%s0 + $0x10] sm:$0xf]
  %v20 = vld [vmem:[%s0 + $0x14] sm:$0xf]
  %v21 = vld [vmem:[%s0 + $0x18] sm:$0xf]
  %v22 = vld [vmem:[%s0 + $0x1c] sm:$0xf]
  %v23 = vld [vmem:[%s0 + $0x20] sm:$0xf]
  %v24 = vld [vmem:[%s0 + $0x24] sm:$0xf]
  %v25 = vld [vmem:[%s0 + $0x28] sm:$0xf]
  %v26 = vld [vmem:[%s0 + $0x2c] sm:$0xf]
  %v27 = vld [vmem:[%s0 + $0x30] sm:$0xf]
  %v28 = vld [vmem:[%s0 + $0x34] sm:$0xf]
  %v29 = vld [vmem:[%s0 + $0x38] sm:$0xf]
  %v30 = vld [vmem:[%s0 + $0x3c] sm:$0xf]
  %v31 = vld [vmem:[%s0 + $0x40] sm:$0xf]
  %v32 = vld [vmem:[%s0 + $0x44] sm:$0xf]
  %v33 = vld [vmem:[%s0 + $0x48] sm:$0xf]
  %v34 = vld [vmem:[%s0 + $0x4c] sm:$0xf]
  %v35 = vld [vmem:[%s0 + $0x50] sm:$0xf]
  %v36 = vld [vmem:[%s0 + $0x54] sm:$0xf]
  %v37 = vld [vmem:[%s0 + $0x58] sm:$0xf]
  %v38 = vld [vmem:[%s0 + $0x5c] sm:$0xf]
  %v39 = vld [vmem:[%s0 + $0x60] sm:$0xf]
  %v40 = vld [vmem:[%s0 + $0x64] sm:$0xf]
  %v41 = vld [vmem:[%s0 + $0x68] sm:$0xf]
  %v42 = vld [vmem:[%s0 + $0x6c] sm:$0xf]
  %v43 = vld [vmem:[%s0 + $0x70] sm:$0xf]
  %v44 = vld [vmem:[%s0 + $0x74] sm:$0xf]
  %v45 = vld [vmem:[%s0 + $0x78] sm:$0xf]
  %v46 = vld [vmem:[%s0 + $0x7c] sm:$0xf]
  %v47 = vld [vmem:[%s0 + $0x80] sm:$0xf]
  %v48 = vld [vmem:[%s0 + $0x84] sm:$0xf]
  %v49 = vld [vmem:[%s0 + $0x88] sm:$0xf]
  %v50 = vld [vmem:[%s0 + $0x8c] sm:$0xf]
  %v51 = vld [vmem:[%s0 + $0x90] sm:$0xf]
  %v52 = vld [vmem:[%s0 + $0x94] sm:$0xf]
  %v53 = vld [vmem:[%s0 + $0x98] sm:$0xf]
  %v54 = vld [vmem:[%s0 + $0x9c] sm:$0xf]
  %v55 = vld [vmem:[%s0 + $0xa0] sm:$0xf]
  %v56 = vld [vmem:[%s0 + $0xa4] sm:$0xf]
  %v57 = vld [vmem:[%s0 + $0xa8] sm:$0xf]
  %v58 = vld [vmem:[%s0 + $0xac] sm:$0xf]
  %v59 = vld [vmem:[%s0 + $0xb0] sm:$0xf]
  %v60 = vld [vmem:[%s0 + $0xb4] sm:$0xf]
  %v61 = vld [vmem:[%s0 + $0xb8] sm:$0xf]
  %v62 = vld [vmem:[%s0 + $0xbc] sm:$0xf]
  %v63 = vld [vmem:[%s0 + $0xc0] sm:$0xf]
  %v64 = vld [vmem:[%s0 + $0xc4] sm:$0xf]
  %v65 = vld [vmem:[%s0 + $0xc8] sm:$0xf]
  %v66 = vld [vmem:[%s0 + $0xcc] sm:$0xf]
  %v67 = vld [vmem:[%s0 + $0xd0] sm:$0xf]
  %v68 = vld [vmem:[%s0 + $0xd4] sm:$0xf]
  %v69 = vld [vmem:[%s0 + $0xd8] sm:$0xf]
  %v70 = vld [vmem:[%s0 + $0xdc] sm:$0xf]
  %v71 = vld [vmem:[%s0 + $0xe0] sm:$0xf]
  %v72 = vld [vmem:[%s0 + $0xe4] sm:$0xf]
  %v73 = vld [vmem:[%s0 + $0xe8] sm:$0xf]
  %v74 = vld [vmem:[%s0 + $0xec] sm:$0xf]
  %v75 = vld [vmem:[%s0 + $0xf0] sm:$0xf]
  %v76 = vld [vmem:[%s0 + $0xf4] sm:$0xf]
  %v77 = vld [vmem:[%s0 + $0xf8] sm:$0xf]
  %v78 = vld [vmem:[%s0 + $0xfc] sm:$0xf]
  %v79 = vld [vmem:[%s1] sm:$0xf]
  %v80 = vld [vmem:[%s1 + $0x4] sm:$0xf]
  %v81 = vld [vmem:[%s1 + $0x8] sm:$0xf]
  %v82 = vld [vmem:[%s1 + $0xc] sm:$0xf]
  %v83 = vld [vmem:[%s2] sm:$0x1]
  %v85 = vlaneseq
  %v86 = vshrl.u32 %v85, 7
  %v87 = vsub.s32 0, %v86
  %v88 = vrot.slane %v83, %v87
  %v154 = vunpack.c.l.b16 %v15
  %v155 = vunpack.c.l.b16 %v16
  %v156 = vunpack.c.l.b16 %v17
  %v157 = vunpack.c.l.b16 %v18
  %v158 = vunpack.c.l.b16 %v19
  %v159 = vunpack.c.l.b16 %v20
  %v160 = vunpack.c.l.b16 %v21
  %v161 = vunpack.c.l.b16 %v22
  %v162 = vunpack.c.l.b16 %v23
  %v163 = vunpack.c.l.b16 %v24
  %v164 = vunpack.c.l.b16 %v25
  %v165 = vunpack.c.l.b16 %v26
  %v166 = vunpack.c.l.b16 %v27
  %v167 = vunpack.c.l.b16 %v28
  %v168 = vunpack.c.l.b16 %v29
  %v169 = vunpack.c.l.b16 %v30
  %v170 = vunpack.c.l.b16 %v31
  %v171 = vunpack.c.l.b16 %v32
  %v172 = vunpack.c.l.b16 %v33
  %v173 = vunpack.c.l.b16 %v34
  %v174 = vunpack.c.l.b16 %v35
  %v175 = vunpack.c.l.b16 %v36
  %v176 = vunpack.c.l.b16 %v37
  %v177 = vunpack.c.l.b16 %v38
  %v178 = vunpack.c.l.b16 %v39
  %v179 = vunpack.c.l.b16 %v40
  %v180 = vunpack.c.l.b16 %v41
  %v181 = vunpack.c.l.b16 %v42
  %v182 = vunpack.c.l.b16 %v43
  %v183 = vunpack.c.l.b16 %v44
  %v184 = vunpack.c.l.b16 %v45
  %v185 = vunpack.c.l.b16 %v46
  %v186 = vunpack.c.l.b16 %v47
  %v187 = vunpack.c.l.b16 %v48
  %v188 = vunpack.c.l.b16 %v49
  %v189 = vunpack.c.l.b16 %v50
  %v190 = vunpack.c.l.b16 %v51
  %v191 = vunpack.c.l.b16 %v52
  %v192 = vunpack.c.l.b16 %v53
  %v193 = vunpack.c.l.b16 %v54
  %v194 = vunpack.c.l.b16 %v55
  %v195 = vunpack.c.l.b16 %v56
  %v196 = vunpack.c.l.b16 %v57
  %v197 = vunpack.c.l.b16 %v58
  %v198 = vunpack.c.l.b16 %v59
  %v199 = vunpack.c.l.b16 %v60
  %v200 = vunpack.c.l.b16 %v61
  %v201 = vunpack.c.l.b16 %v62
  %v202 = vunpack.c.l.b16 %v63
  %v203 = vunpack.c.l.b16 %v64
  %v204 = vunpack.c.l.b16 %v65
  %v205 = vunpack.c.l.b16 %v66
  %v206 = vunpack.c.l.b16 %v67
  %v207 = vunpack.c.l.b16 %v68
  %v208 = vunpack.c.l.b16 %v69
  %v209 = vunpack.c.l.b16 %v70
  %v210 = vunpack.c.l.b16 %v71
  %v211 = vunpack.c.l.b16 %v72
  %v212 = vunpack.c.l.b16 %v73
  %v213 = vunpack.c.l.b16 %v74
  %v214 = vunpack.c.l.b16 %v75
  %v215 = vunpack.c.l.b16 %v76
  %v216 = vunpack.c.l.b16 %v77
  %v217 = vunpack.c.l.b16 %v78
  %v218 = vpack.c.b16 %v155, %v154
  %v219 = vpack.c.b16 %v157, %v156
  %v220 = vpack.c.b16 %v159, %v158
  %v221 = vpack.c.b16 %v161, %v160
  %v222 = vpack.c.b16 %v163, %v162
  %v223 = vpack.c.b16 %v165, %v164
  %v224 = vpack.c.b16 %v167, %v166
  %v225 = vpack.c.b16 %v169, %v168
  %v226 = vpack.c.b16 %v171, %v170
  %v227 = vpack.c.b16 %v173, %v172
  %v228 = vpack.c.b16 %v175, %v174
  %v229 = vpack.c.b16 %v177, %v176
  %v230 = vpack.c.b16 %v179, %v178
  %v231 = vpack.c.b16 %v181, %v180
  %v232 = vpack.c.b16 %v183, %v182
  %v233 = vpack.c.b16 %v185, %v184
  %v234 = vpack.c.b16 %v187, %v186
  %v235 = vpack.c.b16 %v189, %v188
  %v236 = vpack.c.b16 %v191, %v190
  %v237 = vpack.c.b16 %v193, %v192
  %v238 = vpack.c.b16 %v195, %v194
  %v239 = vpack.c.b16 %v197, %v196
  %v240 = vpack.c.b16 %v199, %v198
  %v241 = vpack.c.b16 %v201, %v200
  %v242 = vpack.c.b16 %v203, %v202
  %v243 = vpack.c.b16 %v205, %v204
  %v244 = vpack.c.b16 %v207, %v206
  %v245 = vpack.c.b16 %v209, %v208
  %v246 = vpack.c.b16 %v211, %v210
  %v247 = vpack.c.b16 %v213, %v212
  %v248 = vpack.c.b16 %v215, %v214
  %v249 = vpack.c.b16 %v217, %v216
  %v254 = vunpack.c.l.b16 %v79
  %v255 = vunpack.c.l.b16 %v80
  %v256 = vunpack.c.l.b16 %v81
  %v257 = vunpack.c.l.b16 %v82
  %v258 = vpack.c.b16 %v255, %v254
  %v259 = vpack.c.b16 %v257, %v256
  %vm262 = vcmask 261120
  %v264 = vsel %vm262, %v218, 0
  %v267 = vsel %vm262, %v219, 0
  %v270 = vsel %vm262, %v220, 0
  %v273 = vsel %vm262, %v221, 0
  %v276 = vsel %vm262, %v222, 0
  %v279 = vsel %vm262, %v223, 0
  %v282 = vsel %vm262, %v224, 0
  %v285 = vsel %vm262, %v225, 0
  %v288 = vsel %vm262, %v226, 0
  %v291 = vsel %vm262, %v227, 0
  %v294 = vsel %vm262, %v228, 0
  %v297 = vsel %vm262, %v229, 0
  %v300 = vsel %vm262, %v230, 0
  %v303 = vsel %vm262, %v231, 0
  %v306 = vsel %vm262, %v232, 0
  %v309 = vsel %vm262, %v233, 0
  %v312 = vsel %vm262, %v234, 0
  %v315 = vsel %vm262, %v235, 0
  %v318 = vsel %vm262, %v236, 0
  %v321 = vsel %vm262, %v237, 0
  %v324 = vsel %vm262, %v238, 0
  %v327 = vsel %vm262, %v239, 0
  %v330 = vsel %vm262, %v240, 0
  %v333 = vsel %vm262, %v241, 0
  %v336 = vsel %vm262, %v242, 0
  %v339 = vsel %vm262, %v243, 0
  %v342 = vsel %vm262, %v244, 0
  %v345 = vsel %vm262, %v245, 0
  %v348 = vsel %vm262, %v246, 0
  %v351 = vsel %vm262, %v247, 0
  %v354 = vsel %vm262, %v248, 0
  %v357 = vsel %vm262, %v249, 0
  %359 = vmatprep.subr.bf16.mxu0 0
  %360 = vmatpush1.bf16.msra.mxu0 %v258
  %361 = vmatprep.subr.bf16.mxu0 0
  %362 = vmatpush1.bf16.msra.mxu0 %v259
  %363 = vmatprep.subr.bf16.mxu0 0
  %364 = vmatpush1.bf16.msra.mxu0 0
  %365 = vmatprep.subr.bf16.mxu0 0
  %366 = vmatpush1.bf16.msra.mxu0 0
  %367 = vmatprep.subr.bf16.mxu0 0
  %368 = vmatpush1.bf16.msra.mxu0 0
  %369 = vmatprep.subr.bf16.mxu0 0
  %370 = vmatpush1.bf16.msra.mxu0 0
  %371 = vmatprep.subr.bf16.mxu0 0
  %372 = vmatpush1.bf16.msra.mxu0 0
  %373 = vmatprep.subr.bf16.mxu0 0
  %374 = vmatpush1.bf16.msra.mxu0 0
  %375 = vmatprep.subr.bf16.mxu0 0
  %376 = vmatpush1.bf16.msra.mxu0 0
  %377 = vmatprep.subr.bf16.mxu0 0
  %378 = vmatpush1.bf16.msra.mxu0 0
  %379 = vmatprep.subr.bf16.mxu0 0
  %380 = vmatpush1.bf16.msra.mxu0 0
  %381 = vmatprep.subr.bf16.mxu0 0
  %382 = vmatpush1.bf16.msra.mxu0 0
  %383 = vmatprep.subr.bf16.mxu0 0
  %384 = vmatpush1.bf16.msra.mxu0 0
  %385 = vmatprep.subr.bf16.mxu0 0
  %386 = vmatpush1.bf16.msra.mxu0 0
  %387 = vmatprep.subr.bf16.mxu0 0
  %388 = vmatpush1.bf16.msra.mxu0 0
  %389 = vmatprep.subr.bf16.mxu0 0
  %390 = vmatpush1.bf16.msra.mxu0 0
  %391 = vmatprep.mubr.bf16.mxu0 0
  %392 = vmatmul.mubr.bf16.gmra.mrb[0].mxu0 %v264
  %v393 = vpop.f32.mrb[0].mxu0
  %v394 = vadd.f32 %v88, %v393
  %v395 = vpop.f32.mrb[0].mxu0
  %v396 = vpop.f32.mrb[0].mxu0
  %v397 = vadd.f32 %v88, %v396
  %v398 = vpop.f32.mrb[0].mxu0
  %399 = vmatprep.mubr.bf16.mxu0 0
  %400 = vmatmul.mubr.bf16.gmra.mrb[0].mxu0 %v267
  %v401 = vpop.f32.mrb[0].mxu0
  %v402 = vadd.f32 %v88, %v401
  %v403 = vpop.f32.mrb[0].mxu0
  %v404 = vpop.f32.mrb[0].mxu0
  %v405 = vadd.f32 %v88, %v404
  %v406 = vpop.f32.mrb[0].mxu0
  %407 = vmatprep.mubr.bf16.mxu0 0
  %408 = vmatmul.mubr.bf16.gmra.mrb[0].mxu0 %v270
  %v409 = vpop.f32.mrb[0].mxu0
  %v410 = vadd.f32 %v88, %v409
  %v411 = vpop.f32.mrb[0].mxu0
  %v412 = vpop.f32.mrb[0].mxu0
  %v413 = vadd.f32 %v88, %v412
  %v414 = vpop.f32.mrb[0].mxu0
  %415 = vmatprep.mubr.bf16.mxu0 0
  %416 = vmatmul.mubr.bf16.gmra.mrb[0].mxu0 %v273
  %v417 = vpop.f32.mrb[0].mxu0
  %v418 = vadd.f32 %v88, %v417
  %v419 = vpop.f32.mrb[0].mxu0
  %v420 = vpop.f32.mrb[0].mxu0
  %v421 = vadd.f32 %v88, %v420
  %v422 = vpop.f32.mrb[0].mxu0
  %423 = vmatprep.mubr.bf16.mxu0 0
  %424 = vmatmul.mubr.bf16.gmra.mrb[0].mxu0 %v276
  %v425 = vpop.f32.mrb[0].mxu0
  %v426 = vadd.f32 %v88, %v425
  %v427 = vpop.f32.mrb[0].mxu0
  %v428 = vpop.f32.mrb[0].mxu0
  %v429 = vadd.f32 %v88, %v428
  %v430 = vpop.f32.mrb[0].mxu0
  %431 = vmatprep.mubr.bf16.mxu0 0
  %432 = vmatmul.mubr.bf16.gmra.mrb[0].mxu0 %v279
  %v433 = vpop.f32.mrb[0].mxu0
  %v434 = vadd.f32 %v88, %v433
  %v435 = vpop.f32.mrb[0].mxu0
  %v436 = vpop.f32.mrb[0].mxu0
  %v437 = vadd.f32 %v88, %v436
  %v438 = vpop.f32.mrb[0].mxu0
  %439 = vmatprep.mubr.bf16.mxu0 0
  %440 = vmatmul.mubr.bf16.gmra.mrb[0].mxu0 %v282
  %v441 = vpop.f32.mrb[0].mxu0
  %v442 = vadd.f32 %v88, %v441
  %v443 = vpop.f32.mrb[0].mxu0
  %v444 = vpop.f32.mrb[0].mxu0
  %v445 = vadd.f32 %v88, %v444
  %v446 = vpop.f32.mrb[0].mxu0
  %447 = vmatprep.mubr.bf16.mxu0 0
  %448 = vmatmul.mubr.bf16.gmra.mrb[0].mxu0 %v285
  %v449 = vpop.f32.mrb[0].mxu0
  %v450 = vadd.f32 %v88, %v449
  %v451 = vpop.f32.mrb[0].mxu0
  %v452 = vpop.f32.mrb[0].mxu0
  %v453 = vadd.f32 %v88, %v452
  %v454 = vpop.f32.mrb[0].mxu0
  %455 = vmatprep.mubr.bf16.mxu0 0
  %456 = vmatmul.mubr.bf16.gmra.mrb[0].mxu0 %v288
  %v457 = vpop.f32.mrb[0].mxu0
  %v458 = vadd.f32 %v88, %v457
  %v459 = vpop.f32.mrb[0].mxu0
  %v460 = vpop.f32.mrb[0].mxu0
  %v461 = vadd.f32 %v88, %v460
  %v462 = vpop.f32.mrb[0].mxu0
  %463 = vmatprep.mubr.bf16.mxu0 0
  %464 = vmatmul.mubr.bf16.gmra.mrb[0].mxu0 %v291
  %v465 = vpop.f32.mrb[0].mxu0
  %v466 = vadd.f32 %v88, %v465
  %v467 = vpop.f32.mrb[0].mxu0
  %v468 = vpop.f32.mrb[0].mxu0
  %v469 = vadd.f32 %v88, %v468
  %v470 = vpop.f32.mrb[0].mxu0
  %471 = vmatprep.mubr.bf16.mxu0 0
  %472 = vmatmul.mubr.bf16.gmra.mrb[0].mxu0 %v294
  %v473 = vpop.f32.mrb[0].mxu0
  %v474 = vadd.f32 %v88, %v473
  %v475 = vpop.f32.mrb[0].mxu0
  %v476 = vpop.f32.mrb[0].mxu0
  %v477 = vadd.f32 %v88, %v476
  %v478 = vpop.f32.mrb[0].mxu0
  %479 = vmatprep.mubr.bf16.mxu0 0
  %480 = vmatmul.mubr.bf16.gmra.mrb[0].mxu0 %v297
  %v481 = vpop.f32.mrb[0].mxu0
  %v482 = vadd.f32 %v88, %v481
  %v483 = vpop.f32.mrb[0].mxu0
  %v484 = vpop.f32.mrb[0].mxu0
  %v485 = vadd.f32 %v88, %v484
  %v486 = vpop.f32.mrb[0].mxu0
  %487 = vmatprep.mubr.bf16.mxu0 0
  %488 = vmatmul.mubr.bf16.gmra.mrb[0].mxu0 %v300
  %v489 = vpop.f32.mrb[0].mxu0
  %v490 = vadd.f32 %v88, %v489
  %v491 = vpop.f32.mrb[0].mxu0
  %v492 = vpop.f32.mrb[0].mxu0
  %v493 = vadd.f32 %v88, %v492
  %v494 = vpop.f32.mrb[0].mxu0
  %495 = vmatprep.mubr.bf16.mxu0 0
  %496 = vmatmul.mubr.bf16.gmra.mrb[0].mxu0 %v303
  %v497 = vpop.f32.mrb[0].mxu0
  %v498 = vadd.f32 %v88, %v497
  %v499 = vpop.f32.mrb[0].mxu0
  %v500 = vpop.f32.mrb[0].mxu0
  %v501 = vadd.f32 %v88, %v500
  %v502 = vpop.f32.mrb[0].mxu0
  %503 = vmatprep.mubr.bf16.mxu0 0
  %504 = vmatmul.mubr.bf16.gmra.mrb[0].mxu0 %v306
  %v505 = vpop.f32.mrb[0].mxu0
  %v506 = vadd.f32 %v88, %v505
  %v507 = vpop.f32.mrb[0].mxu0
  %v508 = vpop.f32.mrb[0].mxu0
  %v509 = vadd.f32 %v88, %v508
  %v510 = vpop.f32.mrb[0].mxu0
  %511 = vmatprep.mubr.bf16.mxu0 0
  %512 = vmatmul.mubr.bf16.gmra.mrb[0].mxu0 %v309
  %v513 = vpop.f32.mrb[0].mxu0
  %v514 = vadd.f32 %v88, %v513
  %v515 = vpop.f32.mrb[0].mxu0
  %v516 = vpop.f32.mrb[0].mxu0
  %v517 = vadd.f32 %v88, %v516
  %v518 = vpop.f32.mrb[0].mxu0
  %519 = vmatprep.mubr.bf16.mxu0 0
  %520 = vmatmul.mubr.bf16.gmra.mrb[0].mxu0 %v312
  %v521 = vpop.f32.mrb[0].mxu0
  %v522 = vadd.f32 %v88, %v521
  %v523 = vpop.f32.mrb[0].mxu0
  %v524 = vpop.f32.mrb[0].mxu0
  %v525 = vadd.f32 %v88, %v524
  %v526 = vpop.f32.mrb[0].mxu0
  %527 = vmatprep.mubr.bf16.mxu0 0
  %528 = vmatmul.mubr.bf16.gmra.mrb[0].mxu0 %v315
  %v529 = vpop.f32.mrb[0].mxu0
  %v530 = vadd.f32 %v88, %v529
  %v531 = vpop.f32.mrb[0].mxu0
  %v532 = vpop.f32.mrb[0].mxu0
  %v533 = vadd.f32 %v88, %v532
  %v534 = vpop.f32.mrb[0].mxu0
  %535 = vmatprep.mubr.bf16.mxu0 0
  %536 = vmatmul.mubr.bf16.gmra.mrb[0].mxu0 %v318
  %v537 = vpop.f32.mrb[0].mxu0
  %v538 = vadd.f32 %v88, %v537
  %v539 = vpop.f32.mrb[0].mxu0
  %v540 = vpop.f32.mrb[0].mxu0
  %v541 = vadd.f32 %v88, %v540
  %v542 = vpop.f32.mrb[0].mxu0
  %543 = vmatprep.mubr.bf16.mxu0 0
  %544 = vmatmul.mubr.bf16.gmra.mrb[0].mxu0 %v321
  %v545 = vpop.f32.mrb[0].mxu0
  %v546 = vadd.f32 %v88, %v545
  %v547 = vpop.f32.mrb[0].mxu0
  %v548 = vpop.f32.mrb[0].mxu0
  %v549 = vadd.f32 %v88, %v548
  %v550 = vpop.f32.mrb[0].mxu0
  %551 = vmatprep.mubr.bf16.mxu0 0
  %552 = vmatmul.mubr.bf16.gmra.mrb[0].mxu0 %v324
  %v553 = vpop.f32.mrb[0].mxu0
  %v554 = vadd.f32 %v88, %v553
  %v555 = vpop.f32.mrb[0].mxu0
  %v556 = vpop.f32.mrb[0].mxu0
  %v557 = vadd.f32 %v88, %v556
  %v558 = vpop.f32.mrb[0].mxu0
  %559 = vmatprep.mubr.bf16.mxu0 0
  %560 = vmatmul.mubr.bf16.gmra.mrb[0].mxu0 %v327
  %v561 = vpop.f32.mrb[0].mxu0
  %v562 = vadd.f32 %v88, %v561
  %v563 = vpop.f32.mrb[0].mxu0
  %v564 = vpop.f32.mrb[0].mxu0
  %v565 = vadd.f32 %v88, %v564
  %v566 = vpop.f32.mrb[0].mxu0
  %567 = vmatprep.mubr.bf16.mxu0 0
  %568 = vmatmul.mubr.bf16.gmra.mrb[0].mxu0 %v330
  %v569 = vpop.f32.mrb[0].mxu0
  %v570 = vadd.f32 %v88, %v569
  %v571 = vpop.f32.mrb[0].mxu0
  %v572 = vpop.f32.mrb[0].mxu0
  %v573 = vadd.f32 %v88, %v572
  %v574 = vpop.f32.mrb[0].mxu0
  %575 = vmatprep.mubr.bf16.mxu0 0
  %576 = vmatmul.mubr.bf16.gmra.mrb[0].mxu0 %v333
  %v577 = vpop.f32.mrb[0].mxu0
  %v578 = vadd.f32 %v88, %v577
  %v579 = vpop.f32.mrb[0].mxu0
  %v580 = vpop.f32.mrb[0].mxu0
  %v581 = vadd.f32 %v88, %v580
  %v582 = vpop.f32.mrb[0].mxu0
  %583 = vmatprep.mubr.bf16.mxu0 0
  %584 = vmatmul.mubr.bf16.gmra.mrb[0].mxu0 %v336
  %v585 = vpop.f32.mrb[0].mxu0
  %v586 = vadd.f32 %v88, %v585
  %v587 = vpop.f32.mrb[0].mxu0
  %v588 = vpop.f32.mrb[0].mxu0
  %v589 = vadd.f32 %v88, %v588
  %v590 = vpop.f32.mrb[0].mxu0
  %591 = vmatprep.mubr.bf16.mxu0 0
  %592 = vmatmul.mubr.bf16.gmra.mrb[0].mxu0 %v339
  %v593 = vpop.f32.mrb[0].mxu0
  %v594 = vadd.f32 %v88, %v593
  %v595 = vpop.f32.mrb[0].mxu0
  %v596 = vpop.f32.mrb[0].mxu0
  %v597 = vadd.f32 %v88, %v596
  %v598 = vpop.f32.mrb[0].mxu0
  %599 = vmatprep.mubr.bf16.mxu0 0
  %600 = vmatmul.mubr.bf16.gmra.mrb[0].mxu0 %v342
  %v601 = vpop.f32.mrb[0].mxu0
  %v602 = vadd.f32 %v88, %v601
  %v603 = vpop.f32.mrb[0].mxu0
  %v604 = vpop.f32.mrb[0].mxu0
  %v605 = vadd.f32 %v88, %v604
  %v606 = vpop.f32.mrb[0].mxu0
  %607 = vmatprep.mubr.bf16.mxu0 0
  %608 = vmatmul.mubr.bf16.gmra.mrb[0].mxu0 %v345
  %v609 = vpop.f32.mrb[0].mxu0
  %v610 = vadd.f32 %v88, %v609
  %v611 = vpop.f32.mrb[0].mxu0
  %v612 = vpop.f32.mrb[0].mxu0
  %v613 = vadd.f32 %v88, %v612
  %v614 = vpop.f32.mrb[0].mxu0
  %615 = vmatprep.mubr.bf16.mxu0 0
  %616 = vmatmul.mubr.bf16.gmra.mrb[0].mxu0 %v348
  %v617 = vpop.f32.mrb[0].mxu0
  %v618 = vadd.f32 %v88, %v617
  %v619 = vpop.f32.mrb[0].mxu0
  %v620 = vpop.f32.mrb[0].mxu0
  %v621 = vadd.f32 %v88, %v620
  %v622 = vpop.f32.mrb[0].mxu0
  %623 = vmatprep.mubr.bf16.mxu0 0
  %624 = vmatmul.mubr.bf16.gmra.mrb[0].mxu0 %v351
  %v625 = vpop.f32.mrb[0].mxu0
  %v626 = vadd.f32 %v88, %v625
  %v627 = vpop.f32.mrb[0].mxu0
  %v628 = vpop.f32.mrb[0].mxu0
  %v629 = vadd.f32 %v88, %v628
  %v630 = vpop.f32.mrb[0].mxu0
  %631 = vmatprep.mubr.bf16.mxu0 0
  %632 = vmatmul.mubr.bf16.gmra.mrb[0].mxu0 %v354
  %v633 = vpop.f32.mrb[0].mxu0
  %v634 = vadd.f32 %v88, %v633
  %v635 = vpop.f32.mrb[0].mxu0
  %v636 = vpop.f32.mrb[0].mxu0
  %v637 = vadd.f32 %v88, %v636
  %v638 = vpop.f32.mrb[0].mxu0
  %639 = vmatprep.mubr.bf16.mxu0 0
  %640 = vmatmul.mubr.bf16.gmra.mrb[0].mxu0 %v357
  %v641 = vpop.f32.mrb[0].mxu0
  %v642 = vadd.f32 %v88, %v641
  %v643 = vpop.f32.mrb[0].mxu0
  %v644 = vpop.f32.mrb[0].mxu0
  %v645 = vadd.f32 %v88, %v644
  %v646 = vpop.f32.mrb[0].mxu0
  %647 = vdwg.mxu0
  %648 = vst [vmem:[%s3] sm:$0xff] %v394
  %649 = vst [vmem:[%s3 + $0x8] sm:$0xff] %v397
  %650 = vst [vmem:[%s3 + $0x10] sm:$0xff] %v402
  %651 = vst [vmem:[%s3 + $0x18] sm:$0xff] %v405
  %652 = vst [vmem:[%s3 + $0x20] sm:$0xff] %v410
  %653 = vst [vmem:[%s3 + $0x28] sm:$0xff] %v413
  %654 = vst [vmem:[%s3 + $0x30] sm:$0xff] %v418
  %655 = vst [vmem:[%s3 + $0x38] sm:$0xff] %v421
  %656 = vst [vmem:[%s3 + $0x40] sm:$0xff] %v426
  %657 = vst [vmem:[%s3 + $0x48] sm:$0xff] %v429
  %658 = vst [vmem:[%s3 + $0x50] sm:$0xff] %v434
  %659 = vst [vmem:[%s3 + $0x58] sm:$0xff] %v437
  %660 = vst [vmem:[%s3 + $0x60] sm:$0xff] %v442
  %661 = vst [vmem:[%s3 + $0x68] sm:$0xff] %v445
  %662 = vst [vmem:[%s3 + $0x70] sm:$0xff] %v450
  %663 = vst [vmem:[%s3 + $0x78] sm:$0xff] %v453
  %664 = vst [vmem:[%s3 + $0x80] sm:$0xff] %v458
  %665 = vst [vmem:[%s3 + $0x88] sm:$0xff] %v461
  %666 = vst [vmem:[%s3 + $0x90] sm:$0xff] %v466
  %667 = vst [vmem:[%s3 + $0x98] sm:$0xff] %v469
  %668 = vst [vmem:[%s3 + $0xa0] sm:$0xff] %v474
  %669 = vst [vmem:[%s3 + $0xa8] sm:$0xff] %v477
  %670 = vst [vmem:[%s3 + $0xb0] sm:$0xff] %v482
  %671 = vst [vmem:[%s3 + $0xb8] sm:$0xff] %v485
  %672 = vst [vmem:[%s3 + $0xc0] sm:$0xff] %v490
  %673 = vst [vmem:[%s3 + $0xc8] sm:$0xff] %v493
  %674 = vst [vmem:[%s3 + $0xd0] sm:$0xff] %v498
  %675 = vst [vmem:[%s3 + $0xd8] sm:$0xff] %v501
  %676 = vst [vmem:[%s3 + $0xe0] sm:$0xff] %v506
  %677 = vst [vmem:[%s3 + $0xe8] sm:$0xff] %v509
  %678 = vst [vmem:[%s3 + $0xf0] sm:$0xff] %v514
  %679 = vst [vmem:[%s3 + $0xf8] sm:$0xff] %v517
  %680 = vst [vmem:[%s3 + $0x100] sm:$0xff] %v522
  %681 = vst [vmem:[%s3 + $0x108] sm:$0xff] %v525
  %682 = vst [vmem:[%s3 + $0x110] sm:$0xff] %v530
  %683 = vst [vmem:[%s3 + $0x118] sm:$0xff] %v533
  %684 = vst [vmem:[%s3 + $0x120] sm:$0xff] %v538
  %685 = vst [vmem:[%s3 + $0x128] sm:$0xff] %v541
  %686 = vst [vmem:[%s3 + $0x130] sm:$0xff] %v546
  %687 = vst [vmem:[%s3 + $0x138] sm:$0xff] %v549
  %688 = vst [vmem:[%s3 + $0x140] sm:$0xff] %v554
  %689 = vst [vmem:[%s3 + $0x148] sm:$0xff] %v557
  %690 = vst [vmem:[%s3 + $0x150] sm:$0xff] %v562
  %691 = vst [vmem:[%s3 + $0x158] sm:$0xff] %v565
  %692 = vst [vmem:[%s3 + $0x160] sm:$0xff] %v570
  %693 = vst [vmem:[%s3 + $0x168] sm:$0xff] %v573
  %694 = vst [vmem:[%s3 + $0x170] sm:$0xff] %v578
  %695 = vst [vmem:[%s3 + $0x178] sm:$0xff] %v581
  %696 = vst [vmem:[%s3 + $0x180] sm:$0xff] %v586
  %697 = vst [vmem:[%s3 + $0x188] sm:$0xff] %v589
  %698 = vst [vmem:[%s3 + $0x190] sm:$0xff] %v594
  %699 = vst [vmem:[%s3 + $0x198] sm:$0xff] %v597
  %700 = vst [vmem:[%s3 + $0x1a0] sm:$0xff] %v602
  %701 = vst [vmem:[%s3 + $0x1a8] sm:$0xff] %v605
  %702 = vst [vmem:[%s3 + $0x1b0] sm:$0xff] %v610
  %703 = vst [vmem:[%s3 + $0x1b8] sm:$0xff] %v613
  %704 = vst [vmem:[%s3 + $0x1c0] sm:$0xff] %v618
  %705 = vst [vmem:[%s3 + $0x1c8] sm:$0xff] %v621
  %706 = vst [vmem:[%s3 + $0x1d0] sm:$0xff] %v626
  %707 = vst [vmem:[%s3 + $0x1d8] sm:$0xff] %v629
  %708 = vst [vmem:[%s3 + $0x1e0] sm:$0xff] %v634
  %709 = vst [vmem:[%s3 + $0x1e8] sm:$0xff] %v637
  %710 = vst [vmem:[%s3 + $0x1f0] sm:$0xff] %v642
  %711 = vst [vmem:[%s3 + $0x1f8] sm:$0xff] %v645
  // Predicated region
  $region14: #{forward.5} parent=0 // pred_check
    _
  $region15: #{forward.5} parent=0 // pred_check_branch
    %713 = sbr.rel (0) target = $region17
  $region16: #{forward.5} parent=0 // pred_region
    _
  $region17: #{forward.5} parent=0 // pred_fallthru
    _
  // Predicated region
  $region18: #{forward.5} parent=0 // pred_check
    _
  $region19: #{forward.5} parent=0 // pred_check_branch
    %715 = sbr.rel (0) target = $region21
  $region20: #{forward.5} parent=0 // pred_region
    _
  $region21: #{forward.5} parent=0 // pred_fallthru
    _

// kernel: closed_call.51
$region0: #{closed_call.51}
  #allocation0 [shape = 'u32[]', space=smem, size = 0x4, offset = 0x4, fixed_abs, tag = 'smem constant byte address 0x4 - core index']
  #allocation1 [shape = 'u32[144,128]{1,0:T(1,128)}', space=vmem, size = 0x12000, scoped, tag = 'internal scratch']
  %s0 = inlined_call_operand.vmem [shape: bf16[512,144], index: 0, kind: input, shape index: {}]
  %s1 = inlined_call_operand.vmem [shape: bf16[144,128], index: 1, kind: input, shape index: {}]
  %s2 = inlined_call_operand.vmem [shape: f32[512,32], index: 2, kind: input, shape index: {}]
  %s3 = inlined_call_operand.vmem [shape: f32[32,128], index: 3, kind: input, shape index: {}]
  %s4 = inlined_call_operand.vmem [shape: f32[1,128], index: 4, kind: input, shape index: {}]
  %s5 = inlined_call_operand.vmem [shape: f32[512,128], index: 5, kind: output, shape index: {}]
  %s6 = sld [smem:[#allocation0]]
  $region30: #{closed_call.51} parent=0
    _
  %s8 = ssub.s32 1, %s6
  %s9 = scalar_select 0, %s8, %s6
  // Predicated region
  $region2: #{closed_call.51} parent=0 // pred_check
    _
  $region3: #{closed_call.51} parent=0 // pred_check_branch
    %11 = sbr.rel (0) target = $region5
  $region4: #{closed_call.51} parent=0 // pred_region
    _
  $region5: #{closed_call.51} parent=0 // pred_fallthru
    _
  // Predicated region
  $region6: #{closed_call.51} parent=0 // pred_check
    _
  $region7: #{closed_call.51} parent=0 // pred_check_branch
    %13 = sbr.rel (0) target = $region9
  $region8: #{closed_call.51} parent=0 // pred_region
    _
  $region9: #{closed_call.51} parent=0 // pred_fallthru
    _
  // Predicated region
  $region10: #{closed_call.51} parent=0 // pred_check
    _
  $region11: #{closed_call.51} parent=0 // pred_check_branch
    %15 = sbr.rel (0) target = $region13
  $region12: #{closed_call.51} parent=0 // pred_region
    _
  $region13: #{closed_call.51} parent=0 // pred_fallthru
    _
  // Predicated region
  $region14: #{closed_call.51} parent=0 // pred_check
    _
  $region15: #{closed_call.51} parent=0 // pred_check_branch
    %17 = sbr.rel (0) target = $region17
  $region16: #{closed_call.51} parent=0 // pred_region
    _
  $region17: #{closed_call.51} parent=0 // pred_fallthru
    _
  // Predicated region
  $region18: #{closed_call.51} parent=0 // pred_check
    _
  $region19: #{closed_call.51} parent=0 // pred_check_branch
    %19 = sbr.rel (0) target = $region21
  $region20: #{closed_call.51} parent=0 // pred_region
    _
  $region21: #{closed_call.51} parent=0 // pred_fallthru
    _
  %v21 = vld [vmem:[%s0] sm:$0xff]
  %v22 = vld [vmem:[%s0 + $0x8] sm:$0xff]
  %v23 = vld [vmem:[%s0 + $0x10] sm:$0xff]
  %v24 = vld [vmem:[%s0 + $0x18] sm:$0xff]
  %v25 = vld [vmem:[%s0 + $0x20] sm:$0xff]
  %v26 = vld [vmem:[%s0 + $0x28] sm:$0xff]
  %v27 = vld [vmem:[%s0 + $0x30] sm:$0xff]
  %v28 = vld [vmem:[%s0 + $0x38] sm:$0xff]
  %v29 = vld [vmem:[%s0 + $0x40] sm:$0xff]
  %v30 = vld [vmem:[%s0 + $0x48] sm:$0xff]
  %v31 = vld [vmem:[%s0 + $0x50] sm:$0xff]
  %v32 = vld [vmem:[%s0 + $0x58] sm:$0xff]
  %v33 = vld [vmem:[%s0 + $0x60] sm:$0xff]
  %v34 = vld [vmem:[%s0 + $0x68] sm:$0xff]
  %v35 = vld [vmem:[%s0 + $0x70] sm:$0xff]
  %v36 = vld [vmem:[%s0 + $0x78] sm:$0xff]
  %v37 = vld [vmem:[%s0 + $0x80] sm:$0xff]
  %v38 = vld [vmem:[%s0 + $0x88] sm:$0xff]
  %v39 = vld [vmem:[%s0 + $0x90] sm:$0xff]
  %v40 = vld [vmem:[%s0 + $0x98] sm:$0xff]
  %v41 = vld [vmem:[%s0 + $0xa0] sm:$0xff]
  %v42 = vld [vmem:[%s0 + $0xa8] sm:$0xff]
  %v43 = vld [vmem:[%s0 + $0xb0] sm:$0xff]
  %v44 = vld [vmem:[%s0 + $0xb8] sm:$0xff]
  %v45 = vld [vmem:[%s0 + $0xc0] sm:$0xff]
  %v46 = vld [vmem:[%s0 + $0xc8] sm:$0xff]
  %v47 = vld [vmem:[%s0 + $0xd0] sm:$0xff]
  %v48 = vld [vmem:[%s0 + $0xd8] sm:$0xff]
  %v49 = vld [vmem:[%s0 + $0xe0] sm:$0xff]
  %v50 = vld [vmem:[%s0 + $0xe8] sm:$0xff]
  %v51 = vld [vmem:[%s0 + $0xf0] sm:$0xff]
  %v52 = vld [vmem:[%s0 + $0xf8] sm:$0xff]
  %v53 = vld [vmem:[%s0 + $0x100] sm:$0xff]
  %v54 = vld [vmem:[%s0 + $0x108] sm:$0xff]
  %v55 = vld [vmem:[%s0 + $0x110] sm:$0xff]
  %v56 = vld [vmem:[%s0 + $0x118] sm:$0xff]
  %v57 = vld [vmem:[%s0 + $0x120] sm:$0xff]
  %v58 = vld [vmem:[%s0 + $0x128] sm:$0xff]
  %v59 = vld [vmem:[%s0 + $0x130] sm:$0xff]
  %v60 = vld [vmem:[%s0 + $0x138] sm:$0xff]
  %v61 = vld [vmem:[%s0 + $0x140] sm:$0xff]
  %v62 = vld [vmem:[%s0 + $0x148] sm:$0xff]
  %v63 = vld [vmem:[%s0 + $0x150] sm:$0xff]
  %v64 = vld [vmem:[%s0 + $0x158] sm:$0xff]
  %v65 = vld [vmem:[%s0 + $0x160] sm:$0xff]
  %v66 = vld [vmem:[%s0 + $0x168] sm:$0xff]
  %v67 = vld [vmem:[%s0 + $0x170] sm:$0xff]
  %v68 = vld [vmem:[%s0 + $0x178] sm:$0xff]
  %v69 = vld [vmem:[%s0 + $0x180] sm:$0xff]
  %v70 = vld [vmem:[%s0 + $0x188] sm:$0xff]
  %v71 = vld [vmem:[%s0 + $0x190] sm:$0xff]
  %v72 = vld [vmem:[%s0 + $0x198] sm:$0xff]
  %v73 = vld [vmem:[%s0 + $0x1a0] sm:$0xff]
  %v74 = vld [vmem:[%s0 + $0x1a8] sm:$0xff]
  %v75 = vld [vmem:[%s0 + $0x1b0] sm:$0xff]
  %v76 = vld [vmem:[%s0 + $0x1b8] sm:$0xff]
  %v77 = vld [vmem:[%s0 + $0x1c0] sm:$0xff]
  %v78 = vld [vmem:[%s0 + $0x1c8] sm:$0xff]
  %v79 = vld [vmem:[%s0 + $0x1d0] sm:$0xff]
  %v80 = vld [vmem:[%s0 + $0x1d8] sm:$0xff]
  %v81 = vld [vmem:[%s0 + $0x1e0] sm:$0xff]
  %v82 = vld [vmem:[%s0 + $0x1e8] sm:$0xff]
  %v83 = vld [vmem:[%s0 + $0x1f0] sm:$0xff]
  %v84 = vld [vmem:[%s0 + $0x1f8] sm:$0xff]
  %v85 = vld [vmem:[%s1] sm:$0xf]
  %v86 = vld [vmem:[%s1 + $0x4] sm:$0xf]
  %v87 = vld [vmem:[%s1 + $0x8] sm:$0xf]
  %v88 = vld [vmem:[%s1 + $0xc] sm:$0xf]
  %v89 = vld [vmem:[%s1 + $0x10] sm:$0xf]
  %v90 = vld [vmem:[%s1 + $0x14] sm:$0xf]
  %v91 = vld [vmem:[%s1 + $0x18] sm:$0xf]
  %v92 = vld [vmem:[%s1 + $0x1c] sm:$0xf]
  %v93 = vld [vmem:[%s1 + $0x20] sm:$0xf]
  %v94 = vld [vmem:[%s1 + $0x24] sm:$0xf]
  %v95 = vld [vmem:[%s1 + $0x28] sm:$0xf]
  %v96 = vld [vmem:[%s1 + $0x2c] sm:$0xf]
  %v97 = vld [vmem:[%s1 + $0x30] sm:$0xf]
  %v98 = vld [vmem:[%s1 + $0x34] sm:$0xf]
  %v99 = vld [vmem:[%s1 + $0x38] sm:$0xf]
  %v100 = vld [vmem:[%s1 + $0x3c] sm:$0xf]
  %v101 = vld [vmem:[%s1 + $0x40] sm:$0xf]
  %v102 = vld [vmem:[%s1 + $0x44] sm:$0xf]
  %v103 = vld [vmem:[%s2] sm:$0xff]
  %v104 = vld [vmem:[%s2 + $0x8] sm:$0xff]
  %v105 = vld [vmem:[%s2 + $0x10] sm:$0xff]
  %v106 = vld [vmem:[%s2 + $0x18] sm:$0xff]
  %v107 = vld [vmem:[%s2 + $0x20] sm:$0xff]
  %v108 = vld [vmem:[%s2 + $0x28] sm:$0xff]
  %v109 = vld [vmem:[%s2 + $0x30] sm:$0xff]
  %v110 = vld [vmem:[%s2 + $0x38] sm:$0xff]
  %v111 = vld [vmem:[%s2 + $0x40] sm:$0xff]
  %v112 = vld [vmem:[%s2 + $0x48] sm:$0xff]
  %v113 = vld [vmem:[%s2 + $0x50] sm:$0xff]
  %v114 = vld [vmem:[%s2 + $0x58] sm:$0xff]
  %v115 = vld [vmem:[%s2 + $0x60] sm:$0xff]
  %v116 = vld [vmem:[%s2 + $0x68] sm:$0xff]
  %v117 = vld [vmem:[%s2 + $0x70] sm:$0xff]
  %v118 = vld [vmem:[%s2 + $0x78] sm:$0xff]
  %v119 = vld [vmem:[%s2 + $0x80] sm:$0xff]
  %v120 = vld [vmem:[%s2 + $0x88] sm:$0xff]
  %v121 = vld [vmem:[%s2 + $0x90] sm:$0xff]
  %v122 = vld [vmem:[%s2 + $0x98] sm:$0xff]
  %v123 = vld [vmem:[%s2 + $0xa0] sm:$0xff]
  %v124 = vld [vmem:[%s2 + $0xa8] sm:$0xff]
  %v125 = vld [vmem:[%s2 + $0xb0] sm:$0xff]
  %v126 = vld [vmem:[%s2 + $0xb8] sm:$0xff]
  %v127 = vld [vmem:[%s2 + $0xc0] sm:$0xff]
  %v128 = vld [vmem:[%s2 + $0xc8] sm:$0xff]
  %v129 = vld [vmem:[%s2 + $0xd0] sm:$0xff]
  %v130 = vld [vmem:[%s2 + $0xd8] sm:$0xff]
  %v131 = vld [vmem:[%s2 + $0xe0] sm:$0xff]
  %v132 = vld [vmem:[%s2 + $0xe8] sm:$0xff]
  %v133 = vld [vmem:[%s2 + $0xf0] sm:$0xff]
  %v134 = vld [vmem:[%s2 + $0xf8] sm:$0xff]
  %v135 = vld [vmem:[%s2 + $0x100] sm:$0xff]
  %v136 = vld [vmem:[%s2 + $0x108] sm:$0xff]
  %v137 = vld [vmem:[%s2 + $0x110] sm:$0xff]
  %v138 = vld [vmem:[%s2 + $0x118] sm:$0xff]
  %v139 = vld [vmem:[%s2 + $0x120] sm:$0xff]
  %v140 = vld [vmem:[%s2 + $0x128] sm:$0xff]
  %v141 = vld [vmem:[%s2 + $0x130] sm:$0xff]
  %v142 = vld [vmem:[%s2 + $0x138] sm:$0xff]
  %v143 = vld [vmem:[%s2 + $0x140] sm:$0xff]
  %v144 = vld [vmem:[%s2 + $0x148] sm:$0xff]
  %v145 = vld [vmem:[%s2 + $0x150] sm:$0xff]
  %v146 = vld [vmem:[%s2 + $0x158] sm:$0xff]
  %v147 = vld [vmem:[%s2 + $0x160] sm:$0xff]
  %v148 = vld [vmem:[%s2 + $0x168] sm:$0xff]
  %v149 = vld [vmem:[%s2 + $0x170] sm:$0xff]
  %v150 = vld [vmem:[%s2 + $0x178] sm:$0xff]
  %v151 = vld [vmem:[%s2 + $0x180] sm:$0xff]
  %v152 = vld [vmem:[%s2 + $0x188] sm:$0xff]
  %v153 = vld [vmem:[%s2 + $0x190] sm:$0xff]
  %v154 = vld [vmem:[%s2 + $0x198] sm:$0xff]
  %v155 = vld [vmem:[%s2 + $0x1a0] sm:$0xff]
  %v156 = vld [vmem:[%s2 + $0x1a8] sm:$0xff]
  %v157 = vld [vmem:[%s2 + $0x1b0] sm:$0xff]
  %v158 = vld [vmem:[%s2 + $0x1b8] sm:$0xff]
  %v159 = vld [vmem:[%s2 + $0x1c0] sm:$0xff]
  %v160 = vld [vmem:[%s2 + $0x1c8] sm:$0xff]
  %v161 = vld [vmem:[%s2 + $0x1d0] sm:$0xff]
  %v162 = vld [vmem:[%s2 + $0x1d8] sm:$0xff]
  %v163 = vld [vmem:[%s2 + $0x1e0] sm:$0xff]
  %v164 = vld [vmem:[%s2 + $0x1e8] sm:$0xff]
  %v165 = vld [vmem:[%s2 + $0x1f0] sm:$0xff]
  %v166 = vld [vmem:[%s2 + $0x1f8] sm:$0xff]
  %v167 = vld [vmem:[%s3] sm:$0xff]
  %v168 = vld [vmem:[%s3 + $0x8] sm:$0xff]
  %v169 = vld [vmem:[%s3 + $0x10] sm:$0xff]
  %v170 = vld [vmem:[%s3 + $0x18] sm:$0xff]
  %vm171 = vcmask 261120
  %v173 = vsel %vm171, %v103, 0
  %v176 = vsel %vm171, %v104, 0
  %v179 = vsel %vm171, %v105, 0
  %v182 = vsel %vm171, %v106, 0
  %v185 = vsel %vm171, %v107, 0
  %v188 = vsel %vm171, %v108, 0
  %v191 = vsel %vm171, %v109, 0
  %v194 = vsel %vm171, %v110, 0
  %v197 = vsel %vm171, %v111, 0
  %v200 = vsel %vm171, %v112, 0
  %v203 = vsel %vm171, %v113, 0
  %v206 = vsel %vm171, %v114, 0
  %v209 = vsel %vm171, %v115, 0
  %v212 = vsel %vm171, %v116, 0
  %v215 = vsel %vm171, %v117, 0
  %v218 = vsel %vm171, %v118, 0
  %v221 = vsel %vm171, %v119, 0
  %v224 = vsel %vm171, %v120, 0
  %v227 = vsel %vm171, %v121, 0
  %v230 = vsel %vm171, %v122, 0
  %v233 = vsel %vm171, %v123, 0
  %v236 = vsel %vm171, %v124, 0
  %v239 = vsel %vm171, %v125, 0
  %v242 = vsel %vm171, %v126, 0
  %v245 = vsel %vm171, %v127, 0
  %v248 = vsel %vm171, %v128, 0
  %v251 = vsel %vm171, %v129, 0
  %v254 = vsel %vm171, %v130, 0
  %v257 = vsel %vm171, %v131, 0
  %v260 = vsel %vm171, %v132, 0
  %v263 = vsel %vm171, %v133, 0
  %v266 = vsel %vm171, %v134, 0
  %v269 = vsel %vm171, %v135, 0
  %v272 = vsel %vm171, %v136, 0
  %v275 = vsel %vm171, %v137, 0
  %v278 = vsel %vm171, %v138, 0
  %v281 = vsel %vm171, %v139, 0
  %v284 = vsel %vm171, %v140, 0
  %v287 = vsel %vm171, %v141, 0
  %v290 = vsel %vm171, %v142, 0
  %v293 = vsel %vm171, %v143, 0
  %v296 = vsel %vm171, %v144, 0
  %v299 = vsel %vm171, %v145, 0
  %v302 = vsel %vm171, %v146, 0
  %v305 = vsel %vm171, %v147, 0
  %v308 = vsel %vm171, %v148, 0
  %v311 = vsel %vm171, %v149, 0
  %v314 = vsel %vm171, %v150, 0
  %v317 = vsel %vm171, %v151, 0
  %v320 = vsel %vm171, %v152, 0
  %v323 = vsel %vm171, %v153, 0
  %v326 = vsel %vm171, %v154, 0
  %v329 = vsel %vm171, %v155, 0
  %v332 = vsel %vm171, %v156, 0
  %v335 = vsel %vm171, %v157, 0
  %v338 = vsel %vm171, %v158, 0
  %v341 = vsel %vm171, %v159, 0
  %v344 = vsel %vm171, %v160, 0
  %v347 = vsel %vm171, %v161, 0
  %v350 = vsel %vm171, %v162, 0
  %v353 = vsel %vm171, %v163, 0
  %v356 = vsel %vm171, %v164, 0
  %v359 = vsel %vm171, %v165, 0
  %v362 = vsel %vm171, %v166, 0
  %364 = vmatprep.subr.mxu0 0.0
  %365 = vmatpush1.msra.mxu0 %v167
  %366 = vmatprep.subr.mxu0 0.0
  %367 = vmatpush1.msra.mxu0 %v168
  %368 = vmatprep.subr.mxu0 0.0
  %369 = vmatpush1.msra.mxu0 %v169
  %370 = vmatprep.subr.mxu0 0.0
  %371 = vmatpush1.msra.mxu0 %v170
  %372 = vmatprep.subr.mxu0 0.0
  %373 = vmatpush1.msra.mxu0 0.0
  %374 = vmatprep.subr.mxu0 0.0
  %375 = vmatpush1.msra.mxu0 0.0
  %376 = vmatprep.subr.mxu0 0.0
  %377 = vmatpush1.msra.mxu0 0.0
  %378 = vmatprep.subr.mxu0 0.0
  %379 = vmatpush1.msra.mxu0 0.0
  %380 = vmatprep.subr.mxu0 0.0
  %381 = vmatpush1.msra.mxu0 0.0
  %382 = vmatprep.subr.mxu0 0.0
  %383 = vmatpush1.msra.mxu0 0.0
  %384 = vmatprep.subr.mxu0 0.0
  %385 = vmatpush1.msra.mxu0 0.0
  %386 = vmatprep.subr.mxu0 0.0
  %387 = vmatpush1.msra.mxu0 0.0
  %388 = vmatprep.subr.mxu0 0.0
  %389 = vmatpush1.msra.mxu0 0.0
  %390 = vmatprep.subr.mxu0 0.0
  %391 = vmatpush1.msra.mxu0 0.0
  %392 = vmatprep.subr.mxu0 0.0
  %393 = vmatpush1.msra.mxu0 0.0
  %394 = vmatprep.subr.mxu0 0.0
  %395 = vmatpush1.msra.mxu0 0.0
  %396 = vmatprep.subr.mxu0 0.0
  %397 = vmatpush1.msra.mxu0 0.0
  %398 = vmatprep.subr.mxu0 0.0
  %399 = vmatpush1.msra.mxu0 0.0
  %400 = vmatprep.subr.mxu0 0.0
  %401 = vmatpush1.msra.mxu0 0.0
  %402 = vmatprep.subr.mxu0 0.0
  %403 = vmatpush1.msra.mxu0 0.0
  %404 = vmatprep.subr.mxu0 0.0
  %405 = vmatpush1.msra.mxu0 0.0
  %406 = vmatprep.subr.mxu0 0.0
  %407 = vmatpush1.msra.mxu0 0.0
  %408 = vmatprep.subr.mxu0 0.0
  %409 = vmatpush1.msra.mxu0 0.0
  %410 = vmatprep.subr.mxu0 0.0
  %411 = vmatpush1.msra.mxu0 0.0
  %412 = vmatprep.subr.mxu0 0.0
  %413 = vmatpush1.msra.mxu0 0.0
  %414 = vmatprep.subr.mxu0 0.0
  %415 = vmatpush1.msra.mxu0 0.0
  %416 = vmatprep.subr.mxu0 0.0
  %417 = vmatpush1.msra.mxu0 0.0
  %418 = vmatprep.subr.mxu0 0.0
  %419 = vmatpush1.msra.mxu0 0.0
  %420 = vmatprep.subr.mxu0 0.0
  %421 = vmatpush1.msra.mxu0 0.0
  %422 = vmatprep.subr.mxu0 0.0
  %423 = vmatpush1.msra.mxu0 0.0
  %424 = vmatprep.subr.mxu0 0.0
  %425 = vmatpush1.msra.mxu0 0.0
  %426 = vmatprep.subr.mxu0 0.0
  %427 = vmatpush1.msra.mxu0 0.0
  %428 = vmatprep.mubr.f32.mxu0 0.0
  %429 = vmatmul.mubr.f32.gmra.mrb[0].mxu0 %v173
  %v430 = vpop.f32.mrb[0].mxu0
  %v431 = vadd.f32 0.0, %v430
  %v432 = vpop.f32.mrb[0].mxu0
  %433 = vmatprep.mubr.f32.mxu0 0.0
  %434 = vmatmul.mubr.f32.gmra.mrb[0].mxu0 %v176
  %v435 = vpop.f32.mrb[0].mxu0
  %v436 = vadd.f32 0.0, %v435
  %v437 = vpop.f32.mrb[0].mxu0
  %438 = vmatprep.mubr.f32.mxu0 0.0
  %439 = vmatmul.mubr.f32.gmra.mrb[0].mxu0 %v179
  %v440 = vpop.f32.mrb[0].mxu0
  %v441 = vadd.f32 0.0, %v440
  %v442 = vpop.f32.mrb[0].mxu0
  %443 = vmatprep.mubr.f32.mxu0 0.0
  %444 = vmatmul.mubr.f32.gmra.mrb[0].mxu0 %v182
  %v445 = vpop.f32.mrb[0].mxu0
  %v446 = vadd.f32 0.0, %v445
  %v447 = vpop.f32.mrb[0].mxu0
  %448 = vmatprep.mubr.f32.mxu0 0.0
  %449 = vmatmul.mubr.f32.gmra.mrb[0].mxu0 %v185
  %v450 = vpop.f32.mrb[0].mxu0
  %v451 = vadd.f32 0.0, %v450
  %v452 = vpop.f32.mrb[0].mxu0
  %453 = vmatprep.mubr.f32.mxu0 0.0
  %454 = vmatmul.mubr.f32.gmra.mrb[0].mxu0 %v188
  %v455 = vpop.f32.mrb[0].mxu0
  %v456 = vadd.f32 0.0, %v455
  %v457 = vpop.f32.mrb[0].mxu0
  %458 = vmatprep.mubr.f32.mxu0 0.0
  %459 = vmatmul.mubr.f32.gmra.mrb[0].mxu0 %v191
  %v460 = vpop.f32.mrb[0].mxu0
  %v461 = vadd.f32 0.0, %v460
  %v462 = vpop.f32.mrb[0].mxu0
  %463 = vmatprep.mubr.f32.mxu0 0.0
  %464 = vmatmul.mubr.f32.gmra.mrb[0].mxu0 %v194
  %v465 = vpop.f32.mrb[0].mxu0
  %v466 = vadd.f32 0.0, %v465
  %v467 = vpop.f32.mrb[0].mxu0
  %468 = vmatprep.mubr.f32.mxu0 0.0
  %469 = vmatmul.mubr.f32.gmra.mrb[0].mxu0 %v197
  %v470 = vpop.f32.mrb[0].mxu0
  %v471 = vadd.f32 0.0, %v470
  %v472 = vpop.f32.mrb[0].mxu0
  %473 = vmatprep.mubr.f32.mxu0 0.0
  %474 = vmatmul.mubr.f32.gmra.mrb[0].mxu0 %v200
  %v475 = vpop.f32.mrb[0].mxu0
  %v476 = vadd.f32 0.0, %v475
  %v477 = vpop.f32.mrb[0].mxu0
  %478 = vmatprep.mubr.f32.mxu0 0.0
  %479 = vmatmul.mubr.f32.gmra.mrb[0].mxu0 %v203
  %v480 = vpop.f32.mrb[0].mxu0
  %v481 = vadd.f32 0.0, %v480
  %v482 = vpop.f32.mrb[0].mxu0
  %483 = vmatprep.mubr.f32.mxu0 0.0
  %484 = vmatmul.mubr.f32.gmra.mrb[0].mxu0 %v206
  %v485 = vpop.f32.mrb[0].mxu0
  %v486 = vadd.f32 0.0, %v485
  %v487 = vpop.f32.mrb[0].mxu0
  %488 = vmatprep.mubr.f32.mxu0 0.0
  %489 = vmatmul.mubr.f32.gmra.mrb[0].mxu0 %v209
  %v490 = vpop.f32.mrb[0].mxu0
  %v491 = vadd.f32 0.0, %v490
  %v492 = vpop.f32.mrb[0].mxu0
  %493 = vmatprep.mubr.f32.mxu0 0.0
  %494 = vmatmul.mubr.f32.gmra.mrb[0].mxu0 %v212
  %v495 = vpop.f32.mrb[0].mxu0
  %v496 = vadd.f32 0.0, %v495
  %v497 = vpop.f32.mrb[0].mxu0
  %498 = vmatprep.mubr.f32.mxu0 0.0
  %499 = vmatmul.mubr.f32.gmra.mrb[0].mxu0 %v215
  %v500 = vpop.f32.mrb[0].mxu0
  %v501 = vadd.f32 0.0, %v500
  %v502 = vpop.f32.mrb[0].mxu0
  %503 = vmatprep.mubr.f32.mxu0 0.0
  %504 = vmatmul.mubr.f32.gmra.mrb[0].mxu0 %v218
  %v505 = vpop.f32.mrb[0].mxu0
  %v506 = vadd.f32 0.0, %v505
  %v507 = vpop.f32.mrb[0].mxu0
  %508 = vmatprep.mubr.f32.mxu0 0.0
  %509 = vmatmul.mubr.f32.gmra.mrb[0].mxu0 %v221
  %v510 = vpop.f32.mrb[0].mxu0
  %v511 = vadd.f32 0.0, %v510
  %v512 = vpop.f32.mrb[0].mxu0
  %513 = vmatprep.mubr.f32.mxu0 0.0
  %514 = vmatmul.mubr.f32.gmra.mrb[0].mxu0 %v224
  %v515 = vpop.f32.mrb[0].mxu0
  %v516 = vadd.f32 0.0, %v515
  %v517 = vpop.f32.mrb[0].mxu0
  %518 = vmatprep.mubr.f32.mxu0 0.0
  %519 = vmatmul.mubr.f32.gmra.mrb[0].mxu0 %v227
  %v520 = vpop.f32.mrb[0].mxu0
  %v521 = vadd.f32 0.0, %v520
  %v522 = vpop.f32.mrb[0].mxu0
  %523 = vmatprep.mubr.f32.mxu0 0.0
  %524 = vmatmul.mubr.f32.gmra.mrb[0].mxu0 %v230
  %v525 = vpop.f32.mrb[0].mxu0
  %v526 = vadd.f32 0.0, %v525
  %v527 = vpop.f32.mrb[0].mxu0
  %528 = vmatprep.mubr.f32.mxu0 0.0
  %529 = vmatmul.mubr.f32.gmra.mrb[0].mxu0 %v233
  %v530 = vpop.f32.mrb[0].mxu0
  %v531 = vadd.f32 0.0, %v530
  %v532 = vpop.f32.mrb[0].mxu0
  %533 = vmatprep.mubr.f32.mxu0 0.0
  %534 = vmatmul.mubr.f32.gmra.mrb[0].mxu0 %v236
  %v535 = vpop.f32.mrb[0].mxu0
  %v536 = vadd.f32 0.0, %v535
  %v537 = vpop.f32.mrb[0].mxu0
  %538 = vmatprep.mubr.f32.mxu0 0.0
  %539 = vmatmul.mubr.f32.gmra.mrb[0].mxu0 %v239
  %v540 = vpop.f32.mrb[0].mxu0
  %v541 = vadd.f32 0.0, %v540
  %v542 = vpop.f32.mrb[0].mxu0
  %543 = vmatprep.mubr.f32.mxu0 0.0
  %544 = vmatmul.mubr.f32.gmra.mrb[0].mxu0 %v242
  %v545 = vpop.f32.mrb[0].mxu0
  %v546 = vadd.f32 0.0, %v545
  %v547 = vpop.f32.mrb[0].mxu0
  %548 = vmatprep.mubr.f32.mxu0 0.0
  %549 = vmatmul.mubr.f32.gmra.mrb[0].mxu0 %v245
  %v550 = vpop.f32.mrb[0].mxu0
  %v551 = vadd.f32 0.0, %v550
  %v552 = vpop.f32.mrb[0].mxu0
  %553 = vmatprep.mubr.f32.mxu0 0.0
  %554 = vmatmul.mubr.f32.gmra.mrb[0].mxu0 %v248
  %v555 = vpop.f32.mrb[0].mxu0
  %v556 = vadd.f32 0.0, %v555
  %v557 = vpop.f32.mrb[0].mxu0
  %558 = vmatprep.mubr.f32.mxu0 0.0
  %559 = vmatmul.mubr.f32.gmra.mrb[0].mxu0 %v251
  %v560 = vpop.f32.mrb[0].mxu0
  %v561 = vadd.f32 0.0, %v560
  %v562 = vpop.f32.mrb[0].mxu0
  %563 = vmatprep.mubr.f32.mxu0 0.0
  %564 = vmatmul.mubr.f32.gmra.mrb[0].mxu0 %v254
  %v565 = vpop.f32.mrb[0].mxu0
  %v566 = vadd.f32 0.0, %v565
  %v567 = vpop.f32.mrb[0].mxu0
  %568 = vmatprep.mubr.f32.mxu0 0.0
  %569 = vmatmul.mubr.f32.gmra.mrb[0].mxu0 %v257
  %v570 = vpop.f32.mrb[0].mxu0
  %v571 = vadd.f32 0.0, %v570
  %v572 = vpop.f32.mrb[0].mxu0
  %573 = vmatprep.mubr.f32.mxu0 0.0
  %574 = vmatmul.mubr.f32.gmra.mrb[0].mxu0 %v260
  %v575 = vpop.f32.mrb[0].mxu0
  %v576 = vadd.f32 0.0, %v575
  %v577 = vpop.f32.mrb[0].mxu0
  %578 = vmatprep.mubr.f32.mxu0 0.0
  %579 = vmatmul.mubr.f32.gmra.mrb[0].mxu0 %v263
  %v580 = vpop.f32.mrb[0].mxu0
  %v581 = vadd.f32 0.0, %v580
  %v582 = vpop.f32.mrb[0].mxu0
  %583 = vmatprep.mubr.f32.mxu0 0.0
  %584 = vmatmul.mubr.f32.gmra.mrb[0].mxu0 %v266
  %v585 = vpop.f32.mrb[0].mxu0
  %v586 = vadd.f32 0.0, %v585
  %v587 = vpop.f32.mrb[0].mxu0
  %588 = vmatprep.mubr.f32.mxu0 0.0
  %589 = vmatmul.mubr.f32.gmra.mrb[0].mxu0 %v269
  %v590 = vpop.f32.mrb[0].mxu0
  %v591 = vadd.f32 0.0, %v590
  %v592 = vpop.f32.mrb[0].mxu0
  %593 = vmatprep.mubr.f32.mxu0 0.0
  %594 = vmatmul.mubr.f32.gmra.mrb[0].mxu0 %v272
  %v595 = vpop.f32.mrb[0].mxu0
  %v596 = vadd.f32 0.0, %v595
  %v597 = vpop.f32.mrb[0].mxu0
  %598 = vmatprep.mubr.f32.mxu0 0.0
  %599 = vmatmul.mubr.f32.gmra.mrb[0].mxu0 %v275
  %v600 = vpop.f32.mrb[0].mxu0
  %v601 = vadd.f32 0.0, %v600
  %v602 = vpop.f32.mrb[0].mxu0
  %603 = vmatprep.mubr.f32.mxu0 0.0
  %604 = vmatmul.mubr.f32.gmra.mrb[0].mxu0 %v278
  %v605 = vpop.f32.mrb[0].mxu0
  %v606 = vadd.f32 0.0, %v605
  %v607 = vpop.f32.mrb[0].mxu0
  %608 = vmatprep.mubr.f32.mxu0 0.0
  %609 = vmatmul.mubr.f32.gmra.mrb[0].mxu0 %v281
  %v610 = vpop.f32.mrb[0].mxu0
  %v611 = vadd.f32 0.0, %v610
  %v612 = vpop.f32.mrb[0].mxu0
  %613 = vmatprep.mubr.f32.mxu0 0.0
  %614 = vmatmul.mubr.f32.gmra.mrb[0].mxu0 %v284
  %v615 = vpop.f32.mrb[0].mxu0
  %v616 = vadd.f32 0.0, %v615
  %v617 = vpop.f32.mrb[0].mxu0
  %618 = vmatprep.mubr.f32.mxu0 0.0
  %619 = vmatmul.mubr.f32.gmra.mrb[0].mxu0 %v287
  %v620 = vpop.f32.mrb[0].mxu0
  %v621 = vadd.f32 0.0, %v620
  %v622 = vpop.f32.mrb[0].mxu0
  %623 = vmatprep.mubr.f32.mxu0 0.0
  %624 = vmatmul.mubr.f32.gmra.mrb[0].mxu0 %v290
  %v625 = vpop.f32.mrb[0].mxu0
  %v626 = vadd.f32 0.0, %v625
  %v627 = vpop.f32.mrb[0].mxu0
  %628 = vmatprep.mubr.f32.mxu0 0.0
  %629 = vmatmul.mubr.f32.gmra.mrb[0].mxu0 %v293
  %v630 = vpop.f32.mrb[0].mxu0
  %v631 = vadd.f32 0.0, %v630
  %v632 = vpop.f32.mrb[0].mxu0
  %633 = vmatprep.mubr.f32.mxu0 0.0
  %634 = vmatmul.mubr.f32.gmra.mrb[0].mxu0 %v296
  %v635 = vpop.f32.mrb[0].mxu0
  %v636 = vadd.f32 0.0, %v635
  %v637 = vpop.f32.mrb[0].mxu0
  %638 = vmatprep.mubr.f32.mxu0 0.0
  %639 = vmatmul.mubr.f32.gmra.mrb[0].mxu0 %v299
  %v640 = vpop.f32.mrb[0].mxu0
  %v641 = vadd.f32 0.0, %v640
  %v642 = vpop.f32.mrb[0].mxu0
  %643 = vmatprep.mubr.f32.mxu0 0.0
  %644 = vmatmul.mubr.f32.gmra.mrb[0].mxu0 %v302
  %v645 = vpop.f32.mrb[0].mxu0
  %v646 = vadd.f32 0.0, %v645
  %v647 = vpop.f32.mrb[0].mxu0
  %648 = vmatprep.mubr.f32.mxu0 0.0
  %649 = vmatmul.mubr.f32.gmra.mrb[0].mxu0 %v305
  %v650 = vpop.f32.mrb[0].mxu0
  %v651 = vadd.f32 0.0, %v650
  %v652 = vpop.f32.mrb[0].mxu0
  %653 = vmatprep.mubr.f32.mxu0 0.0
  %654 = vmatmul.mubr.f32.gmra.mrb[0].mxu0 %v308
  %v655 = vpop.f32.mrb[0].mxu0
  %v656 = vadd.f32 0.0, %v655
  %v657 = vpop.f32.mrb[0].mxu0
  %658 = vmatprep.mubr.f32.mxu0 0.0
  %659 = vmatmul.mubr.f32.gmra.mrb[0].mxu0 %v311
  %v660 = vpop.f32.mrb[0].mxu0
  %v661 = vadd.f32 0.0, %v660
  %v662 = vpop.f32.mrb[0].mxu0
  %663 = vmatprep.mubr.f32.mxu0 0.0
  %664 = vmatmul.mubr.f32.gmra.mrb[0].mxu0 %v314
  %v665 = vpop.f32.mrb[0].mxu0
  %v666 = vadd.f32 0.0, %v665
  %v667 = vpop.f32.mrb[0].mxu0
  %668 = vmatprep.mubr.f32.mxu0 0.0
  %669 = vmatmul.mubr.f32.gmra.mrb[0].mxu0 %v317
  %v670 = vpop.f32.mrb[0].mxu0
  %v671 = vadd.f32 0.0, %v670
  %v672 = vpop.f32.mrb[0].mxu0
  %673 = vmatprep.mubr.f32.mxu0 0.0
  %674 = vmatmul.mubr.f32.gmra.mrb[0].mxu0 %v320
  %v675 = vpop.f32.mrb[0].mxu0
  %v676 = vadd.f32 0.0, %v675
  %v677 = vpop.f32.mrb[0].mxu0
  %678 = vmatprep.mubr.f32.mxu0 0.0
  %679 = vmatmul.mubr.f32.gmra.mrb[0].mxu0 %v323
  %v680 = vpop.f32.mrb[0].mxu0
  %v681 = vadd.f32 0.0, %v680
  %v682 = vpop.f32.mrb[0].mxu0
  %683 = vmatprep.mubr.f32.mxu0 0.0
  %684 = vmatmul.mubr.f32.gmra.mrb[0].mxu0 %v326
  %v685 = vpop.f32.mrb[0].mxu0
  %v686 = vadd.f32 0.0, %v685
  %v687 = vpop.f32.mrb[0].mxu0
  %688 = vmatprep.mubr.f32.mxu0 0.0
  %689 = vmatmul.mubr.f32.gmra.mrb[0].mxu0 %v329
  %v690 = vpop.f32.mrb[0].mxu0
  %v691 = vadd.f32 0.0, %v690
  %v692 = vpop.f32.mrb[0].mxu0
  %693 = vmatprep.mubr.f32.mxu0 0.0
  %694 = vmatmul.mubr.f32.gmra.mrb[0].mxu0 %v332
  %v695 = vpop.f32.mrb[0].mxu0
  %v696 = vadd.f32 0.0, %v695
  %v697 = vpop.f32.mrb[0].mxu0
  %698 = vmatprep.mubr.f32.mxu0 0.0
  %699 = vmatmul.mubr.f32.gmra.mrb[0].mxu0 %v335
  %v700 = vpop.f32.mrb[0].mxu0
  %v701 = vadd.f32 0.0, %v700
  %v702 = vpop.f32.mrb[0].mxu0
  %703 = vmatprep.mubr.f32.mxu0 0.0
  %704 = vmatmul.mubr.f32.gmra.mrb[0].mxu0 %v338
  %v705 = vpop.f32.mrb[0].mxu0
  %v706 = vadd.f32 0.0, %v705
  %v707 = vpop.f32.mrb[0].mxu0
  %708 = vmatprep.mubr.f32.mxu0 0.0
  %709 = vmatmul.mubr.f32.gmra.mrb[0].mxu0 %v341
  %v710 = vpop.f32.mrb[0].mxu0
  %v711 = vadd.f32 0.0, %v710
  %v712 = vpop.f32.mrb[0].mxu0
  %713 = vmatprep.mubr.f32.mxu0 0.0
  %714 = vmatmul.mubr.f32.gmra.mrb[0].mxu0 %v344
  %v715 = vpop.f32.mrb[0].mxu0
  %v716 = vadd.f32 0.0, %v715
  %v717 = vpop.f32.mrb[0].mxu0
  %718 = vmatprep.mubr.f32.mxu0 0.0
  %719 = vmatmul.mubr.f32.gmra.mrb[0].mxu0 %v347
  %v720 = vpop.f32.mrb[0].mxu0
  %v721 = vadd.f32 0.0, %v720
  %v722 = vpop.f32.mrb[0].mxu0
  %723 = vmatprep.mubr.f32.mxu0 0.0
  %724 = vmatmul.mubr.f32.gmra.mrb[0].mxu0 %v350
  %v725 = vpop.f32.mrb[0].mxu0
  %v726 = vadd.f32 0.0, %v725
  %v727 = vpop.f32.mrb[0].mxu0
  %728 = vmatprep.mubr.f32.mxu0 0.0
  %729 = vmatmul.mubr.f32.gmra.mrb[0].mxu0 %v353
  %v730 = vpop.f32.mrb[0].mxu0
  %v731 = vadd.f32 0.0, %v730
  %v732 = vpop.f32.mrb[0].mxu0
  %733 = vmatprep.mubr.f32.mxu0 0.0
  %734 = vmatmul.mubr.f32.gmra.mrb[0].mxu0 %v356
  %v735 = vpop.f32.mrb[0].mxu0
  %v736 = vadd.f32 0.0, %v735
  %v737 = vpop.f32.mrb[0].mxu0
  %738 = vmatprep.mubr.f32.mxu0 0.0
  %739 = vmatmul.mubr.f32.gmra.mrb[0].mxu0 %v359
  %v740 = vpop.f32.mrb[0].mxu0
  %v741 = vadd.f32 0.0, %v740
  %v742 = vpop.f32.mrb[0].mxu0
  %743 = vmatprep.mubr.f32.mxu0 0.0
  %744 = vmatmul.mubr.f32.gmra.mrb[0].mxu0 %v362
  %v745 = vpop.f32.mrb[0].mxu0
  %v746 = vadd.f32 0.0, %v745
  %v747 = vpop.f32.mrb[0].mxu0
  %748 = vdwg.mxu0
  %v813 = vunpack.c.l.b16 %v21
  %v814 = vunpack.c.h.b16 %v21
  %v815 = vunpack.c.l.b16 %v22
  %v816 = vunpack.c.h.b16 %v22
  %v817 = vunpack.c.l.b16 %v23
  %v818 = vunpack.c.h.b16 %v23
  %v819 = vunpack.c.l.b16 %v24
  %v820 = vunpack.c.h.b16 %v24
  %v821 = vunpack.c.l.b16 %v25
  %v822 = vunpack.c.h.b16 %v25
  %v823 = vunpack.c.l.b16 %v26
  %v824 = vunpack.c.h.b16 %v26
  %v825 = vunpack.c.l.b16 %v27
  %v826 = vunpack.c.h.b16 %v27
  %v827 = vunpack.c.l.b16 %v28
  %v828 = vunpack.c.h.b16 %v28
  %v829 = vunpack.c.l.b16 %v29
  %v830 = vunpack.c.h.b16 %v29
  %v831 = vunpack.c.l.b16 %v30
  %v832 = vunpack.c.h.b16 %v30
  %v833 = vunpack.c.l.b16 %v31
  %v834 = vunpack.c.h.b16 %v31
  %v835 = vunpack.c.l.b16 %v32
  %v836 = vunpack.c.h.b16 %v32
  %v837 = vunpack.c.l.b16 %v33
  %v838 = vunpack.c.h.b16 %v33
  %v839 = vunpack.c.l.b16 %v34
  %v840 = vunpack.c.h.b16 %v34
  %v841 = vunpack.c.l.b16 %v35
  %v842 = vunpack.c.h.b16 %v35
  %v843 = vunpack.c.l.b16 %v36
  %v844 = vunpack.c.h.b16 %v36
  %v845 = vunpack.c.l.b16 %v37
  %v846 = vunpack.c.h.b16 %v37
  %v847 = vunpack.c.l.b16 %v38
  %v848 = vunpack.c.h.b16 %v38
  %v849 = vunpack.c.l.b16 %v39
  %v850 = vunpack.c.h.b16 %v39
  %v851 = vunpack.c.l.b16 %v40
  %v852 = vunpack.c.h.b16 %v40
  %v853 = vunpack.c.l.b16 %v41
  %v854 = vunpack.c.h.b16 %v41
  %v855 = vunpack.c.l.b16 %v42
  %v856 = vunpack.c.h.b16 %v42
  %v857 = vunpack.c.l.b16 %v43
  %v858 = vunpack.c.h.b16 %v43
  %v859 = vunpack.c.l.b16 %v44
  %v860 = vunpack.c.h.b16 %v44
  %v861 = vunpack.c.l.b16 %v45
  %v862 = vunpack.c.h.b16 %v45
  %v863 = vunpack.c.l.b16 %v46
  %v864 = vunpack.c.h.b16 %v46
  %v865 = vunpack.c.l.b16 %v47
  %v866 = vunpack.c.h.b16 %v47
  %v867 = vunpack.c.l.b16 %v48
  %v868 = vunpack.c.h.b16 %v48
  %v869 = vunpack.c.l.b16 %v49
  %v870 = vunpack.c.h.b16 %v49
  %v871 = vunpack.c.l.b16 %v50
  %v872 = vunpack.c.h.b16 %v50
  %v873 = vunpack.c.l.b16 %v51
  %v874 = vunpack.c.h.b16 %v51
  %v875 = vunpack.c.l.b16 %v52
  %v876 = vunpack.c.h.b16 %v52
  %v877 = vunpack.c.l.b16 %v53
  %v878 = vunpack.c.h.b16 %v53
  %v879 = vunpack.c.l.b16 %v54
  %v880 = vunpack.c.h.b16 %v54
  %v881 = vunpack.c.l.b16 %v55
  %v882 = vunpack.c.h.b16 %v55
  %v883 = vunpack.c.l.b16 %v56
  %v884 = vunpack.c.h.b16 %v56
  %v885 = vunpack.c.l.b16 %v57
  %v886 = vunpack.c.h.b16 %v57
  %v887 = vunpack.c.l.b16 %v58
  %v888 = vunpack.c.h.b16 %v58
  %v889 = vunpack.c.l.b16 %v59
  %v890 = vunpack.c.h.b16 %v59
  %v891 = vunpack.c.l.b16 %v60
  %v892 = vunpack.c.h.b16 %v60
  %v893 = vunpack.c.l.b16 %v61
  %v894 = vunpack.c.h.b16 %v61
  %v895 = vunpack.c.l.b16 %v62
  %v896 = vunpack.c.h.b16 %v62
  %v897 = vunpack.c.l.b16 %v63
  %v898 = vunpack.c.h.b16 %v63
  %v899 = vunpack.c.l.b16 %v64
  %v900 = vunpack.c.h.b16 %v64
  %v901 = vunpack.c.l.b16 %v65
  %v902 = vunpack.c.h.b16 %v65
  %v903 = vunpack.c.l.b16 %v66
  %v904 = vunpack.c.h.b16 %v66
  %v905 = vunpack.c.l.b16 %v67
  %v906 = vunpack.c.h.b16 %v67
  %v907 = vunpack.c.l.b16 %v68
  %v908 = vunpack.c.h.b16 %v68
  %v909 = vunpack.c.l.b16 %v69
  %v910 = vunpack.c.h.b16 %v69
  %v911 = vunpack.c.l.b16 %v70
  %v912 = vunpack.c.h.b16 %v70
  %v913 = vunpack.c.l.b16 %v71
  %v914 = vunpack.c.h.b16 %v71
  %v915 = vunpack.c.l.b16 %v72
  %v916 = vunpack.c.h.b16 %v72
  %v917 = vunpack.c.l.b16 %v73
  %v918 = vunpack.c.h.b16 %v73
  %v919 = vunpack.c.l.b16 %v74
  %v920 = vunpack.c.h.b16 %v74
  %v921 = vunpack.c.l.b16 %v75
  %v922 = vunpack.c.h.b16 %v75
  %v923 = vunpack.c.l.b16 %v76
  %v924 = vunpack.c.h.b16 %v76
  %v925 = vunpack.c.l.b16 %v77
  %v926 = vunpack.c.h.b16 %v77
  %v927 = vunpack.c.l.b16 %v78
  %v928 = vunpack.c.h.b16 %v78
  %v929 = vunpack.c.l.b16 %v79
  %v930 = vunpack.c.h.b16 %v79
  %v931 = vunpack.c.l.b16 %v80
  %v932 = vunpack.c.h.b16 %v80
  %v933 = vunpack.c.l.b16 %v81
  %v934 = vunpack.c.h.b16 %v81
  %v935 = vunpack.c.l.b16 %v82
  %v936 = vunpack.c.h.b16 %v82
  %v937 = vunpack.c.l.b16 %v83
  %v938 = vunpack.c.h.b16 %v83
  %v939 = vunpack.c.l.b16 %v84
  %v940 = vunpack.c.h.b16 %v84
  %v941 = vpack.c.b16 %v815, %v813
  %v942 = vpack.c.b16 %v816, %v814
  %v943 = vpack.c.b16 %v819, %v817
  %v944 = vpack.c.b16 %v820, %v818
  %v945 = vpack.c.b16 %v823, %v821
  %v946 = vpack.c.b16 %v824, %v822
  %v947 = vpack.c.b16 %v827, %v825
  %v948 = vpack.c.b16 %v828, %v826
  %v949 = vpack.c.b16 %v831, %v829
  %v950 = vpack.c.b16 %v832, %v830
  %v951 = vpack.c.b16 %v835, %v833
  %v952 = vpack.c.b16 %v836, %v834
  %v953 = vpack.c.b16 %v839, %v837
  %v954 = vpack.c.b16 %v840, %v838
  %v955 = vpack.c.b16 %v843, %v841
  %v956 = vpack.c.b16 %v844, %v842
  %v957 = vpack.c.b16 %v847, %v845
  %v958 = vpack.c.b16 %v848, %v846
  %v959 = vpack.c.b16 %v851, %v849
  %v960 = vpack.c.b16 %v852, %v850
  %v961 = vpack.c.b16 %v855, %v853
  %v962 = vpack.c.b16 %v856, %v854
  %v963 = vpack.c.b16 %v859, %v857
  %v964 = vpack.c.b16 %v860, %v858
  %v965 = vpack.c.b16 %v863, %v861
  %v966 = vpack.c.b16 %v864, %v862
  %v967 = vpack.c.b16 %v867, %v865
  %v968 = vpack.c.b16 %v868, %v866
  %v969 = vpack.c.b16 %v871, %v869
  %v970 = vpack.c.b16 %v872, %v870
  %v971 = vpack.c.b16 %v875, %v873
  %v972 = vpack.c.b16 %v876, %v874
  %v973 = vpack.c.b16 %v879, %v877
  %v974 = vpack.c.b16 %v880, %v878
  %v975 = vpack.c.b16 %v883, %v881
  %v976 = vpack.c.b16 %v884, %v882
  %v977 = vpack.c.b16 %v887, %v885
  %v978 = vpack.c.b16 %v888, %v886
  %v979 = vpack.c.b16 %v891, %v889
  %v980 = vpack.c.b16 %v892, %v890
  %v981 = vpack.c.b16 %v895, %v893
  %v982 = vpack.c.b16 %v896, %v894
  %v983 = vpack.c.b16 %v899, %v897
  %v984 = vpack.c.b16 %v900, %v898
  %v985 = vpack.c.b16 %v903, %v901
  %v986 = vpack.c.b16 %v904, %v902
  %v987 = vpack.c.b16 %v907, %v905
  %v988 = vpack.c.b16 %v908, %v906
  %v989 = vpack.c.b16 %v911, %v909
  %v990 = vpack.c.b16 %v912, %v910
  %v991 = vpack.c.b16 %v915, %v913
  %v992 = vpack.c.b16 %v916, %v914
  %v993 = vpack.c.b16 %v919, %v917
  %v994 = vpack.c.b16 %v920, %v918
  %v995 = vpack.c.b16 %v923, %v921
  %v996 = vpack.c.b16 %v924, %v922
  %v997 = vpack.c.b16 %v927, %v925
  %v998 = vpack.c.b16 %v928, %v926
  %v999 = vpack.c.b16 %v931, %v929
  %v1000 = vpack.c.b16 %v932, %v930
  %v1001 = vpack.c.b16 %v935, %v933
  %v1002 = vpack.c.b16 %v936, %v934
  %v1003 = vpack.c.b16 %v939, %v937
  %v1004 = vpack.c.b16 %v940, %v938
  %v1055 = vunpack.c.l.b16 %v85
  %v1056 = vunpack.c.l.b16 %v86
  %v1057 = vunpack.c.l.b16 %v87
  %v1058 = vunpack.c.l.b16 %v88
  %v1059 = vunpack.c.l.b16 %v89
  %v1060 = vunpack.c.l.b16 %v90
  %v1061 = vunpack.c.l.b16 %v91
  %v1062 = vunpack.c.l.b16 %v92
  %v1063 = vunpack.c.l.b16 %v93
  %v1064 = vunpack.c.l.b16 %v94
  %v1065 = vunpack.c.l.b16 %v95
  %v1066 = vunpack.c.l.b16 %v96
  %v1067 = vunpack.c.l.b16 %v97
  %v1068 = vunpack.c.l.b16 %v98
  %v1069 = vunpack.c.l.b16 %v99
  %v1070 = vunpack.c.l.b16 %v100
  %v1071 = vunpack.c.l.b16 %v101
  %v1072 = vunpack.c.l.b16 %v102
  %v1073 = vpack.c.b16 %v1056, %v1055
  %v1074 = vpack.c.b16 %v1058, %v1057
  %v1075 = vpack.c.b16 %v1060, %v1059
  %v1076 = vpack.c.b16 %v1062, %v1061
  %v1077 = vpack.c.b16 %v1064, %v1063
  %v1078 = vpack.c.b16 %v1066, %v1065
  %v1079 = vpack.c.b16 %v1068, %v1067
  %v1080 = vpack.c.b16 %v1070, %v1069
  %v1081 = vpack.c.b16 %v1072, %v1071
  %vm1091 = vcmask 130048
  %v1093 = vsel %vm1091, %v942, 0
  %v1096 = vsel %vm1091, %v944, 0
  %v1099 = vsel %vm1091, %v946, 0
  %v1102 = vsel %vm1091, %v948, 0
  %v1105 = vsel %vm1091, %v950, 0
  %v1108 = vsel %vm1091, %v952, 0
  %v1111 = vsel %vm1091, %v954, 0
  %v1114 = vsel %vm1091, %v956, 0
  %v1117 = vsel %vm1091, %v958, 0
  %v1120 = vsel %vm1091, %v960, 0
  %v1123 = vsel %vm1091, %v962, 0
  %v1126 = vsel %vm1091, %v964, 0
  %v1129 = vsel %vm1091, %v966, 0
  %v1132 = vsel %vm1091, %v968, 0
  %v1135 = vsel %vm1091, %v970, 0
  %v1138 = vsel %vm1091, %v972, 0
  %v1141 = vsel %vm1091, %v974, 0
  %v1144 = vsel %vm1091, %v976, 0
  %v1147 = vsel %vm1091, %v978, 0
  %v1150 = vsel %vm1091, %v980, 0
  %v1153 = vsel %vm1091, %v982, 0
  %v1156 = vsel %vm1091, %v984, 0
  %v1159 = vsel %vm1091, %v986, 0
  %v1162 = vsel %vm1091, %v988, 0
  %v1165 = vsel %vm1091, %v990, 0
  %v1168 = vsel %vm1091, %v992, 0
  %v1171 = vsel %vm1091, %v994, 0
  %v1174 = vsel %vm1091, %v996, 0
  %v1177 = vsel %vm1091, %v998, 0
  %v1180 = vsel %vm1091, %v1000, 0
  %v1183 = vsel %vm1091, %v1002, 0
  %v1186 = vsel %vm1091, %v1004, 0
  %1188 = vmatprep.subr.bf16.mxu0 0
  %1189 = vmatpush1.bf16.msra.mxu0 %v1073
  %1190 = vmatprep.subr.bf16.mxu0 0
  %1191 = vmatpush1.bf16.msra.mxu0 %v1074
  %1192 = vmatprep.subr.bf16.mxu0 0
  %1193 = vmatpush1.bf16.msra.mxu0 %v1075
  %1194 = vmatprep.subr.bf16.mxu0 0
  %1195 = vmatpush1.bf16.msra.mxu0 %v1076
  %1196 = vmatprep.subr.bf16.mxu0 0
  %1197 = vmatpush1.bf16.msra.mxu0 %v1077
  %1198 = vmatprep.subr.bf16.mxu0 0
  %1199 = vmatpush1.bf16.msra.mxu0 %v1078
  %1200 = vmatprep.subr.bf16.mxu0 0
  %1201 = vmatpush1.bf16.msra.mxu0 %v1079
  %1202 = vmatprep.subr.bf16.mxu0 0
  %1203 = vmatpush1.bf16.msra.mxu0 %v1080
  %1204 = vmatprep.subr.bf16.mxu0 0
  %1205 = vmatpush1.bf16.msra.mxu0 %v1081
  %1206 = vmatprep.subr.bf16.mxu0 0
  %1207 = vmatpush1.bf16.msra.mxu0 0
  %1208 = vmatprep.subr.bf16.mxu0 0
  %1209 = vmatpush1.bf16.msra.mxu0 0
  %1210 = vmatprep.subr.bf16.mxu0 0
  %1211 = vmatpush1.bf16.msra.mxu0 0
  %1212 = vmatprep.subr.bf16.mxu0 0
  %1213 = vmatpush1.bf16.msra.mxu0 0
  %1214 = vmatprep.subr.bf16.mxu0 0
  %1215 = vmatpush1.bf16.msra.mxu0 0
  %1216 = vmatprep.subr.bf16.mxu0 0
  %1217 = vmatpush1.bf16.msra.mxu0 0
  %1218 = vmatprep.subr.bf16.mxu0 0
  %1219 = vmatpush1.bf16.msra.mxu0 0
  %1220 = vmatprep.mubr.bf16.mxu0 %v1093
  %1221 = vmatmul.mubr.bf16.gmra.mrb[0].mxu0 %v941
  %v1222 = vpop.f32.mrb[0].mxu0
  %v1223 = vadd.f32 %v431, %v1222
  %v1224 = vpop.f32.mrb[0].mxu0
  %v1225 = vpop.f32.mrb[0].mxu0
  %v1226 = vadd.f32 %v436, %v1225
  %v1227 = vpop.f32.mrb[0].mxu0
  %1228 = vmatprep.mubr.bf16.mxu0 %v1096
  %1229 = vmatmul.mubr.bf16.gmra.mrb[0].mxu0 %v943
  %v1230 = vpop.f32.mrb[0].mxu0
  %v1231 = vadd.f32 %v441, %v1230
  %v1232 = vpop.f32.mrb[0].mxu0
  %v1233 = vpop.f32.mrb[0].mxu0
  %v1234 = vadd.f32 %v446, %v1233
  %v1235 = vpop.f32.mrb[0].mxu0
  %1236 = vmatprep.mubr.bf16.mxu0 %v1099
  %1237 = vmatmul.mubr.bf16.gmra.mrb[0].mxu0 %v945
  %v1238 = vpop.f32.mrb[0].mxu0
  %v1239 = vadd.f32 %v451, %v1238
  %v1240 = vpop.f32.mrb[0].mxu0
  %v1241 = vpop.f32.mrb[0].mxu0
  %v1242 = vadd.f32 %v456, %v1241
  %v1243 = vpop.f32.mrb[0].mxu0
  %1244 = vmatprep.mubr.bf16.mxu0 %v1102
  %1245 = vmatmul.mubr.bf16.gmra.mrb[0].mxu0 %v947
  %v1246 = vpop.f32.mrb[0].mxu0
  %v1247 = vadd.f32 %v461, %v1246
  %v1248 = vpop.f32.mrb[0].mxu0
  %v1249 = vpop.f32.mrb[0].mxu0
  %v1250 = vadd.f32 %v466, %v1249
  %v1251 = vpop.f32.mrb[0].mxu0
  %1252 = vmatprep.mubr.bf16.mxu0 %v1105
  %1253 = vmatmul.mubr.bf16.gmra.mrb[0].mxu0 %v949
  %v1254 = vpop.f32.mrb[0].mxu0
  %v1255 = vadd.f32 %v471, %v1254
  %v1256 = vpop.f32.mrb[0].mxu0
  %v1257 = vpop.f32.mrb[0].mxu0
  %v1258 = vadd.f32 %v476, %v1257
  %v1259 = vpop.f32.mrb[0].mxu0
  %1260 = vmatprep.mubr.bf16.mxu0 %v1108
  %1261 = vmatmul.mubr.bf16.gmra.mrb[0].mxu0 %v951
  %v1262 = vpop.f32.mrb[0].mxu0
  %v1263 = vadd.f32 %v481, %v1262
  %v1264 = vpop.f32.mrb[0].mxu0
  %v1265 = vpop.f32.mrb[0].mxu0
  %v1266 = vadd.f32 %v486, %v1265
  %v1267 = vpop.f32.mrb[0].mxu0
  %1268 = vmatprep.mubr.bf16.mxu0 %v1111
  %1269 = vmatmul.mubr.bf16.gmra.mrb[0].mxu0 %v953
  %v1270 = vpop.f32.mrb[0].mxu0
  %v1271 = vadd.f32 %v491, %v1270
  %v1272 = vpop.f32.mrb[0].mxu0
  %v1273 = vpop.f32.mrb[0].mxu0
  %v1274 = vadd.f32 %v496, %v1273
  %v1275 = vpop.f32.mrb[0].mxu0
  %1276 = vmatprep.mubr.bf16.mxu0 %v1114
  %1277 = vmatmul.mubr.bf16.gmra.mrb[0].mxu0 %v955
  %v1278 = vpop.f32.mrb[0].mxu0
  %v1279 = vadd.f32 %v501, %v1278
  %v1280 = vpop.f32.mrb[0].mxu0
  %v1281 = vpop.f32.mrb[0].mxu0
  %v1282 = vadd.f32 %v506, %v1281
  %v1283 = vpop.f32.mrb[0].mxu0
  %1284 = vmatprep.mubr.bf16.mxu0 %v1117
  %1285 = vmatmul.mubr.bf16.gmra.mrb[0].mxu0 %v957
  %v1286 = vpop.f32.mrb[0].mxu0
  %v1287 = vadd.f32 %v511, %v1286
  %v1288 = vpop.f32.mrb[0].mxu0
  %v1289 = vpop.f32.mrb[0].mxu0
  %v1290 = vadd.f32 %v516, %v1289
  %v1291 = vpop.f32.mrb[0].mxu0
  %1292 = vmatprep.mubr.bf16.mxu0 %v1120
  %1293 = vmatmul.mubr.bf16.gmra.mrb[0].mxu0 %v959
  %v1294 = vpop.f32.mrb[0].mxu0
  %v1295 = vadd.f32 %v521, %v1294
  %v1296 = vpop.f32.mrb[0].mxu0
  %v1297 = vpop.f32.mrb[0].mxu0
  %v1298 = vadd.f32 %v526, %v1297
  %v1299 = vpop.f32.mrb[0].mxu0
  %1300 = vmatprep.mubr.bf16.mxu0 %v1123
  %1301 = vmatmul.mubr.bf16.gmra.mrb[0].mxu0 %v961
  %v1302 = vpop.f32.mrb[0].mxu0
  %v1303 = vadd.f32 %v531, %v1302
  %v1304 = vpop.f32.mrb[0].mxu0
  %v1305 = vpop.f32.mrb[0].mxu0
  %v1306 = vadd.f32 %v536, %v1305
  %v1307 = vpop.f32.mrb[0].mxu0
  %1308 = vmatprep.mubr.bf16.mxu0 %v1126
  %1309 = vmatmul.mubr.bf16.gmra.mrb[0].mxu0 %v963
  %v1310 = vpop.f32.mrb[0].mxu0
  %v1311 = vadd.f32 %v541, %v1310
  %v1312 = vpop.f32.mrb[0].mxu0
  %v1313 = vpop.f32.mrb[0].mxu0
  %v1314 = vadd.f32 %v546, %v1313
  %v1315 = vpop.f32.mrb[0].mxu0
  %1316 = vmatprep.mubr.bf16.mxu0 %v1129
  %1317 = vmatmul.mubr.bf16.gmra.mrb[0].mxu0 %v965
  %v1318 = vpop.f32.mrb[0].mxu0
  %v1319 = vadd.f32 %v551, %v1318
  %v1320 = vpop.f32.mrb[0].mxu0
  %v1321 = vpop.f32.mrb[0].mxu0
  %v1322 = vadd.f32 %v556, %v1321
  %v1323 = vpop.f32.mrb[0].mxu0
  %1324 = vmatprep.mubr.bf16.mxu0 %v1132
  %1325 = vmatmul.mubr.bf16.gmra.mrb[0].mxu0 %v967
  %v1326 = vpop.f32.mrb[0].mxu0
  %v1327 = vadd.f32 %v561, %v1326
  %v1328 = vpop.f32.mrb[0].mxu0
  %v1329 = vpop.f32.mrb[0].mxu0
  %v1330 = vadd.f32 %v566, %v1329
  %v1331 = vpop.f32.mrb[0].mxu0
  %1332 = vmatprep.mubr.bf16.mxu0 %v1135
  %1333 = vmatmul.mubr.bf16.gmra.mrb[0].mxu0 %v969
  %v1334 = vpop.f32.mrb[0].mxu0
  %v1335 = vadd.f32 %v571, %v1334
  %v1336 = vpop.f32.mrb[0].mxu0
  %v1337 = vpop.f32.mrb[0].mxu0
  %v1338 = vadd.f32 %v576, %v1337
  %v1339 = vpop.f32.mrb[0].mxu0
  %1340 = vmatprep.mubr.bf16.mxu0 %v1138
  %1341 = vmatmul.mubr.bf16.gmra.mrb[0].mxu0 %v971
  %v1342 = vpop.f32.mrb[0].mxu0
  %v1343 = vadd.f32 %v581, %v1342
  %v1344 = vpop.f32.mrb[0].mxu0
  %v1345 = vpop.f32.mrb[0].mxu0
  %v1346 = vadd.f32 %v586, %v1345
  %v1347 = vpop.f32.mrb[0].mxu0
  %1348 = vmatprep.mubr.bf16.mxu0 %v1141
  %1349 = vmatmul.mubr.bf16.gmra.mrb[0].mxu0 %v973
  %v1350 = vpop.f32.mrb[0].mxu0
  %v1351 = vadd.f32 %v591, %v1350
  %v1352 = vpop.f32.mrb[0].mxu0
  %v1353 = vpop.f32.mrb[0].mxu0
  %v1354 = vadd.f32 %v596, %v1353
  %v1355 = vpop.f32.mrb[0].mxu0
  %1356 = vmatprep.mubr.bf16.mxu0 %v1144
  %1357 = vmatmul.mubr.bf16.gmra.mrb[0].mxu0 %v975
  %v1358 = vpop.f32.mrb[0].mxu0
  %v1359 = vadd.f32 %v601, %v1358
  %v1360 = vpop.f32.mrb[0].mxu0
  %v1361 = vpop.f32.mrb[0].mxu0
  %v1362 = vadd.f32 %v606, %v1361
  %v1363 = vpop.f32.mrb[0].mxu0
  %1364 = vmatprep.mubr.bf16.mxu0 %v1147
  %1365 = vmatmul.mubr.bf16.gmra.mrb[0].mxu0 %v977
  %v1366 = vpop.f32.mrb[0].mxu0
  %v1367 = vadd.f32 %v611, %v1366
  %v1368 = vpop.f32.mrb[0].mxu0
  %v1369 = vpop.f32.mrb[0].mxu0
  %v1370 = vadd.f32 %v616, %v1369
  %v1371 = vpop.f32.mrb[0].mxu0
  %1372 = vmatprep.mubr.bf16.mxu0 %v1150
  %1373 = vmatmul.mubr.bf16.gmra.mrb[0].mxu0 %v979
  %v1374 = vpop.f32.mrb[0].mxu0
  %v1375 = vadd.f32 %v621, %v1374
  %v1376 = vpop.f32.mrb[0].mxu0
  %v1377 = vpop.f32.mrb[0].mxu0
  %v1378 = vadd.f32 %v626, %v1377
  %v1379 = vpop.f32.mrb[0].mxu0
  %1380 = vmatprep.mubr.bf16.mxu0 %v1153
  %1381 = vmatmul.mubr.bf16.gmra.mrb[0].mxu0 %v981
  %v1382 = vpop.f32.mrb[0].mxu0
  %v1383 = vadd.f32 %v631, %v1382
  %v1384 = vpop.f32.mrb[0].mxu0
  %v1385 = vpop.f32.mrb[0].mxu0
  %v1386 = vadd.f32 %v636, %v1385
  %v1387 = vpop.f32.mrb[0].mxu0
  %1388 = vmatprep.mubr.bf16.mxu0 %v1156
  %1389 = vmatmul.mubr.bf16.gmra.mrb[0].mxu0 %v983
  %v1390 = vpop.f32.mrb[0].mxu0
  %v1391 = vadd.f32 %v641, %v1390
  %v1392 = vpop.f32.mrb[0].mxu0
  %v1393 = vpop.f32.mrb[0].mxu0
  %v1394 = vadd.f32 %v646, %v1393
  %v1395 = vpop.f32.mrb[0].mxu0
  %1396 = vmatprep.mubr.bf16.mxu0 %v1159
  %1397 = vmatmul.mubr.bf16.gmra.mrb[0].mxu0 %v985
  %v1398 = vpop.f32.mrb[0].mxu0
  %v1399 = vadd.f32 %v651, %v1398
  %v1400 = vpop.f32.mrb[0].mxu0
  %v1401 = vpop.f32.mrb[0].mxu0
  %v1402 = vadd.f32 %v656, %v1401
  %v1403 = vpop.f32.mrb[0].mxu0
  %1404 = vmatprep.mubr.bf16.mxu0 %v1162
  %1405 = vmatmul.mubr.bf16.gmra.mrb[0].mxu0 %v987
  %v1406 = vpop.f32.mrb[0].mxu0
  %v1407 = vadd.f32 %v661, %v1406
  %v1408 = vpop.f32.mrb[0].mxu0
  %v1409 = vpop.f32.mrb[0].mxu0
  %v1410 = vadd.f32 %v666, %v1409
  %v1411 = vpop.f32.mrb[0].mxu0
  %1412 = vmatprep.mubr.bf16.mxu0 %v1165
  %1413 = vmatmul.mubr.bf16.gmra.mrb[0].mxu0 %v989
  %v1414 = vpop.f32.mrb[0].mxu0
  %v1415 = vadd.f32 %v671, %v1414
  %v1416 = vpop.f32.mrb[0].mxu0
  %v1417 = vpop.f32.mrb[0].mxu0
  %v1418 = vadd.f32 %v676, %v1417
  %v1419 = vpop.f32.mrb[0].mxu0
  %1420 = vmatprep.mubr.bf16.mxu0 %v1168
  %1421 = vmatmul.mubr.bf16.gmra.mrb[0].mxu0 %v991
  %v1422 = vpop.f32.mrb[0].mxu0
  %v1423 = vadd.f32 %v681, %v1422
  %v1424 = vpop.f32.mrb[0].mxu0
  %v1425 = vpop.f32.mrb[0].mxu0
  %v1426 = vadd.f32 %v686, %v1425
  %v1427 = vpop.f32.mrb[0].mxu0
  %1428 = vmatprep.mubr.bf16.mxu0 %v1171
  %1429 = vmatmul.mubr.bf16.gmra.mrb[0].mxu0 %v993
  %v1430 = vpop.f32.mrb[0].mxu0
  %v1431 = vadd.f32 %v691, %v1430
  %v1432 = vpop.f32.mrb[0].mxu0
  %v1433 = vpop.f32.mrb[0].mxu0
  %v1434 = vadd.f32 %v696, %v1433
  %v1435 = vpop.f32.mrb[0].mxu0
  %1436 = vmatprep.mubr.bf16.mxu0 %v1174
  %1437 = vmatmul.mubr.bf16.gmra.mrb[0].mxu0 %v995
  %v1438 = vpop.f32.mrb[0].mxu0
  %v1439 = vadd.f32 %v701, %v1438
  %v1440 = vpop.f32.mrb[0].mxu0
  %v1441 = vpop.f32.mrb[0].mxu0
  %v1442 = vadd.f32 %v706, %v1441
  %v1443 = vpop.f32.mrb[0].mxu0
  %1444 = vmatprep.mubr.bf16.mxu0 %v1177
  %1445 = vmatmul.mubr.bf16.gmra.mrb[0].mxu0 %v997
  %v1446 = vpop.f32.mrb[0].mxu0
  %v1447 = vadd.f32 %v711, %v1446
  %v1448 = vpop.f32.mrb[0].mxu0
  %v1449 = vpop.f32.mrb[0].mxu0
  %v1450 = vadd.f32 %v716, %v1449
  %v1451 = vpop.f32.mrb[0].mxu0
  %1452 = vmatprep.mubr.bf16.mxu0 %v1180
  %1453 = vmatmul.mubr.bf16.gmra.mrb[0].mxu0 %v999
  %v1454 = vpop.f32.mrb[0].mxu0
  %v1455 = vadd.f32 %v721, %v1454
  %v1456 = vpop.f32.mrb[0].mxu0
  %v1457 = vpop.f32.mrb[0].mxu0
  %v1458 = vadd.f32 %v726, %v1457
  %v1459 = vpop.f32.mrb[0].mxu0
  %1460 = vmatprep.mubr.bf16.mxu0 %v1183
  %1461 = vmatmul.mubr.bf16.gmra.mrb[0].mxu0 %v1001
  %v1462 = vpop.f32.mrb[0].mxu0
  %v1463 = vadd.f32 %v731, %v1462
  %v1464 = vpop.f32.mrb[0].mxu0
  %v1465 = vpop.f32.mrb[0].mxu0
  %v1466 = vadd.f32 %v736, %v1465
  %v1467 = vpop.f32.mrb[0].mxu0
  %1468 = vmatprep.mubr.bf16.mxu0 %v1186
  %1469 = vmatmul.mubr.bf16.gmra.mrb[0].mxu0 %v1003
  %v1470 = vpop.f32.mrb[0].mxu0
  %v1471 = vadd.f32 %v741, %v1470
  %v1472 = vpop.f32.mrb[0].mxu0
  %v1473 = vpop.f32.mrb[0].mxu0
  %v1474 = vadd.f32 %v746, %v1473
  %v1475 = vpop.f32.mrb[0].mxu0
  %1476 = vdwg.mxu0
  %v1477 = vld [vmem:[%s4] sm:$0x1]
  %v1479 = vlaneseq
  %v1480 = vshrl.u32 %v1479, 7
  %v1481 = vsub.s32 0, %v1480
  %v1482 = vrot.slane %v1477, %v1481
  %v1484 = vadd.f32 %v1223, %v1482
  %v1485 = vadd.f32 %v1226, %v1482
  %v1486 = vadd.f32 %v1231, %v1482
  %v1487 = vadd.f32 %v1234, %v1482
  %v1488 = vadd.f32 %v1239, %v1482
  %v1489 = vadd.f32 %v1242, %v1482
  %v1490 = vadd.f32 %v1247, %v1482
  %v1491 = vadd.f32 %v1250, %v1482
  %v1492 = vadd.f32 %v1255, %v1482
  %v1493 = vadd.f32 %v1258, %v1482
  %v1494 = vadd.f32 %v1263, %v1482
  %v1495 = vadd.f32 %v1266, %v1482
  %v1496 = vadd.f32 %v1271, %v1482
  %v1497 = vadd.f32 %v1274, %v1482
  %v1498 = vadd.f32 %v1279, %v1482
  %v1499 = vadd.f32 %v1282, %v1482
  %v1500 = vadd.f32 %v1287, %v1482
  %v1501 = vadd.f32 %v1290, %v1482
  %v1502 = vadd.f32 %v1295, %v1482
  %v1503 = vadd.f32 %v1298, %v1482
  %v1504 = vadd.f32 %v1303, %v1482
  %v1505 = vadd.f32 %v1306, %v1482
  %v1506 = vadd.f32 %v1311, %v1482
  %v1507 = vadd.f32 %v1314, %v1482
  %v1508 = vadd.f32 %v1319, %v1482
  %v1509 = vadd.f32 %v1322, %v1482
  %v1510 = vadd.f32 %v1327, %v1482
  %v1511 = vadd.f32 %v1330, %v1482
  %v1512 = vadd.f32 %v1335, %v1482
  %v1513 = vadd.f32 %v1338, %v1482
  %v1514 = vadd.f32 %v1343, %v1482
  %v1515 = vadd.f32 %v1346, %v1482
  %v1516 = vadd.f32 %v1351, %v1482
  %v1517 = vadd.f32 %v1354, %v1482
  %v1518 = vadd.f32 %v1359, %v1482
  %v1519 = vadd.f32 %v1362, %v1482
  %v1520 = vadd.f32 %v1367, %v1482
  %v1521 = vadd.f32 %v1370, %v1482
  %v1522 = vadd.f32 %v1375, %v1482
  %v1523 = vadd.f32 %v1378, %v1482
  %v1524 = vadd.f32 %v1383, %v1482
  %v1525 = vadd.f32 %v1386, %v1482
  %v1526 = vadd.f32 %v1391, %v1482
  %v1527 = vadd.f32 %v1394, %v1482
  %v1528 = vadd.f32 %v1399, %v1482
  %v1529 = vadd.f32 %v1402, %v1482
  %v1530 = vadd.f32 %v1407, %v1482
  %v1531 = vadd.f32 %v1410, %v1482
  %v1532 = vadd.f32 %v1415, %v1482
  %v1533 = vadd.f32 %v1418, %v1482
  %v1534 = vadd.f32 %v1423, %v1482
  %v1535 = vadd.f32 %v1426, %v1482
  %v1536 = vadd.f32 %v1431, %v1482
  %v1537 = vadd.f32 %v1434, %v1482
  %v1538 = vadd.f32 %v1439, %v1482
  %v1539 = vadd.f32 %v1442, %v1482
  %v1540 = vadd.f32 %v1447, %v1482
  %v1541 = vadd.f32 %v1450, %v1482
  %v1542 = vadd.f32 %v1455, %v1482
  %v1543 = vadd.f32 %v1458, %v1482
  %v1544 = vadd.f32 %v1463, %v1482
  %v1545 = vadd.f32 %v1466, %v1482
  %v1546 = vadd.f32 %v1471, %v1482
  %v1547 = vadd.f32 %v1474, %v1482
  %1548 = vst [vmem:[%s5] sm:$0xff] %v1484
  %1549 = vst [vmem:[%s5 + $0x8] sm:$0xff] %v1485
  %1550 = vst [vmem:[%s5 + $0x10] sm:$0xff] %v1486
  %1551 = vst [vmem:[%s5 + $0x18] sm:$0xff] %v1487
  %1552 = vst [vmem:[%s5 + $0x20] sm:$0xff] %v1488
  %1553 = vst [vmem:[%s5 + $0x28] sm:$0xff] %v1489
  %1554 = vst [vmem:[%s5 + $0x30] sm:$0xff] %v1490
  %1555 = vst [vmem:[%s5 + $0x38] sm:$0xff] %v1491
  %1556 = vst [vmem:[%s5 + $0x40] sm:$0xff] %v1492
  %1557 = vst [vmem:[%s5 + $0x48] sm:$0xff] %v1493
  %1558 = vst [vmem:[%s5 + $0x50] sm:$0xff] %v1494
  %1559 = vst [vmem:[%s5 + $0x58] sm:$0xff] %v1495
  %1560 = vst [vmem:[%s5 + $0x60] sm:$0xff] %v1496
  %1561 = vst [vmem:[%s5 + $0x68] sm:$0xff] %v1497
  %1562 = vst [vmem:[%s5 + $0x70] sm:$0xff] %v1498
  %1563 = vst [vmem:[%s5 + $0x78] sm:$0xff] %v1499
  %1564 = vst [vmem:[%s5 + $0x80] sm:$0xff] %v1500
  %1565 = vst [vmem:[%s5 + $0x88] sm:$0xff] %v1501
  %1566 = vst [vmem:[%s5 + $0x90] sm:$0xff] %v1502
  %1567 = vst [vmem:[%s5 + $0x98] sm:$0xff] %v1503
  %1568 = vst [vmem:[%s5 + $0xa0] sm:$0xff] %v1504
  %1569 = vst [vmem:[%s5 + $0xa8] sm:$0xff] %v1505
  %1570 = vst [vmem:[%s5 + $0xb0] sm:$0xff] %v1506
  %1571 = vst [vmem:[%s5 + $0xb8] sm:$0xff] %v1507
  %1572 = vst [vmem:[%s5 + $0xc0] sm:$0xff] %v1508
  %1573 = vst [vmem:[%s5 + $0xc8] sm:$0xff] %v1509
  %1574 = vst [vmem:[%s5 + $0xd0] sm:$0xff] %v1510
  %1575 = vst [vmem:[%s5 + $0xd8] sm:$0xff] %v1511
  %1576 = vst [vmem:[%s5 + $0xe0] sm:$0xff] %v1512
  %1577 = vst [vmem:[%s5 + $0xe8] sm:$0xff] %v1513
  %1578 = vst [vmem:[%s5 + $0xf0] sm:$0xff] %v1514
  %1579 = vst [vmem:[%s5 + $0xf8] sm:$0xff] %v1515
  %1580 = vst [vmem:[%s5 + $0x100] sm:$0xff] %v1516
  %1581 = vst [vmem:[%s5 + $0x108] sm:$0xff] %v1517
  %1582 = vst [vmem:[%s5 + $0x110] sm:$0xff] %v1518
  %1583 = vst [vmem:[%s5 + $0x118] sm:$0xff] %v1519
  %1584 = vst [vmem:[%s5 + $0x120] sm:$0xff] %v1520
  %1585 = vst [vmem:[%s5 + $0x128] sm:$0xff] %v1521
  %1586 = vst [vmem:[%s5 + $0x130] sm:$0xff] %v1522
  %1587 = vst [vmem:[%s5 + $0x138] sm:$0xff] %v1523
  %1588 = vst [vmem:[%s5 + $0x140] sm:$0xff] %v1524
  %1589 = vst [vmem:[%s5 + $0x148] sm:$0xff] %v1525
  %1590 = vst [vmem:[%s5 + $0x150] sm:$0xff] %v1526
  %1591 = vst [vmem:[%s5 + $0x158] sm:$0xff] %v1527
  %1592 = vst [vmem:[%s5 + $0x160] sm:$0xff] %v1528
  %1593 = vst [vmem:[%s5 + $0x168] sm:$0xff] %v1529
  %1594 = vst [vmem:[%s5 + $0x170] sm:$0xff] %v1530
  %1595 = vst [vmem:[%s5 + $0x178] sm:$0xff] %v1531
  %1596 = vst [vmem:[%s5 + $0x180] sm:$0xff] %v1532
  %1597 = vst [vmem:[%s5 + $0x188] sm:$0xff] %v1533
  %1598 = vst [vmem:[%s5 + $0x190] sm:$0xff] %v1534
  %1599 = vst [vmem:[%s5 + $0x198] sm:$0xff] %v1535
  %1600 = vst [vmem:[%s5 + $0x1a0] sm:$0xff] %v1536
  %1601 = vst [vmem:[%s5 + $0x1a8] sm:$0xff] %v1537
  %1602 = vst [vmem:[%s5 + $0x1b0] sm:$0xff] %v1538
  %1603 = vst [vmem:[%s5 + $0x1b8] sm:$0xff] %v1539
  %1604 = vst [vmem:[%s5 + $0x1c0] sm:$0xff] %v1540
  %1605 = vst [vmem:[%s5 + $0x1c8] sm:$0xff] %v1541
  %1606 = vst [vmem:[%s5 + $0x1d0] sm:$0xff] %v1542
  %1607 = vst [vmem:[%s5 + $0x1d8] sm:$0xff] %v1543
  %1608 = vst [vmem:[%s5 + $0x1e0] sm:$0xff] %v1544
  %1609 = vst [vmem:[%s5 + $0x1e8] sm:$0xff] %v1545
  %1610 = vst [vmem:[%s5 + $0x1f0] sm:$0xff] %v1546
  %1611 = vst [vmem:[%s5 + $0x1f8] sm:$0xff] %v1547
  // Predicated region
  $region22: #{closed_call.51} parent=0 // pred_check
    _
  $region23: #{closed_call.51} parent=0 // pred_check_branch
    %1613 = sbr.rel (0) target = $region25
  $region24: #{closed_call.51} parent=0 // pred_region
    _
  $region25: #{closed_call.51} parent=0 // pred_fallthru
    _
  // Predicated region
  $region26: #{closed_call.51} parent=0 // pred_check
    _
  $region27: #{closed_call.51} parent=0 // pred_check_branch
    %1615 = sbr.rel (0) target = $region29
  $region28: #{closed_call.51} parent=0 // pred_region
    _
  $region29: #{closed_call.51} parent=0 // pred_fallthru
    _

// kernel: forward.6
$region0: #{forward.6}
  #allocation0 [shape = 'u32[]', space=smem, size = 0x4, offset = 0x4, fixed_abs, tag = 'smem constant byte address 0x4 - core index']
  #allocation1 [shape = 'u32[144,128]{1,0:T(1,128)}', space=vmem, size = 0x12000, scoped, tag = 'internal scratch']
  %s0 = inlined_call_operand.vmem [shape: bf16[128,144], index: 0, kind: input, shape index: {}]
  %s1 = inlined_call_operand.vmem [shape: bf16[144,128], index: 1, kind: input, shape index: {}]
  %s2 = inlined_call_operand.vmem [shape: f32[1,128], index: 2, kind: input, shape index: {}]
  %s3 = inlined_call_operand.vmem [shape: f32[128,128], index: 3, kind: output, shape index: {}]
  %s4 = sld [smem:[#allocation0]]
  $region22: #{forward.6} parent=0
    _
  %s6 = ssub.s32 1, %s4
  %s7 = scalar_select 0, %s6, %s4
  // Predicated region
  $region2: #{forward.6} parent=0 // pred_check
    _
  $region3: #{forward.6} parent=0 // pred_check_branch
    %9 = sbr.rel (0) target = $region5
  $region4: #{forward.6} parent=0 // pred_region
    _
  $region5: #{forward.6} parent=0 // pred_fallthru
    _
  // Predicated region
  $region6: #{forward.6} parent=0 // pred_check
    _
  $region7: #{forward.6} parent=0 // pred_check_branch
    %11 = sbr.rel (0) target = $region9
  $region8: #{forward.6} parent=0 // pred_region
    _
  $region9: #{forward.6} parent=0 // pred_fallthru
    _
  // Predicated region
  $region10: #{forward.6} parent=0 // pred_check
    _
  $region11: #{forward.6} parent=0 // pred_check_branch
    %13 = sbr.rel (0) target = $region13
  $region12: #{forward.6} parent=0 // pred_region
    _
  $region13: #{forward.6} parent=0 // pred_fallthru
    _
  %v15 = vld [vmem:[%s0] sm:$0xff]
  %v16 = vld [vmem:[%s0 + $0x8] sm:$0xff]
  %v17 = vld [vmem:[%s0 + $0x10] sm:$0xff]
  %v18 = vld [vmem:[%s0 + $0x18] sm:$0xff]
  %v19 = vld [vmem:[%s0 + $0x20] sm:$0xff]
  %v20 = vld [vmem:[%s0 + $0x28] sm:$0xff]
  %v21 = vld [vmem:[%s0 + $0x30] sm:$0xff]
  %v22 = vld [vmem:[%s0 + $0x38] sm:$0xff]
  %v23 = vld [vmem:[%s0 + $0x40] sm:$0xff]
  %v24 = vld [vmem:[%s0 + $0x48] sm:$0xff]
  %v25 = vld [vmem:[%s0 + $0x50] sm:$0xff]
  %v26 = vld [vmem:[%s0 + $0x58] sm:$0xff]
  %v27 = vld [vmem:[%s0 + $0x60] sm:$0xff]
  %v28 = vld [vmem:[%s0 + $0x68] sm:$0xff]
  %v29 = vld [vmem:[%s0 + $0x70] sm:$0xff]
  %v30 = vld [vmem:[%s0 + $0x78] sm:$0xff]
  %v31 = vmax.bf16 %v15, 0
  %v32 = vmax.bf16 %v16, 0
  %v33 = vmax.bf16 %v17, 0
  %v34 = vmax.bf16 %v18, 0
  %v35 = vmax.bf16 %v19, 0
  %v36 = vmax.bf16 %v20, 0
  %v37 = vmax.bf16 %v21, 0
  %v38 = vmax.bf16 %v22, 0
  %v39 = vmax.bf16 %v23, 0
  %v40 = vmax.bf16 %v24, 0
  %v41 = vmax.bf16 %v25, 0
  %v42 = vmax.bf16 %v26, 0
  %v43 = vmax.bf16 %v27, 0
  %v44 = vmax.bf16 %v28, 0
  %v45 = vmax.bf16 %v29, 0
  %v46 = vmax.bf16 %v30, 0
  %v47 = vld [vmem:[%s1] sm:$0xf]
  %v48 = vld [vmem:[%s1 + $0x4] sm:$0xf]
  %v49 = vld [vmem:[%s1 + $0x8] sm:$0xf]
  %v50 = vld [vmem:[%s1 + $0xc] sm:$0xf]
  %v51 = vld [vmem:[%s1 + $0x10] sm:$0xf]
  %v52 = vld [vmem:[%s1 + $0x14] sm:$0xf]
  %v53 = vld [vmem:[%s1 + $0x18] sm:$0xf]
  %v54 = vld [vmem:[%s1 + $0x1c] sm:$0xf]
  %v55 = vld [vmem:[%s1 + $0x20] sm:$0xf]
  %v56 = vld [vmem:[%s1 + $0x24] sm:$0xf]
  %v57 = vld [vmem:[%s1 + $0x28] sm:$0xf]
  %v58 = vld [vmem:[%s1 + $0x2c] sm:$0xf]
  %v59 = vld [vmem:[%s1 + $0x30] sm:$0xf]
  %v60 = vld [vmem:[%s1 + $0x34] sm:$0xf]
  %v61 = vld [vmem:[%s1 + $0x38] sm:$0xf]
  %v62 = vld [vmem:[%s1 + $0x3c] sm:$0xf]
  %v63 = vld [vmem:[%s1 + $0x40] sm:$0xf]
  %v64 = vld [vmem:[%s1 + $0x44] sm:$0xf]
  %v65 = vld [vmem:[%s2] sm:$0x1]
  %v67 = vlaneseq
  %v68 = vshrl.u32 %v67, 7
  %v69 = vsub.s32 0, %v68
  %v70 = vrot.slane %v65, %v69
  %v88 = vunpack.c.l.b16 %v31
  %v89 = vunpack.c.h.b16 %v31
  %v90 = vunpack.c.l.b16 %v32
  %v91 = vunpack.c.h.b16 %v32
  %v92 = vunpack.c.l.b16 %v33
  %v93 = vunpack.c.h.b16 %v33
  %v94 = vunpack.c.l.b16 %v34
  %v95 = vunpack.c.h.b16 %v34
  %v96 = vunpack.c.l.b16 %v35
  %v97 = vunpack.c.h.b16 %v35
  %v98 = vunpack.c.l.b16 %v36
  %v99 = vunpack.c.h.b16 %v36
  %v100 = vunpack.c.l.b16 %v37
  %v101 = vunpack.c.h.b16 %v37
  %v102 = vunpack.c.l.b16 %v38
  %v103 = vunpack.c.h.b16 %v38
  %v104 = vunpack.c.l.b16 %v39
  %v105 = vunpack.c.h.b16 %v39
  %v106 = vunpack.c.l.b16 %v40
  %v107 = vunpack.c.h.b16 %v40
  %v108 = vunpack.c.l.b16 %v41
  %v109 = vunpack.c.h.b16 %v41
  %v110 = vunpack.c.l.b16 %v42
  %v111 = vunpack.c.h.b16 %v42
  %v112 = vunpack.c.l.b16 %v43
  %v113 = vunpack.c.h.b16 %v43
  %v114 = vunpack.c.l.b16 %v44
  %v115 = vunpack.c.h.b16 %v44
  %v116 = vunpack.c.l.b16 %v45
  %v117 = vunpack.c.h.b16 %v45
  %v118 = vunpack.c.l.b16 %v46
  %v119 = vunpack.c.h.b16 %v46
  %v120 = vpack.c.b16 %v90, %v88
  %v121 = vpack.c.b16 %v91, %v89
  %v122 = vpack.c.b16 %v94, %v92
  %v123 = vpack.c.b16 %v95, %v93
  %v124 = vpack.c.b16 %v98, %v96
  %v125 = vpack.c.b16 %v99, %v97
  %v126 = vpack.c.b16 %v102, %v100
  %v127 = vpack.c.b16 %v103, %v101
  %v128 = vpack.c.b16 %v106, %v104
  %v129 = vpack.c.b16 %v107, %v105
  %v130 = vpack.c.b16 %v110, %v108
  %v131 = vpack.c.b16 %v111, %v109
  %v132 = vpack.c.b16 %v114, %v112
  %v133 = vpack.c.b16 %v115, %v113
  %v134 = vpack.c.b16 %v118, %v116
  %v135 = vpack.c.b16 %v119, %v117
  %v162 = vunpack.c.l.b16 %v47
  %v163 = vunpack.c.l.b16 %v48
  %v164 = vunpack.c.l.b16 %v49
  %v165 = vunpack.c.l.b16 %v50
  %v166 = vunpack.c.l.b16 %v51
  %v167 = vunpack.c.l.b16 %v52
  %v168 = vunpack.c.l.b16 %v53
  %v169 = vunpack.c.l.b16 %v54
  %v170 = vunpack.c.l.b16 %v55
  %v171 = vunpack.c.l.b16 %v56
  %v172 = vunpack.c.l.b16 %v57
  %v173 = vunpack.c.l.b16 %v58
  %v174 = vunpack.c.l.b16 %v59
  %v175 = vunpack.c.l.b16 %v60
  %v176 = vunpack.c.l.b16 %v61
  %v177 = vunpack.c.l.b16 %v62
  %v178 = vunpack.c.l.b16 %v63
  %v179 = vunpack.c.l.b16 %v64
  %v180 = vpack.c.b16 %v163, %v162
  %v181 = vpack.c.b16 %v165, %v164
  %v182 = vpack.c.b16 %v167, %v166
  %v183 = vpack.c.b16 %v169, %v168
  %v184 = vpack.c.b16 %v171, %v170
  %v185 = vpack.c.b16 %v173, %v172
  %v186 = vpack.c.b16 %v175, %v174
  %v187 = vpack.c.b16 %v177, %v176
  %v188 = vpack.c.b16 %v179, %v178
  %vm198 = vcmask 130048
  %v200 = vsel %vm198, %v121, 0
  %v203 = vsel %vm198, %v123, 0
  %v206 = vsel %vm198, %v125, 0
  %v209 = vsel %vm198, %v127, 0
  %v212 = vsel %vm198, %v129, 0
  %v215 = vsel %vm198, %v131, 0
  %v218 = vsel %vm198, %v133, 0
  %v221 = vsel %vm198, %v135, 0
  %223 = vmatprep.subr.bf16.mxu0 0
  %224 = vmatpush1.bf16.msra.mxu0 %v180
  %225 = vmatprep.subr.bf16.mxu0 0
  %226 = vmatpush1.bf16.msra.mxu0 %v181
  %227 = vmatprep.subr.bf16.mxu0 0
  %228 = vmatpush1.bf16.msra.mxu0 %v182
  %229 = vmatprep.subr.bf16.mxu0 0
  %230 = vmatpush1.bf16.msra.mxu0 %v183
  %231 = vmatprep.subr.bf16.mxu0 0
  %232 = vmatpush1.bf16.msra.mxu0 %v184
  %233 = vmatprep.subr.bf16.mxu0 0
  %234 = vmatpush1.bf16.msra.mxu0 %v185
  %235 = vmatprep.subr.bf16.mxu0 0
  %236 = vmatpush1.bf16.msra.mxu0 %v186
  %237 = vmatprep.subr.bf16.mxu0 0
  %238 = vmatpush1.bf16.msra.mxu0 %v187
  %239 = vmatprep.subr.bf16.mxu0 0
  %240 = vmatpush1.bf16.msra.mxu0 %v188
  %241 = vmatprep.subr.bf16.mxu0 0
  %242 = vmatpush1.bf16.msra.mxu0 0
  %243 = vmatprep.subr.bf16.mxu0 0
  %244 = vmatpush1.bf16.msra.mxu0 0
  %245 = vmatprep.subr.bf16.mxu0 0
  %246 = vmatpush1.bf16.msra.mxu0 0
  %247 = vmatprep.subr.bf16.mxu0 0
  %248 = vmatpush1.bf16.msra.mxu0 0
  %249 = vmatprep.subr.bf16.mxu0 0
  %250 = vmatpush1.bf16.msra.mxu0 0
  %251 = vmatprep.subr.bf16.mxu0 0
  %252 = vmatpush1.bf16.msra.mxu0 0
  %253 = vmatprep.subr.bf16.mxu0 0
  %254 = vmatpush1.bf16.msra.mxu0 0
  %255 = vmatprep.mubr.bf16.mxu0 %v200
  %256 = vmatmul.mubr.bf16.gmra.mrb[0].mxu0 %v120
  %v257 = vpop.f32.mrb[0].mxu0
  %v258 = vadd.f32 %v70, %v257
  %v259 = vpop.f32.mrb[0].mxu0
  %v260 = vpop.f32.mrb[0].mxu0
  %v261 = vadd.f32 %v70, %v260
  %v262 = vpop.f32.mrb[0].mxu0
  %263 = vmatprep.mubr.bf16.mxu0 %v203
  %264 = vmatmul.mubr.bf16.gmra.mrb[0].mxu0 %v122
  %v265 = vpop.f32.mrb[0].mxu0
  %v266 = vadd.f32 %v70, %v265
  %v267 = vpop.f32.mrb[0].mxu0
  %v268 = vpop.f32.mrb[0].mxu0
  %v269 = vadd.f32 %v70, %v268
  %v270 = vpop.f32.mrb[0].mxu0
  %271 = vmatprep.mubr.bf16.mxu0 %v206
  %272 = vmatmul.mubr.bf16.gmra.mrb[0].mxu0 %v124
  %v273 = vpop.f32.mrb[0].mxu0
  %v274 = vadd.f32 %v70, %v273
  %v275 = vpop.f32.mrb[0].mxu0
  %v276 = vpop.f32.mrb[0].mxu0
  %v277 = vadd.f32 %v70, %v276
  %v278 = vpop.f32.mrb[0].mxu0
  %279 = vmatprep.mubr.bf16.mxu0 %v209
  %280 = vmatmul.mubr.bf16.gmra.mrb[0].mxu0 %v126
  %v281 = vpop.f32.mrb[0].mxu0
  %v282 = vadd.f32 %v70, %v281
  %v283 = vpop.f32.mrb[0].mxu0
  %v284 = vpop.f32.mrb[0].mxu0
  %v285 = vadd.f32 %v70, %v284
  %v286 = vpop.f32.mrb[0].mxu0
  %287 = vmatprep.mubr.bf16.mxu0 %v212
  %288 = vmatmul.mubr.bf16.gmra.mrb[0].mxu0 %v128
  %v289 = vpop.f32.mrb[0].mxu0
  %v290 = vadd.f32 %v70, %v289
  %v291 = vpop.f32.mrb[0].mxu0
  %v292 = vpop.f32.mrb[0].mxu0
  %v293 = vadd.f32 %v70, %v292
  %v294 = vpop.f32.mrb[0].mxu0
  %295 = vmatprep.mubr.bf16.mxu0 %v215
  %296 = vmatmul.mubr.bf16.gmra.mrb[0].mxu0 %v130
  %v297 = vpop.f32.mrb[0].mxu0
  %v298 = vadd.f32 %v70, %v297
  %v299 = vpop.f32.mrb[0].mxu0
  %v300 = vpop.f32.mrb[0].mxu0
  %v301 = vadd.f32 %v70, %v300
  %v302 = vpop.f32.mrb[0].mxu0
  %303 = vmatprep.mubr.bf16.mxu0 %v218
  %304 = vmatmul.mubr.bf16.gmra.mrb[0].mxu0 %v132
  %v305 = vpop.f32.mrb[0].mxu0
  %v306 = vadd.f32 %v70, %v305
  %v307 = vpop.f32.mrb[0].mxu0
  %v308 = vpop.f32.mrb[0].mxu0
  %v309 = vadd.f32 %v70, %v308
  %v310 = vpop.f32.mrb[0].mxu0
  %311 = vmatprep.mubr.bf16.mxu0 %v221
  %312 = vmatmul.mubr.bf16.gmra.mrb[0].mxu0 %v134
  %v313 = vpop.f32.mrb[0].mxu0
  %v314 = vadd.f32 %v70, %v313
  %v315 = vpop.f32.mrb[0].mxu0
  %v316 = vpop.f32.mrb[0].mxu0
  %v317 = vadd.f32 %v70, %v316
  %v318 = vpop.f32.mrb[0].mxu0
  %319 = vdwg.mxu0
  %320 = vst [vmem:[%s3] sm:$0xff] %v258
  %321 = vst [vmem:[%s3 + $0x8] sm:$0xff] %v261
  %322 = vst [vmem:[%s3 + $0x10] sm:$0xff] %v266
  %323 = vst [vmem:[%s3 + $0x18] sm:$0xff] %v269
  %324 = vst [vmem:[%s3 + $0x20] sm:$0xff] %v274
  %325 = vst [vmem:[%s3 + $0x28] sm:$0xff] %v277
  %326 = vst [vmem:[%s3 + $0x30] sm:$0xff] %v282
  %327 = vst [vmem:[%s3 + $0x38] sm:$0xff] %v285
  %328 = vst [vmem:[%s3 + $0x40] sm:$0xff] %v290
  %329 = vst [vmem:[%s3 + $0x48] sm:$0xff] %v293
  %330 = vst [vmem:[%s3 + $0x50] sm:$0xff] %v298
  %331 = vst [vmem:[%s3 + $0x58] sm:$0xff] %v301
  %332 = vst [vmem:[%s3 + $0x60] sm:$0xff] %v306
  %333 = vst [vmem:[%s3 + $0x68] sm:$0xff] %v309
  %334 = vst [vmem:[%s3 + $0x70] sm:$0xff] %v314
  %335 = vst [vmem:[%s3 + $0x78] sm:$0xff] %v317
  // Predicated region
  $region14: #{forward.6} parent=0 // pred_check
    _
  $region15: #{forward.6} parent=0 // pred_check_branch
    %337 = sbr.rel (0) target = $region17
  $region16: #{forward.6} parent=0 // pred_region
    _
  $region17: #{forward.6} parent=0 // pred_fallthru
    _
  // Predicated region
  $region18: #{forward.6} parent=0 // pred_check
    _
  $region19: #{forward.6} parent=0 // pred_check_branch
    %339 = sbr.rel (0) target = $region21
  $region20: #{forward.6} parent=0 // pred_region
    _
  $region21: #{forward.6} parent=0 // pred_fallthru
    _

// kernel: forward.7
$region0: #{forward.7}
  #allocation0 [shape = 'u32[]', space=smem, size = 0x4, offset = 0x4, fixed_abs, tag = 'smem constant byte address 0x4 - core index']
  #allocation1 [shape = 'u32[144,128]{1,0:T(1,128)}', space=vmem, size = 0x12000, scoped, tag = 'internal scratch']
  %s0 = inlined_call_operand.vmem [shape: bf16[128,288], index: 0, kind: input, shape index: {}]
  %s1 = inlined_call_operand.vmem [shape: bf16[288,128], index: 1, kind: input, shape index: {}]
  %s2 = inlined_call_operand.vmem [shape: f32[1,128], index: 2, kind: input, shape index: {}]
  %s3 = inlined_call_operand.vmem [shape: f32[128,128], index: 3, kind: output, shape index: {}]
  %s4 = sld [smem:[#allocation0]]
  $region22: #{forward.7} parent=0
    _
  %s6 = ssub.s32 1, %s4
  %s7 = scalar_select 0, %s6, %s4
  // Predicated region
  $region2: #{forward.7} parent=0 // pred_check
    _
  $region3: #{forward.7} parent=0 // pred_check_branch
    %9 = sbr.rel (0) target = $region5
  $region4: #{forward.7} parent=0 // pred_region
    _
  $region5: #{forward.7} parent=0 // pred_fallthru
    _
  // Predicated region
  $region6: #{forward.7} parent=0 // pred_check
    _
  $region7: #{forward.7} parent=0 // pred_check_branch
    %11 = sbr.rel (0) target = $region9
  $region8: #{forward.7} parent=0 // pred_region
    _
  $region9: #{forward.7} parent=0 // pred_fallthru
    _
  // Predicated region
  $region10: #{forward.7} parent=0 // pred_check
    _
  $region11: #{forward.7} parent=0 // pred_check_branch
    %13 = sbr.rel (0) target = $region13
  $region12: #{forward.7} parent=0 // pred_region
    _
  $region13: #{forward.7} parent=0 // pred_fallthru
    _
  %v15 = vld [vmem:[%s0] sm:$0xff]
  %v16 = vld [vmem:[%s0 + $0x8] sm:$0xf]
  %v17 = vld [vmem:[%s0 + $0xc] sm:$0xff]
  %v18 = vld [vmem:[%s0 + $0x14] sm:$0xf]
  %v19 = vld [vmem:[%s0 + $0x18] sm:$0xff]
  %v20 = vld [vmem:[%s0 + $0x20] sm:$0xf]
  %v21 = vld [vmem:[%s0 + $0x24] sm:$0xff]
  %v22 = vld [vmem:[%s0 + $0x2c] sm:$0xf]
  %v23 = vld [vmem:[%s0 + $0x30] sm:$0xff]
  %v24 = vld [vmem:[%s0 + $0x38] sm:$0xf]
  %v25 = vld [vmem:[%s0 + $0x3c] sm:$0xff]
  %v26 = vld [vmem:[%s0 + $0x44] sm:$0xf]
  %v27 = vld [vmem:[%s0 + $0x48] sm:$0xff]
  %v28 = vld [vmem:[%s0 + $0x50] sm:$0xf]
  %v29 = vld [vmem:[%s0 + $0x54] sm:$0xff]
  %v30 = vld [vmem:[%s0 + $0x5c] sm:$0xf]
  %v31 = vld [vmem:[%s0 + $0x60] sm:$0xff]
  %v32 = vld [vmem:[%s0 + $0x68] sm:$0xf]
  %v33 = vld [vmem:[%s0 + $0x6c] sm:$0xff]
  %v34 = vld [vmem:[%s0 + $0x74] sm:$0xf]
  %v35 = vld [vmem:[%s0 + $0x78] sm:$0xff]
  %v36 = vld [vmem:[%s0 + $0x80] sm:$0xf]
  %v37 = vld [vmem:[%s0 + $0x84] sm:$0xff]
  %v38 = vld [vmem:[%s0 + $0x8c] sm:$0xf]
  %v39 = vld [vmem:[%s0 + $0x90] sm:$0xff]
  %v40 = vld [vmem:[%s0 + $0x98] sm:$0xf]
  %v41 = vld [vmem:[%s0 + $0x9c] sm:$0xff]
  %v42 = vld [vmem:[%s0 + $0xa4] sm:$0xf]
  %v43 = vld [vmem:[%s0 + $0xa8] sm:$0xff]
  %v44 = vld [vmem:[%s0 + $0xb0] sm:$0xf]
  %v45 = vld [vmem:[%s0 + $0xb4] sm:$0xff]
  %v46 = vld [vmem:[%s0 + $0xbc] sm:$0xf]
  %v47 = vmax.bf16 %v15, 0
  %v48 = vmax.bf16 %v16, 0
  %v49 = vmax.bf16 %v17, 0
  %v50 = vmax.bf16 %v18, 0
  %v51 = vmax.bf16 %v19, 0
  %v52 = vmax.bf16 %v20, 0
  %v53 = vmax.bf16 %v21, 0
  %v54 = vmax.bf16 %v22, 0
  %v55 = vmax.bf16 %v23, 0
  %v56 = vmax.bf16 %v24, 0
  %v57 = vmax.bf16 %v25, 0
  %v58 = vmax.bf16 %v26, 0
  %v59 = vmax.bf16 %v27, 0
  %v60 = vmax.bf16 %v28, 0
  %v61 = vmax.bf16 %v29, 0
  %v62 = vmax.bf16 %v30, 0
  %v63 = vmax.bf16 %v31, 0
  %v64 = vmax.bf16 %v32, 0
  %v65 = vmax.bf16 %v33, 0
  %v66 = vmax.bf16 %v34, 0
  %v67 = vmax.bf16 %v35, 0
  %v68 = vmax.bf16 %v36, 0
  %v69 = vmax.bf16 %v37, 0
  %v70 = vmax.bf16 %v38, 0
  %v71 = vmax.bf16 %v39, 0
  %v72 = vmax.bf16 %v40, 0
  %v73 = vmax.bf16 %v41, 0
  %v74 = vmax.bf16 %v42, 0
  %v75 = vmax.bf16 %v43, 0
  %v76 = vmax.bf16 %v44, 0
  %v77 = vmax.bf16 %v45, 0
  %v78 = vmax.bf16 %v46, 0
  %v79 = vld [vmem:[%s1] sm:$0xf]
  %v80 = vld [vmem:[%s1 + $0x4] sm:$0xf]
  %v81 = vld [vmem:[%s1 + $0x8] sm:$0xf]
  %v82 = vld [vmem:[%s1 + $0xc] sm:$0xf]
  %v83 = vld [vmem:[%s1 + $0x10] sm:$0xf]
  %v84 = vld [vmem:[%s1 + $0x14] sm:$0xf]
  %v85 = vld [vmem:[%s1 + $0x18] sm:$0xf]
  %v86 = vld [vmem:[%s1 + $0x1c] sm:$0xf]
  %v87 = vld [vmem:[%s1 + $0x20] sm:$0xf]
  %v88 = vld [vmem:[%s1 + $0x24] sm:$0xf]
  %v89 = vld [vmem:[%s1 + $0x28] sm:$0xf]
  %v90 = vld [vmem:[%s1 + $0x2c] sm:$0xf]
  %v91 = vld [vmem:[%s1 + $0x30] sm:$0xf]
  %v92 = vld [vmem:[%s1 + $0x34] sm:$0xf]
  %v93 = vld [vmem:[%s1 + $0x38] sm:$0xf]
  %v94 = vld [vmem:[%s1 + $0x3c] sm:$0xf]
  %v95 = vld [vmem:[%s1 + $0x40] sm:$0xf]
  %v96 = vld [vmem:[%s1 + $0x44] sm:$0xf]
  %v97 = vld [vmem:[%s1 + $0x48] sm:$0xf]
  %v98 = vld [vmem:[%s1 + $0x4c] sm:$0xf]
  %v99 = vld [vmem:[%s1 + $0x50] sm:$0xf]
  %v100 = vld [vmem:[%s1 + $0x54] sm:$0xf]
  %v101 = vld [vmem:[%s1 + $0x58] sm:$0xf]
  %v102 = vld [vmem:[%s1 + $0x5c] sm:$0xf]
  %v103 = vld [vmem:[%s1 + $0x60] sm:$0xf]
  %v104 = vld [vmem:[%s1 + $0x64] sm:$0xf]
  %v105 = vld [vmem:[%s1 + $0x68] sm:$0xf]
  %v106 = vld [vmem:[%s1 + $0x6c] sm:$0xf]
  %v107 = vld [vmem:[%s1 + $0x70] sm:$0xf]
  %v108 = vld [vmem:[%s1 + $0x74] sm:$0xf]
  %v109 = vld [vmem:[%s1 + $0x78] sm:$0xf]
  %v110 = vld [vmem:[%s1 + $0x7c] sm:$0xf]
  %v111 = vld [vmem:[%s1 + $0x80] sm:$0xf]
  %v112 = vld [vmem:[%s1 + $0x84] sm:$0xf]
  %v113 = vld [vmem:[%s1 + $0x88] sm:$0xf]
  %v114 = vld [vmem:[%s1 + $0x8c] sm:$0xf]
  %v115 = vld [vmem:[%s2] sm:$0x1]
  %v117 = vlaneseq
  %v118 = vshrl.u32 %v117, 7
  %v119 = vsub.s32 0, %v118
  %v120 = vrot.slane %v115, %v119
  %v154 = vunpack.c.l.b16 %v47
  %v155 = vunpack.c.h.b16 %v47
  %v156 = vunpack.c.l.b16 %v48
  %v157 = vunpack.c.l.b16 %v49
  %v158 = vunpack.c.h.b16 %v49
  %v159 = vunpack.c.l.b16 %v50
  %v160 = vunpack.c.l.b16 %v51
  %v161 = vunpack.c.h.b16 %v51
  %v162 = vunpack.c.l.b16 %v52
  %v163 = vunpack.c.l.b16 %v53
  %v164 = vunpack.c.h.b16 %v53
  %v165 = vunpack.c.l.b16 %v54
  %v166 = vunpack.c.l.b16 %v55
  %v167 = vunpack.c.h.b16 %v55
  %v168 = vunpack.c.l.b16 %v56
  %v169 = vunpack.c.l.b16 %v57
  %v170 = vunpack.c.h.b16 %v57
  %v171 = vunpack.c.l.b16 %v58
  %v172 = vunpack.c.l.b16 %v59
  %v173 = vunpack.c.h.b16 %v59
  %v174 = vunpack.c.l.b16 %v60
  %v175 = vunpack.c.l.b16 %v61
  %v176 = vunpack.c.h.b16 %v61
  %v177 = vunpack.c.l.b16 %v62
  %v178 = vunpack.c.l.b16 %v63
  %v179 = vunpack.c.h.b16 %v63
  %v180 = vunpack.c.l.b16 %v64
  %v181 = vunpack.c.l.b16 %v65
  %v182 = vunpack.c.h.b16 %v65
  %v183 = vunpack.c.l.b16 %v66
  %v184 = vunpack.c.l.b16 %v67
  %v185 = vunpack.c.h.b16 %v67
  %v186 = vunpack.c.l.b16 %v68
  %v187 = vunpack.c.l.b16 %v69
  %v188 = vunpack.c.h.b16 %v69
  %v189 = vunpack.c.l.b16 %v70
  %v190 = vunpack.c.l.b16 %v71
  %v191 = vunpack.c.h.b16 %v71
  %v192 = vunpack.c.l.b16 %v72
  %v193 = vunpack.c.l.b16 %v73
  %v194 = vunpack.c.h.b16 %v73
  %v195 = vunpack.c.l.b16 %v74
  %v196 = vunpack.c.l.b16 %v75
  %v197 = vunpack.c.h.b16 %v75
  %v198 = vunpack.c.l.b16 %v76
  %v199 = vunpack.c.l.b16 %v77
  %v200 = vunpack.c.h.b16 %v77
  %v201 = vunpack.c.l.b16 %v78
  %v202 = vpack.c.b16 %v157, %v154
  %v203 = vpack.c.b16 %v158, %v155
  %v204 = vpack.c.b16 %v159, %v156
  %v205 = vpack.c.b16 %v163, %v160
  %v206 = vpack.c.b16 %v164, %v161
  %v207 = vpack.c.b16 %v165, %v162
  %v208 = vpack.c.b16 %v169, %v166
  %v209 = vpack.c.b16 %v170, %v167
  %v210 = vpack.c.b16 %v171, %v168
  %v211 = vpack.c.b16 %v175, %v172
  %v212 = vpack.c.b16 %v176, %v173
  %v213 = vpack.c.b16 %v177, %v174
  %v214 = vpack.c.b16 %v181, %v178
  %v215 = vpack.c.b16 %v182, %v179
  %v216 = vpack.c.b16 %v183, %v180
  %v217 = vpack.c.b16 %v187, %v184
  %v218 = vpack.c.b16 %v188, %v185
  %v219 = vpack.c.b16 %v189, %v186
  %v220 = vpack.c.b16 %v193, %v190
  %v221 = vpack.c.b16 %v194, %v191
  %v222 = vpack.c.b16 %v195, %v192
  %v223 = vpack.c.b16 %v199, %v196
  %v224 = vpack.c.b16 %v200, %v197
  %v225 = vpack.c.b16 %v201, %v198
  %v278 = vunpack.c.l.b16 %v79
  %v279 = vunpack.c.l.b16 %v80
  %v280 = vunpack.c.l.b16 %v81
  %v281 = vunpack.c.l.b16 %v82
  %v282 = vunpack.c.l.b16 %v83
  %v283 = vunpack.c.l.b16 %v84
  %v284 = vunpack.c.l.b16 %v85
  %v285 = vunpack.c.l.b16 %v86
  %v286 = vunpack.c.l.b16 %v87
  %v287 = vunpack.c.l.b16 %v88
  %v288 = vunpack.c.l.b16 %v89
  %v289 = vunpack.c.l.b16 %v90
  %v290 = vunpack.c.l.b16 %v91
  %v291 = vunpack.c.l.b16 %v92
  %v292 = vunpack.c.l.b16 %v93
  %v293 = vunpack.c.l.b16 %v94
  %v294 = vunpack.c.l.b16 %v95
  %v295 = vunpack.c.l.b16 %v96
  %v296 = vunpack.c.l.b16 %v97
  %v297 = vunpack.c.l.b16 %v98
  %v298 = vunpack.c.l.b16 %v99
  %v299 = vunpack.c.l.b16 %v100
  %v300 = vunpack.c.l.b16 %v101
  %v301 = vunpack.c.l.b16 %v102
  %v302 = vunpack.c.l.b16 %v103
  %v303 = vunpack.c.l.b16 %v104
  %v304 = vunpack.c.l.b16 %v105
  %v305 = vunpack.c.l.b16 %v106
  %v306 = vunpack.c.l.b16 %v107
  %v307 = vunpack.c.l.b16 %v108
  %v308 = vunpack.c.l.b16 %v109
  %v309 = vunpack.c.l.b16 %v110
  %v310 = vunpack.c.l.b16 %v111
  %v311 = vunpack.c.l.b16 %v112
  %v312 = vunpack.c.l.b16 %v113
  %v313 = vunpack.c.l.b16 %v114
  %v314 = vpack.c.b16 %v279, %v278
  %v315 = vpack.c.b16 %v281, %v280
  %v316 = vpack.c.b16 %v283, %v282
  %v317 = vpack.c.b16 %v285, %v284
  %v318 = vpack.c.b16 %v287, %v286
  %v319 = vpack.c.b16 %v289, %v288
  %v320 = vpack.c.b16 %v291, %v290
  %v321 = vpack.c.b16 %v293, %v292
  %v322 = vpack.c.b16 %v295, %v294
  %v323 = vpack.c.b16 %v297, %v296
  %v324 = vpack.c.b16 %v299, %v298
  %v325 = vpack.c.b16 %v301, %v300
  %v326 = vpack.c.b16 %v303, %v302
  %v327 = vpack.c.b16 %v305, %v304
  %v328 = vpack.c.b16 %v307, %v306
  %v329 = vpack.c.b16 %v309, %v308
  %v330 = vpack.c.b16 %v311, %v310
  %v331 = vpack.c.b16 %v313, %v312
  %vm350 = vcmask 261120
  %v352 = vsel %vm350, %v204, 0
  %v355 = vsel %vm350, %v207, 0
  %v358 = vsel %vm350, %v210, 0
  %v361 = vsel %vm350, %v213, 0
  %v364 = vsel %vm350, %v216, 0
  %v367 = vsel %vm350, %v219, 0
  %v370 = vsel %vm350, %v222, 0
  %v373 = vsel %vm350, %v225, 0
  %375 = vmatprep.subr.bf16.mxu0 0
  %376 = vmatpush1.bf16.msra.mxu0 %v314
  %377 = vmatprep.subr.bf16.mxu0 0
  %378 = vmatpush1.bf16.msra.mxu0 %v315
  %379 = vmatprep.subr.bf16.mxu0 0
  %380 = vmatpush1.bf16.msra.mxu0 %v316
  %381 = vmatprep.subr.bf16.mxu0 0
  %382 = vmatpush1.bf16.msra.mxu0 %v317
  %383 = vmatprep.subr.bf16.mxu0 0
  %384 = vmatpush1.bf16.msra.mxu0 %v318
  %385 = vmatprep.subr.bf16.mxu0 0
  %386 = vmatpush1.bf16.msra.mxu0 %v319
  %387 = vmatprep.subr.bf16.mxu0 0
  %388 = vmatpush1.bf16.msra.mxu0 %v320
  %389 = vmatprep.subr.bf16.mxu0 0
  %390 = vmatpush1.bf16.msra.mxu0 %v321
  %391 = vmatprep.subr.bf16.mxu0 0
  %392 = vmatpush1.bf16.msra.mxu0 %v322
  %393 = vmatprep.subr.bf16.mxu0 0
  %394 = vmatpush1.bf16.msra.mxu0 %v323
  %395 = vmatprep.subr.bf16.mxu0 0
  %396 = vmatpush1.bf16.msra.mxu0 %v324
  %397 = vmatprep.subr.bf16.mxu0 0
  %398 = vmatpush1.bf16.msra.mxu0 %v325
  %399 = vmatprep.subr.bf16.mxu0 0
  %400 = vmatpush1.bf16.msra.mxu0 %v326
  %401 = vmatprep.subr.bf16.mxu0 0
  %402 = vmatpush1.bf16.msra.mxu0 %v327
  %403 = vmatprep.subr.bf16.mxu0 0
  %404 = vmatpush1.bf16.msra.mxu0 %v328
  %405 = vmatprep.subr.bf16.mxu0 0
  %406 = vmatpush1.bf16.msra.mxu0 %v329
  %407 = vmatprep.mubr.bf16.mxu0 %v203
  %408 = vmatmul.mubr.bf16.gmra.mrb[0].mxu0 %v202
  %v409 = vpop.f32.mrb[0].mxu0
  %v410 = vadd.f32 %v120, %v409
  %v411 = vpop.f32.mrb[0].mxu0
  %v412 = vpop.f32.mrb[0].mxu0
  %v413 = vadd.f32 %v120, %v412
  %v414 = vpop.f32.mrb[0].mxu0
  %415 = vmatprep.mubr.bf16.mxu0 %v206
  %416 = vmatmul.mubr.bf16.gmra.mrb[0].mxu0 %v205
  %v417 = vpop.f32.mrb[0].mxu0
  %v418 = vadd.f32 %v120, %v417
  %v419 = vpop.f32.mrb[0].mxu0
  %v420 = vpop.f32.mrb[0].mxu0
  %v421 = vadd.f32 %v120, %v420
  %v422 = vpop.f32.mrb[0].mxu0
  %423 = vmatprep.mubr.bf16.mxu0 %v209
  %424 = vmatmul.mubr.bf16.gmra.mrb[0].mxu0 %v208
  %v425 = vpop.f32.mrb[0].mxu0
  %v426 = vadd.f32 %v120, %v425
  %v427 = vpop.f32.mrb[0].mxu0
  %v428 = vpop.f32.mrb[0].mxu0
  %v429 = vadd.f32 %v120, %v428
  %v430 = vpop.f32.mrb[0].mxu0
  %431 = vmatprep.mubr.bf16.mxu0 %v212
  %432 = vmatmul.mubr.bf16.gmra.mrb[0].mxu0 %v211
  %v433 = vpop.f32.mrb[0].mxu0
  %v434 = vadd.f32 %v120, %v433
  %v435 = vpop.f32.mrb[0].mxu0
  %v436 = vpop.f32.mrb[0].mxu0
  %v437 = vadd.f32 %v120, %v436
  %v438 = vpop.f32.mrb[0].mxu0
  %439 = vmatprep.mubr.bf16.mxu0 %v215
  %440 = vmatmul.mubr.bf16.gmra.mrb[0].mxu0 %v214
  %v441 = vpop.f32.mrb[0].mxu0
  %v442 = vadd.f32 %v120, %v441
  %v443 = vpop.f32.mrb[0].mxu0
  %v444 = vpop.f32.mrb[0].mxu0
  %v445 = vadd.f32 %v120, %v444
  %v446 = vpop.f32.mrb[0].mxu0
  %447 = vmatprep.mubr.bf16.mxu0 %v218
  %448 = vmatmul.mubr.bf16.gmra.mrb[0].mxu0 %v217
  %v449 = vpop.f32.mrb[0].mxu0
  %v450 = vadd.f32 %v120, %v449
  %v451 = vpop.f32.mrb[0].mxu0
  %v452 = vpop.f32.mrb[0].mxu0
  %v453 = vadd.f32 %v120, %v452
  %v454 = vpop.f32.mrb[0].mxu0
  %455 = vmatprep.mubr.bf16.mxu0 %v221
  %456 = vmatmul.mubr.bf16.gmra.mrb[0].mxu0 %v220
  %v457 = vpop.f32.mrb[0].mxu0
  %v458 = vadd.f32 %v120, %v457
  %v459 = vpop.f32.mrb[0].mxu0
  %v460 = vpop.f32.mrb[0].mxu0
  %v461 = vadd.f32 %v120, %v460
  %v462 = vpop.f32.mrb[0].mxu0
  %463 = vmatprep.mubr.bf16.mxu0 %v224
  %464 = vmatmul.mubr.bf16.gmra.mrb[0].mxu0 %v223
  %v465 = vpop.f32.mrb[0].mxu0
  %v466 = vadd.f32 %v120, %v465
  %v467 = vpop.f32.mrb[0].mxu0
  %v468 = vpop.f32.mrb[0].mxu0
  %v469 = vadd.f32 %v120, %v468
  %v470 = vpop.f32.mrb[0].mxu0
  %471 = vdwg.mxu0
  %472 = vmatprep.subr.bf16.mxu0 0
  %473 = vmatpush1.bf16.msra.mxu0 %v330
  %474 = vmatprep.subr.bf16.mxu0 0
  %475 = vmatpush1.bf16.msra.mxu0 %v331
  %476 = vmatprep.subr.bf16.mxu0 0
  %477 = vmatpush1.bf16.msra.mxu0 0
  %478 = vmatprep.subr.bf16.mxu0 0
  %479 = vmatpush1.bf16.msra.mxu0 0
  %480 = vmatprep.subr.bf16.mxu0 0
  %481 = vmatpush1.bf16.msra.mxu0 0
  %482 = vmatprep.subr.bf16.mxu0 0
  %483 = vmatpush1.bf16.msra.mxu0 0
  %484 = vmatprep.subr.bf16.mxu0 0
  %485 = vmatpush1.bf16.msra.mxu0 0
  %486 = vmatprep.subr.bf16.mxu0 0
  %487 = vmatpush1.bf16.msra.mxu0 0
  %488 = vmatprep.subr.bf16.mxu0 0
  %489 = vmatpush1.bf16.msra.mxu0 0
  %490 = vmatprep.subr.bf16.mxu0 0
  %491 = vmatpush1.bf16.msra.mxu0 0
  %492 = vmatprep.subr.bf16.mxu0 0
  %493 = vmatpush1.bf16.msra.mxu0 0
  %494 = vmatprep.subr.bf16.mxu0 0
  %495 = vmatpush1.bf16.msra.mxu0 0
  %496 = vmatprep.subr.bf16.mxu0 0
  %497 = vmatpush1.bf16.msra.mxu0 0
  %498 = vmatprep.subr.bf16.mxu0 0
  %499 = vmatpush1.bf16.msra.mxu0 0
  %500 = vmatprep.subr.bf16.mxu0 0
  %501 = vmatpush1.bf16.msra.mxu0 0
  %502 = vmatprep.subr.bf16.mxu0 0
  %503 = vmatpush1.bf16.msra.mxu0 0
  %504 = vmatprep.mubr.bf16.mxu0 0
  %505 = vmatmul.mubr.bf16.gmra.mrb[0].mxu0 %v352
  %v506 = vpop.f32.mrb[0].mxu0
  %v507 = vadd.f32 %v410, %v506
  %v508 = vpop.f32.mrb[0].mxu0
  %v509 = vpop.f32.mrb[0].mxu0
  %v510 = vadd.f32 %v413, %v509
  %v511 = vpop.f32.mrb[0].mxu0
  %512 = vmatprep.mubr.bf16.mxu0 0
  %513 = vmatmul.mubr.bf16.gmra.mrb[0].mxu0 %v355
  %v514 = vpop.f32.mrb[0].mxu0
  %v515 = vadd.f32 %v418, %v514
  %v516 = vpop.f32.mrb[0].mxu0
  %v517 = vpop.f32.mrb[0].mxu0
  %v518 = vadd.f32 %v421, %v517
  %v519 = vpop.f32.mrb[0].mxu0
  %520 = vmatprep.mubr.bf16.mxu0 0
  %521 = vmatmul.mubr.bf16.gmra.mrb[0].mxu0 %v358
  %v522 = vpop.f32.mrb[0].mxu0
  %v523 = vadd.f32 %v426, %v522
  %v524 = vpop.f32.mrb[0].mxu0
  %v525 = vpop.f32.mrb[0].mxu0
  %v526 = vadd.f32 %v429, %v525
  %v527 = vpop.f32.mrb[0].mxu0
  %528 = vmatprep.mubr.bf16.mxu0 0
  %529 = vmatmul.mubr.bf16.gmra.mrb[0].mxu0 %v361
  %v530 = vpop.f32.mrb[0].mxu0
  %v531 = vadd.f32 %v434, %v530
  %v532 = vpop.f32.mrb[0].mxu0
  %v533 = vpop.f32.mrb[0].mxu0
  %v534 = vadd.f32 %v437, %v533
  %v535 = vpop.f32.mrb[0].mxu0
  %536 = vmatprep.mubr.bf16.mxu0 0
  %537 = vmatmul.mubr.bf16.gmra.mrb[0].mxu0 %v364
  %v538 = vpop.f32.mrb[0].mxu0
  %v539 = vadd.f32 %v442, %v538
  %v540 = vpop.f32.mrb[0].mxu0
  %v541 = vpop.f32.mrb[0].mxu0
  %v542 = vadd.f32 %v445, %v541
  %v543 = vpop.f32.mrb[0].mxu0
  %544 = vmatprep.mubr.bf16.mxu0 0
  %545 = vmatmul.mubr.bf16.gmra.mrb[0].mxu0 %v367
  %v546 = vpop.f32.mrb[0].mxu0
  %v547 = vadd.f32 %v450, %v546
  %v548 = vpop.f32.mrb[0].mxu0
  %v549 = vpop.f32.mrb[0].mxu0
  %v550 = vadd.f32 %v453, %v549
  %v551 = vpop.f32.mrb[0].mxu0
  %552 = vmatprep.mubr.bf16.mxu0 0
  %553 = vmatmul.mubr.bf16.gmra.mrb[0].mxu0 %v370
  %v554 = vpop.f32.mrb[0].mxu0
  %v555 = vadd.f32 %v458, %v554
  %v556 = vpop.f32.mrb[0].mxu0
  %v557 = vpop.f32.mrb[0].mxu0
  %v558 = vadd.f32 %v461, %v557
  %v559 = vpop.f32.mrb[0].mxu0
  %560 = vmatprep.mubr.bf16.mxu0 0
  %561 = vmatmul.mubr.bf16.gmra.mrb[0].mxu0 %v373
  %v562 = vpop.f32.mrb[0].mxu0
  %v563 = vadd.f32 %v466, %v562
  %v564 = vpop.f32.mrb[0].mxu0
  %v565 = vpop.f32.mrb[0].mxu0
  %v566 = vadd.f32 %v469, %v565
  %v567 = vpop.f32.mrb[0].mxu0
  %568 = vdwg.mxu0
  %569 = vst [vmem:[%s3] sm:$0xff] %v507
  %570 = vst [vmem:[%s3 + $0x8] sm:$0xff] %v510
  %571 = vst [vmem:[%s3 + $0x10] sm:$0xff] %v515
  %572 = vst [vmem:[%s3 + $0x18] sm:$0xff] %v518
  %573 = vst [vmem:[%s3 + $0x20] sm:$0xff] %v523
  %574 = vst [vmem:[%s3 + $0x28] sm:$0xff] %v526
  %575 = vst [vmem:[%s3 + $0x30] sm:$0xff] %v531
  %576 = vst [vmem:[%s3 + $0x38] sm:$0xff] %v534
  %577 = vst [vmem:[%s3 + $0x40] sm:$0xff] %v539
  %578 = vst [vmem:[%s3 + $0x48] sm:$0xff] %v542
  %579 = vst [vmem:[%s3 + $0x50] sm:$0xff] %v547
  %580 = vst [vmem:[%s3 + $0x58] sm:$0xff] %v550
  %581 = vst [vmem:[%s3 + $0x60] sm:$0xff] %v555
  %582 = vst [vmem:[%s3 + $0x68] sm:$0xff] %v558
  %583 = vst [vmem:[%s3 + $0x70] sm:$0xff] %v563
  %584 = vst [vmem:[%s3 + $0x78] sm:$0xff] %v566
  // Predicated region
  $region14: #{forward.7} parent=0 // pred_check
    _
  $region15: #{forward.7} parent=0 // pred_check_branch
    %586 = sbr.rel (0) target = $region17
  $region16: #{forward.7} parent=0 // pred_region
    _
  $region17: #{forward.7} parent=0 // pred_fallthru
    _
  // Predicated region
  $region18: #{forward.7} parent=0 // pred_check
    _
  $region19: #{forward.7} parent=0 // pred_check_branch
    %588 = sbr.rel (0) target = $region21
  $region20: #{forward.7} parent=0 // pred_region
    _
  $region21: #{forward.7} parent=0 // pred_fallthru
    _

// kernel: closed_call.54
$region0: #{closed_call.54}
  #allocation0 [shape = 'u32[]', space=smem, size = 0x4, offset = 0x4, fixed_abs, tag = 'smem constant byte address 0x4 - core index']
  #allocation1 [shape = 'u32[144,128]{1,0:T(1,128)}', space=vmem, size = 0x12000, scoped, tag = 'internal scratch']
  %s0 = inlined_call_operand.vmem [shape: bf16[128,288], index: 0, kind: input, shape index: {}]
  %s1 = inlined_call_operand.vmem [shape: bf16[288,128], index: 1, kind: input, shape index: {}]
  %s2 = inlined_call_operand.vmem [shape: f32[128,64], index: 2, kind: input, shape index: {}]
  %s3 = inlined_call_operand.vmem [shape: f32[64,128], index: 3, kind: input, shape index: {}]
  %s4 = inlined_call_operand.vmem [shape: f32[1,128], index: 4, kind: input, shape index: {}]
  %s5 = inlined_call_operand.vmem [shape: f32[128,128], index: 5, kind: output, shape index: {}]
  %s6 = sld [smem:[#allocation0]]
  $region30: #{closed_call.54} parent=0
    _
  %s8 = ssub.s32 1, %s6
  %s9 = scalar_select 0, %s8, %s6
  // Predicated region
  $region2: #{closed_call.54} parent=0 // pred_check
    _
  $region3: #{closed_call.54} parent=0 // pred_check_branch
    %11 = sbr.rel (0) target = $region5
  $region4: #{closed_call.54} parent=0 // pred_region
    _
  $region5: #{closed_call.54} parent=0 // pred_fallthru
    _
  // Predicated region
  $region6: #{closed_call.54} parent=0 // pred_check
    _
  $region7: #{closed_call.54} parent=0 // pred_check_branch
    %13 = sbr.rel (0) target = $region9
  $region8: #{closed_call.54} parent=0 // pred_region
    _
  $region9: #{closed_call.54} parent=0 // pred_fallthru
    _
  // Predicated region
  $region10: #{closed_call.54} parent=0 // pred_check
    _
  $region11: #{closed_call.54} parent=0 // pred_check_branch
    %15 = sbr.rel (0) target = $region13
  $region12: #{closed_call.54} parent=0 // pred_region
    _
  $region13: #{closed_call.54} parent=0 // pred_fallthru
    _
  // Predicated region
  $region14: #{closed_call.54} parent=0 // pred_check
    _
  $region15: #{closed_call.54} parent=0 // pred_check_branch
    %17 = sbr.rel (0) target = $region17
  $region16: #{closed_call.54} parent=0 // pred_region
    _
  $region17: #{closed_call.54} parent=0 // pred_fallthru
    _
  // Predicated region
  $region18: #{closed_call.54} parent=0 // pred_check
    _
  $region19: #{closed_call.54} parent=0 // pred_check_branch
    %19 = sbr.rel (0) target = $region21
  $region20: #{closed_call.54} parent=0 // pred_region
    _
  $region21: #{closed_call.54} parent=0 // pred_fallthru
    _
  %v21 = vld [vmem:[%s0] sm:$0xff]
  %v22 = vld [vmem:[%s0 + $0x8] sm:$0xf]
  %v23 = vld [vmem:[%s0 + $0xc] sm:$0xff]
  %v24 = vld [vmem:[%s0 + $0x14] sm:$0xf]
  %v25 = vld [vmem:[%s0 + $0x18] sm:$0xff]
  %v26 = vld [vmem:[%s0 + $0x20] sm:$0xf]
  %v27 = vld [vmem:[%s0 + $0x24] sm:$0xff]
  %v28 = vld [vmem:[%s0 + $0x2c] sm:$0xf]
  %v29 = vld [vmem:[%s0 + $0x30] sm:$0xff]
  %v30 = vld [vmem:[%s0 + $0x38] sm:$0xf]
  %v31 = vld [vmem:[%s0 + $0x3c] sm:$0xff]
  %v32 = vld [vmem:[%s0 + $0x44] sm:$0xf]
  %v33 = vld [vmem:[%s0 + $0x48] sm:$0xff]
  %v34 = vld [vmem:[%s0 + $0x50] sm:$0xf]
  %v35 = vld [vmem:[%s0 + $0x54] sm:$0xff]
  %v36 = vld [vmem:[%s0 + $0x5c] sm:$0xf]
  %v37 = vld [vmem:[%s0 + $0x60] sm:$0xff]
  %v38 = vld [vmem:[%s0 + $0x68] sm:$0xf]
  %v39 = vld [vmem:[%s0 + $0x6c] sm:$0xff]
  %v40 = vld [vmem:[%s0 + $0x74] sm:$0xf]
  %v41 = vld [vmem:[%s0 + $0x78] sm:$0xff]
  %v42 = vld [vmem:[%s0 + $0x80] sm:$0xf]
  %v43 = vld [vmem:[%s0 + $0x84] sm:$0xff]
  %v44 = vld [vmem:[%s0 + $0x8c] sm:$0xf]
  %v45 = vld [vmem:[%s0 + $0x90] sm:$0xff]
  %v46 = vld [vmem:[%s0 + $0x98] sm:$0xf]
  %v47 = vld [vmem:[%s0 + $0x9c] sm:$0xff]
  %v48 = vld [vmem:[%s0 + $0xa4] sm:$0xf]
  %v49 = vld [vmem:[%s0 + $0xa8] sm:$0xff]
  %v50 = vld [vmem:[%s0 + $0xb0] sm:$0xf]
  %v51 = vld [vmem:[%s0 + $0xb4] sm:$0xff]
  %v52 = vld [vmem:[%s0 + $0xbc] sm:$0xf]
  %v53 = vld [vmem:[%s1] sm:$0xf]
  %v54 = vld [vmem:[%s1 + $0x4] sm:$0xf]
  %v55 = vld [vmem:[%s1 + $0x8] sm:$0xf]
  %v56 = vld [vmem:[%s1 + $0xc] sm:$0xf]
  %v57 = vld [vmem:[%s1 + $0x10] sm:$0xf]
  %v58 = vld [vmem:[%s1 + $0x14] sm:$0xf]
  %v59 = vld [vmem:[%s1 + $0x18] sm:$0xf]
  %v60 = vld [vmem:[%s1 + $0x1c] sm:$0xf]
  %v61 = vld [vmem:[%s1 + $0x20] sm:$0xf]
  %v62 = vld [vmem:[%s1 + $0x24] sm:$0xf]
  %v63 = vld [vmem:[%s1 + $0x28] sm:$0xf]
  %v64 = vld [vmem:[%s1 + $0x2c] sm:$0xf]
  %v65 = vld [vmem:[%s1 + $0x30] sm:$0xf]
  %v66 = vld [vmem:[%s1 + $0x34] sm:$0xf]
  %v67 = vld [vmem:[%s1 + $0x38] sm:$0xf]
  %v68 = vld [vmem:[%s1 + $0x3c] sm:$0xf]
  %v69 = vld [vmem:[%s1 + $0x40] sm:$0xf]
  %v70 = vld [vmem:[%s1 + $0x44] sm:$0xf]
  %v71 = vld [vmem:[%s1 + $0x48] sm:$0xf]
  %v72 = vld [vmem:[%s1 + $0x4c] sm:$0xf]
  %v73 = vld [vmem:[%s1 + $0x50] sm:$0xf]
  %v74 = vld [vmem:[%s1 + $0x54] sm:$0xf]
  %v75 = vld [vmem:[%s1 + $0x58] sm:$0xf]
  %v76 = vld [vmem:[%s1 + $0x5c] sm:$0xf]
  %v77 = vld [vmem:[%s1 + $0x60] sm:$0xf]
  %v78 = vld [vmem:[%s1 + $0x64] sm:$0xf]
  %v79 = vld [vmem:[%s1 + $0x68] sm:$0xf]
  %v80 = vld [vmem:[%s1 + $0x6c] sm:$0xf]
  %v81 = vld [vmem:[%s1 + $0x70] sm:$0xf]
  %v82 = vld [vmem:[%s1 + $0x74] sm:$0xf]
  %v83 = vld [vmem:[%s1 + $0x78] sm:$0xf]
  %v84 = vld [vmem:[%s1 + $0x7c] sm:$0xf]
  %v85 = vld [vmem:[%s1 + $0x80] sm:$0xf]
  %v86 = vld [vmem:[%s1 + $0x84] sm:$0xf]
  %v87 = vld [vmem:[%s1 + $0x88] sm:$0xf]
  %v88 = vld [vmem:[%s1 + $0x8c] sm:$0xf]
  %v89 = vld [vmem:[%s2] sm:$0xff]
  %v90 = vld [vmem:[%s2 + $0x8] sm:$0xff]
  %v91 = vld [vmem:[%s2 + $0x10] sm:$0xff]
  %v92 = vld [vmem:[%s2 + $0x18] sm:$0xff]
  %v93 = vld [vmem:[%s2 + $0x20] sm:$0xff]
  %v94 = vld [vmem:[%s2 + $0x28] sm:$0xff]
  %v95 = vld [vmem:[%s2 + $0x30] sm:$0xff]
  %v96 = vld [vmem:[%s2 + $0x38] sm:$0xff]
  %v97 = vld [vmem:[%s2 + $0x40] sm:$0xff]
  %v98 = vld [vmem:[%s2 + $0x48] sm:$0xff]
  %v99 = vld [vmem:[%s2 + $0x50] sm:$0xff]
  %v100 = vld [vmem:[%s2 + $0x58] sm:$0xff]
  %v101 = vld [vmem:[%s2 + $0x60] sm:$0xff]
  %v102 = vld [vmem:[%s2 + $0x68] sm:$0xff]
  %v103 = vld [vmem:[%s2 + $0x70] sm:$0xff]
  %v104 = vld [vmem:[%s2 + $0x78] sm:$0xff]
  %v105 = vld [vmem:[%s3] sm:$0xff]
  %v106 = vld [vmem:[%s3 + $0x8] sm:$0xff]
  %v107 = vld [vmem:[%s3 + $0x10] sm:$0xff]
  %v108 = vld [vmem:[%s3 + $0x18] sm:$0xff]
  %v109 = vld [vmem:[%s3 + $0x20] sm:$0xff]
  %v110 = vld [vmem:[%s3 + $0x28] sm:$0xff]
  %v111 = vld [vmem:[%s3 + $0x30] sm:$0xff]
  %v112 = vld [vmem:[%s3 + $0x38] sm:$0xff]
  %vm113 = vcmask 523264
  %v115 = vsel %vm113, %v89, 0
  %v118 = vsel %vm113, %v90, 0
  %v121 = vsel %vm113, %v91, 0
  %v124 = vsel %vm113, %v92, 0
  %v127 = vsel %vm113, %v93, 0
  %v130 = vsel %vm113, %v94, 0
  %v133 = vsel %vm113, %v95, 0
  %v136 = vsel %vm113, %v96, 0
  %v139 = vsel %vm113, %v97, 0
  %v142 = vsel %vm113, %v98, 0
  %v145 = vsel %vm113, %v99, 0
  %v148 = vsel %vm113, %v100, 0
  %v151 = vsel %vm113, %v101, 0
  %v154 = vsel %vm113, %v102, 0
  %v157 = vsel %vm113, %v103, 0
  %v160 = vsel %vm113, %v104, 0
  %162 = vmatprep.subr.mxu0 0.0
  %163 = vmatpush1.msra.mxu0 %v105
  %164 = vmatprep.subr.mxu0 0.0
  %165 = vmatpush1.msra.mxu0 %v106
  %166 = vmatprep.subr.mxu0 0.0
  %167 = vmatpush1.msra.mxu0 %v107
  %168 = vmatprep.subr.mxu0 0.0
  %169 = vmatpush1.msra.mxu0 %v108
  %170 = vmatprep.subr.mxu0 0.0
  %171 = vmatpush1.msra.mxu0 %v109
  %172 = vmatprep.subr.mxu0 0.0
  %173 = vmatpush1.msra.mxu0 %v110
  %174 = vmatprep.subr.mxu0 0.0
  %175 = vmatpush1.msra.mxu0 %v111
  %176 = vmatprep.subr.mxu0 0.0
  %177 = vmatpush1.msra.mxu0 %v112
  %178 = vmatprep.subr.mxu0 0.0
  %179 = vmatpush1.msra.mxu0 0.0
  %180 = vmatprep.subr.mxu0 0.0
  %181 = vmatpush1.msra.mxu0 0.0
  %182 = vmatprep.subr.mxu0 0.0
  %183 = vmatpush1.msra.mxu0 0.0
  %184 = vmatprep.subr.mxu0 0.0
  %185 = vmatpush1.msra.mxu0 0.0
  %186 = vmatprep.subr.mxu0 0.0
  %187 = vmatpush1.msra.mxu0 0.0
  %188 = vmatprep.subr.mxu0 0.0
  %189 = vmatpush1.msra.mxu0 0.0
  %190 = vmatprep.subr.mxu0 0.0
  %191 = vmatpush1.msra.mxu0 0.0
  %192 = vmatprep.subr.mxu0 0.0
  %193 = vmatpush1.msra.mxu0 0.0
  %194 = vmatprep.subr.mxu0 0.0
  %195 = vmatpush1.msra.mxu0 0.0
  %196 = vmatprep.subr.mxu0 0.0
  %197 = vmatpush1.msra.mxu0 0.0
  %198 = vmatprep.subr.mxu0 0.0
  %199 = vmatpush1.msra.mxu0 0.0
  %200 = vmatprep.subr.mxu0 0.0
  %201 = vmatpush1.msra.mxu0 0.0
  %202 = vmatprep.subr.mxu0 0.0
  %203 = vmatpush1.msra.mxu0 0.0
  %204 = vmatprep.subr.mxu0 0.0
  %205 = vmatpush1.msra.mxu0 0.0
  %206 = vmatprep.subr.mxu0 0.0
  %207 = vmatpush1.msra.mxu0 0.0
  %208 = vmatprep.subr.mxu0 0.0
  %209 = vmatpush1.msra.mxu0 0.0
  %210 = vmatprep.subr.mxu0 0.0
  %211 = vmatpush1.msra.mxu0 0.0
  %212 = vmatprep.subr.mxu0 0.0
  %213 = vmatpush1.msra.mxu0 0.0
  %214 = vmatprep.subr.mxu0 0.0
  %215 = vmatpush1.msra.mxu0 0.0
  %216 = vmatprep.subr.mxu0 0.0
  %217 = vmatpush1.msra.mxu0 0.0
  %218 = vmatprep.subr.mxu0 0.0
  %219 = vmatpush1.msra.mxu0 0.0
  %220 = vmatprep.subr.mxu0 0.0
  %221 = vmatpush1.msra.mxu0 0.0
  %222 = vmatprep.subr.mxu0 0.0
  %223 = vmatpush1.msra.mxu0 0.0
  %224 = vmatprep.subr.mxu0 0.0
  %225 = vmatpush1.msra.mxu0 0.0
  %226 = vmatprep.mubr.f32.mxu0 0.0
  %227 = vmatmul.mubr.f32.gmra.mrb[0].mxu0 %v115
  %v228 = vpop.f32.mrb[0].mxu0
  %v229 = vadd.f32 0.0, %v228
  %v230 = vpop.f32.mrb[0].mxu0
  %231 = vmatprep.mubr.f32.mxu0 0.0
  %232 = vmatmul.mubr.f32.gmra.mrb[0].mxu0 %v118
  %v233 = vpop.f32.mrb[0].mxu0
  %v234 = vadd.f32 0.0, %v233
  %v235 = vpop.f32.mrb[0].mxu0
  %236 = vmatprep.mubr.f32.mxu0 0.0
  %237 = vmatmul.mubr.f32.gmra.mrb[0].mxu0 %v121
  %v238 = vpop.f32.mrb[0].mxu0
  %v239 = vadd.f32 0.0, %v238
  %v240 = vpop.f32.mrb[0].mxu0
  %241 = vmatprep.mubr.f32.mxu0 0.0
  %242 = vmatmul.mubr.f32.gmra.mrb[0].mxu0 %v124
  %v243 = vpop.f32.mrb[0].mxu0
  %v244 = vadd.f32 0.0, %v243
  %v245 = vpop.f32.mrb[0].mxu0
  %246 = vmatprep.mubr.f32.mxu0 0.0
  %247 = vmatmul.mubr.f32.gmra.mrb[0].mxu0 %v127
  %v248 = vpop.f32.mrb[0].mxu0
  %v249 = vadd.f32 0.0, %v248
  %v250 = vpop.f32.mrb[0].mxu0
  %251 = vmatprep.mubr.f32.mxu0 0.0
  %252 = vmatmul.mubr.f32.gmra.mrb[0].mxu0 %v130
  %v253 = vpop.f32.mrb[0].mxu0
  %v254 = vadd.f32 0.0, %v253
  %v255 = vpop.f32.mrb[0].mxu0
  %256 = vmatprep.mubr.f32.mxu0 0.0
  %257 = vmatmul.mubr.f32.gmra.mrb[0].mxu0 %v133
  %v258 = vpop.f32.mrb[0].mxu0
  %v259 = vadd.f32 0.0, %v258
  %v260 = vpop.f32.mrb[0].mxu0
  %261 = vmatprep.mubr.f32.mxu0 0.0
  %262 = vmatmul.mubr.f32.gmra.mrb[0].mxu0 %v136
  %v263 = vpop.f32.mrb[0].mxu0
  %v264 = vadd.f32 0.0, %v263
  %v265 = vpop.f32.mrb[0].mxu0
  %266 = vmatprep.mubr.f32.mxu0 0.0
  %267 = vmatmul.mubr.f32.gmra.mrb[0].mxu0 %v139
  %v268 = vpop.f32.mrb[0].mxu0
  %v269 = vadd.f32 0.0, %v268
  %v270 = vpop.f32.mrb[0].mxu0
  %271 = vmatprep.mubr.f32.mxu0 0.0
  %272 = vmatmul.mubr.f32.gmra.mrb[0].mxu0 %v142
  %v273 = vpop.f32.mrb[0].mxu0
  %v274 = vadd.f32 0.0, %v273
  %v275 = vpop.f32.mrb[0].mxu0
  %276 = vmatprep.mubr.f32.mxu0 0.0
  %277 = vmatmul.mubr.f32.gmra.mrb[0].mxu0 %v145
  %v278 = vpop.f32.mrb[0].mxu0
  %v279 = vadd.f32 0.0, %v278
  %v280 = vpop.f32.mrb[0].mxu0
  %281 = vmatprep.mubr.f32.mxu0 0.0
  %282 = vmatmul.mubr.f32.gmra.mrb[0].mxu0 %v148
  %v283 = vpop.f32.mrb[0].mxu0
  %v284 = vadd.f32 0.0, %v283
  %v285 = vpop.f32.mrb[0].mxu0
  %286 = vmatprep.mubr.f32.mxu0 0.0
  %287 = vmatmul.mubr.f32.gmra.mrb[0].mxu0 %v151
  %v288 = vpop.f32.mrb[0].mxu0
  %v289 = vadd.f32 0.0, %v288
  %v290 = vpop.f32.mrb[0].mxu0
  %291 = vmatprep.mubr.f32.mxu0 0.0
  %292 = vmatmul.mubr.f32.gmra.mrb[0].mxu0 %v154
  %v293 = vpop.f32.mrb[0].mxu0
  %v294 = vadd.f32 0.0, %v293
  %v295 = vpop.f32.mrb[0].mxu0
  %296 = vmatprep.mubr.f32.mxu0 0.0
  %297 = vmatmul.mubr.f32.gmra.mrb[0].mxu0 %v157
  %v298 = vpop.f32.mrb[0].mxu0
  %v299 = vadd.f32 0.0, %v298
  %v300 = vpop.f32.mrb[0].mxu0
  %301 = vmatprep.mubr.f32.mxu0 0.0
  %302 = vmatmul.mubr.f32.gmra.mrb[0].mxu0 %v160
  %v303 = vpop.f32.mrb[0].mxu0
  %v304 = vadd.f32 0.0, %v303
  %v305 = vpop.f32.mrb[0].mxu0
  %306 = vdwg.mxu0
  %v339 = vunpack.c.l.b16 %v21
  %v340 = vunpack.c.h.b16 %v21
  %v341 = vunpack.c.l.b16 %v22
  %v342 = vunpack.c.l.b16 %v23
  %v343 = vunpack.c.h.b16 %v23
  %v344 = vunpack.c.l.b16 %v24
  %v345 = vunpack.c.l.b16 %v25
  %v346 = vunpack.c.h.b16 %v25
  %v347 = vunpack.c.l.b16 %v26
  %v348 = vunpack.c.l.b16 %v27
  %v349 = vunpack.c.h.b16 %v27
  %v350 = vunpack.c.l.b16 %v28
  %v351 = vunpack.c.l.b16 %v29
  %v352 = vunpack.c.h.b16 %v29
  %v353 = vunpack.c.l.b16 %v30
  %v354 = vunpack.c.l.b16 %v31
  %v355 = vunpack.c.h.b16 %v31
  %v356 = vunpack.c.l.b16 %v32
  %v357 = vunpack.c.l.b16 %v33
  %v358 = vunpack.c.h.b16 %v33
  %v359 = vunpack.c.l.b16 %v34
  %v360 = vunpack.c.l.b16 %v35
  %v361 = vunpack.c.h.b16 %v35
  %v362 = vunpack.c.l.b16 %v36
  %v363 = vunpack.c.l.b16 %v37
  %v364 = vunpack.c.h.b16 %v37
  %v365 = vunpack.c.l.b16 %v38
  %v366 = vunpack.c.l.b16 %v39
  %v367 = vunpack.c.h.b16 %v39
  %v368 = vunpack.c.l.b16 %v40
  %v369 = vunpack.c.l.b16 %v41
  %v370 = vunpack.c.h.b16 %v41
  %v371 = vunpack.c.l.b16 %v42
  %v372 = vunpack.c.l.b16 %v43
  %v373 = vunpack.c.h.b16 %v43
  %v374 = vunpack.c.l.b16 %v44
  %v375 = vunpack.c.l.b16 %v45
  %v376 = vunpack.c.h.b16 %v45
  %v377 = vunpack.c.l.b16 %v46
  %v378 = vunpack.c.l.b16 %v47
  %v379 = vunpack.c.h.b16 %v47
  %v380 = vunpack.c.l.b16 %v48
  %v381 = vunpack.c.l.b16 %v49
  %v382 = vunpack.c.h.b16 %v49
  %v383 = vunpack.c.l.b16 %v50
  %v384 = vunpack.c.l.b16 %v51
  %v385 = vunpack.c.h.b16 %v51
  %v386 = vunpack.c.l.b16 %v52
  %v387 = vpack.c.b16 %v342, %v339
  %v388 = vpack.c.b16 %v343, %v340
  %v389 = vpack.c.b16 %v344, %v341
  %v390 = vpack.c.b16 %v348, %v345
  %v391 = vpack.c.b16 %v349, %v346
  %v392 = vpack.c.b16 %v350, %v347
  %v393 = vpack.c.b16 %v354, %v351
  %v394 = vpack.c.b16 %v355, %v352
  %v395 = vpack.c.b16 %v356, %v353
  %v396 = vpack.c.b16 %v360, %v357
  %v397 = vpack.c.b16 %v361, %v358
  %v398 = vpack.c.b16 %v362, %v359
  %v399 = vpack.c.b16 %v366, %v363
  %v400 = vpack.c.b16 %v367, %v364
  %v401 = vpack.c.b16 %v368, %v365
  %v402 = vpack.c.b16 %v372, %v369
  %v403 = vpack.c.b16 %v373, %v370
  %v404 = vpack.c.b16 %v374, %v371
  %v405 = vpack.c.b16 %v378, %v375
  %v406 = vpack.c.b16 %v379, %v376
  %v407 = vpack.c.b16 %v380, %v377
  %v408 = vpack.c.b16 %v384, %v381
  %v409 = vpack.c.b16 %v385, %v382
  %v410 = vpack.c.b16 %v386, %v383
  %v463 = vunpack.c.l.b16 %v53
  %v464 = vunpack.c.l.b16 %v54
  %v465 = vunpack.c.l.b16 %v55
  %v466 = vunpack.c.l.b16 %v56
  %v467 = vunpack.c.l.b16 %v57
  %v468 = vunpack.c.l.b16 %v58
  %v469 = vunpack.c.l.b16 %v59
  %v470 = vunpack.c.l.b16 %v60
  %v471 = vunpack.c.l.b16 %v61
  %v472 = vunpack.c.l.b16 %v62
  %v473 = vunpack.c.l.b16 %v63
  %v474 = vunpack.c.l.b16 %v64
  %v475 = vunpack.c.l.b16 %v65
  %v476 = vunpack.c.l.b16 %v66
  %v477 = vunpack.c.l.b16 %v67
  %v478 = vunpack.c.l.b16 %v68
  %v479 = vunpack.c.l.b16 %v69
  %v480 = vunpack.c.l.b16 %v70
  %v481 = vunpack.c.l.b16 %v71
  %v482 = vunpack.c.l.b16 %v72
  %v483 = vunpack.c.l.b16 %v73
  %v484 = vunpack.c.l.b16 %v74
  %v485 = vunpack.c.l.b16 %v75
  %v486 = vunpack.c.l.b16 %v76
  %v487 = vunpack.c.l.b16 %v77
  %v488 = vunpack.c.l.b16 %v78
  %v489 = vunpack.c.l.b16 %v79
  %v490 = vunpack.c.l.b16 %v80
  %v491 = vunpack.c.l.b16 %v81
  %v492 = vunpack.c.l.b16 %v82
  %v493 = vunpack.c.l.b16 %v83
  %v494 = vunpack.c.l.b16 %v84
  %v495 = vunpack.c.l.b16 %v85
  %v496 = vunpack.c.l.b16 %v86
  %v497 = vunpack.c.l.b16 %v87
  %v498 = vunpack.c.l.b16 %v88
  %v499 = vpack.c.b16 %v464, %v463
  %v500 = vpack.c.b16 %v466, %v465
  %v501 = vpack.c.b16 %v468, %v467
  %v502 = vpack.c.b16 %v470, %v469
  %v503 = vpack.c.b16 %v472, %v471
  %v504 = vpack.c.b16 %v474, %v473
  %v505 = vpack.c.b16 %v476, %v475
  %v506 = vpack.c.b16 %v478, %v477
  %v507 = vpack.c.b16 %v480, %v479
  %v508 = vpack.c.b16 %v482, %v481
  %v509 = vpack.c.b16 %v484, %v483
  %v510 = vpack.c.b16 %v486, %v485
  %v511 = vpack.c.b16 %v488, %v487
  %v512 = vpack.c.b16 %v490, %v489
  %v513 = vpack.c.b16 %v492, %v491
  %v514 = vpack.c.b16 %v494, %v493
  %v515 = vpack.c.b16 %v496, %v495
  %v516 = vpack.c.b16 %v498, %v497
  %vm535 = vcmask 261120
  %v537 = vsel %vm535, %v389, 0
  %v540 = vsel %vm535, %v392, 0
  %v543 = vsel %vm535, %v395, 0
  %v546 = vsel %vm535, %v398, 0
  %v549 = vsel %vm535, %v401, 0
  %v552 = vsel %vm535, %v404, 0
  %v555 = vsel %vm535, %v407, 0
  %v558 = vsel %vm535, %v410, 0
  %560 = vmatprep.subr.bf16.mxu0 0
  %561 = vmatpush1.bf16.msra.mxu0 %v499
  %562 = vmatprep.subr.bf16.mxu0 0
  %563 = vmatpush1.bf16.msra.mxu0 %v500
  %564 = vmatprep.subr.bf16.mxu0 0
  %565 = vmatpush1.bf16.msra.mxu0 %v501
  %566 = vmatprep.subr.bf16.mxu0 0
  %567 = vmatpush1.bf16.msra.mxu0 %v502
  %568 = vmatprep.subr.bf16.mxu0 0
  %569 = vmatpush1.bf16.msra.mxu0 %v503
  %570 = vmatprep.subr.bf16.mxu0 0
  %571 = vmatpush1.bf16.msra.mxu0 %v504
  %572 = vmatprep.subr.bf16.mxu0 0
  %573 = vmatpush1.bf16.msra.mxu0 %v505
  %574 = vmatprep.subr.bf16.mxu0 0
  %575 = vmatpush1.bf16.msra.mxu0 %v506
  %576 = vmatprep.subr.bf16.mxu0 0
  %577 = vmatpush1.bf16.msra.mxu0 %v507
  %578 = vmatprep.subr.bf16.mxu0 0
  %579 = vmatpush1.bf16.msra.mxu0 %v508
  %580 = vmatprep.subr.bf16.mxu0 0
  %581 = vmatpush1.bf16.msra.mxu0 %v509
  %582 = vmatprep.subr.bf16.mxu0 0
  %583 = vmatpush1.bf16.msra.mxu0 %v510
  %584 = vmatprep.subr.bf16.mxu0 0
  %585 = vmatpush1.bf16.msra.mxu0 %v511
  %586 = vmatprep.subr.bf16.mxu0 0
  %587 = vmatpush1.bf16.msra.mxu0 %v512
  %588 = vmatprep.subr.bf16.mxu0 0
  %589 = vmatpush1.bf16.msra.mxu0 %v513
  %590 = vmatprep.subr.bf16.mxu0 0
  %591 = vmatpush1.bf16.msra.mxu0 %v514
  %592 = vmatprep.mubr.bf16.mxu0 %v388
  %593 = vmatmul.mubr.bf16.gmra.mrb[0].mxu0 %v387
  %v594 = vpop.f32.mrb[0].mxu0
  %v595 = vadd.f32 %v229, %v594
  %v596 = vpop.f32.mrb[0].mxu0
  %v597 = vpop.f32.mrb[0].mxu0
  %v598 = vadd.f32 %v234, %v597
  %v599 = vpop.f32.mrb[0].mxu0
  %600 = vmatprep.mubr.bf16.mxu0 %v391
  %601 = vmatmul.mubr.bf16.gmra.mrb[0].mxu0 %v390
  %v602 = vpop.f32.mrb[0].mxu0
  %v603 = vadd.f32 %v239, %v602
  %v604 = vpop.f32.mrb[0].mxu0
  %v605 = vpop.f32.mrb[0].mxu0
  %v606 = vadd.f32 %v244, %v605
  %v607 = vpop.f32.mrb[0].mxu0
  %608 = vmatprep.mubr.bf16.mxu0 %v394
  %609 = vmatmul.mubr.bf16.gmra.mrb[0].mxu0 %v393
  %v610 = vpop.f32.mrb[0].mxu0
  %v611 = vadd.f32 %v249, %v610
  %v612 = vpop.f32.mrb[0].mxu0
  %v613 = vpop.f32.mrb[0].mxu0
  %v614 = vadd.f32 %v254, %v613
  %v615 = vpop.f32.mrb[0].mxu0
  %616 = vmatprep.mubr.bf16.mxu0 %v397
  %617 = vmatmul.mubr.bf16.gmra.mrb[0].mxu0 %v396
  %v618 = vpop.f32.mrb[0].mxu0
  %v619 = vadd.f32 %v259, %v618
  %v620 = vpop.f32.mrb[0].mxu0
  %v621 = vpop.f32.mrb[0].mxu0
  %v622 = vadd.f32 %v264, %v621
  %v623 = vpop.f32.mrb[0].mxu0
  %624 = vmatprep.mubr.bf16.mxu0 %v400
  %625 = vmatmul.mubr.bf16.gmra.mrb[0].mxu0 %v399
  %v626 = vpop.f32.mrb[0].mxu0
  %v627 = vadd.f32 %v269, %v626
  %v628 = vpop.f32.mrb[0].mxu0
  %v629 = vpop.f32.mrb[0].mxu0
  %v630 = vadd.f32 %v274, %v629
  %v631 = vpop.f32.mrb[0].mxu0
  %632 = vmatprep.mubr.bf16.mxu0 %v403
  %633 = vmatmul.mubr.bf16.gmra.mrb[0].mxu0 %v402
  %v634 = vpop.f32.mrb[0].mxu0
  %v635 = vadd.f32 %v279, %v634
  %v636 = vpop.f32.mrb[0].mxu0
  %v637 = vpop.f32.mrb[0].mxu0
  %v638 = vadd.f32 %v284, %v637
  %v639 = vpop.f32.mrb[0].mxu0
  %640 = vmatprep.mubr.bf16.mxu0 %v406
  %641 = vmatmul.mubr.bf16.gmra.mrb[0].mxu0 %v405
  %v642 = vpop.f32.mrb[0].mxu0
  %v643 = vadd.f32 %v289, %v642
  %v644 = vpop.f32.mrb[0].mxu0
  %v645 = vpop.f32.mrb[0].mxu0
  %v646 = vadd.f32 %v294, %v645
  %v647 = vpop.f32.mrb[0].mxu0
  %648 = vmatprep.mubr.bf16.mxu0 %v409
  %649 = vmatmul.mubr.bf16.gmra.mrb[0].mxu0 %v408
  %v650 = vpop.f32.mrb[0].mxu0
  %v651 = vadd.f32 %v299, %v650
  %v652 = vpop.f32.mrb[0].mxu0
  %v653 = vpop.f32.mrb[0].mxu0
  %v654 = vadd.f32 %v304, %v653
  %v655 = vpop.f32.mrb[0].mxu0
  %656 = vdwg.mxu0
  %657 = vmatprep.subr.bf16.mxu0 0
  %658 = vmatpush1.bf16.msra.mxu0 %v515
  %659 = vmatprep.subr.bf16.mxu0 0
  %660 = vmatpush1.bf16.msra.mxu0 %v516
  %661 = vmatprep.subr.bf16.mxu0 0
  %662 = vmatpush1.bf16.msra.mxu0 0
  %663 = vmatprep.subr.bf16.mxu0 0
  %664 = vmatpush1.bf16.msra.mxu0 0
  %665 = vmatprep.subr.bf16.mxu0 0
  %666 = vmatpush1.bf16.msra.mxu0 0
  %667 = vmatprep.subr.bf16.mxu0 0
  %668 = vmatpush1.bf16.msra.mxu0 0
  %669 = vmatprep.subr.bf16.mxu0 0
  %670 = vmatpush1.bf16.msra.mxu0 0
  %671 = vmatprep.subr.bf16.mxu0 0
  %672 = vmatpush1.bf16.msra.mxu0 0
  %673 = vmatprep.subr.bf16.mxu0 0
  %674 = vmatpush1.bf16.msra.mxu0 0
  %675 = vmatprep.subr.bf16.mxu0 0
  %676 = vmatpush1.bf16.msra.mxu0 0
  %677 = vmatprep.subr.bf16.mxu0 0
  %678 = vmatpush1.bf16.msra.mxu0 0
  %679 = vmatprep.subr.bf16.mxu0 0
  %680 = vmatpush1.bf16.msra.mxu0 0
  %681 = vmatprep.subr.bf16.mxu0 0
  %682 = vmatpush1.bf16.msra.mxu0 0
  %683 = vmatprep.subr.bf16.mxu0 0
  %684 = vmatpush1.bf16.msra.mxu0 0
  %685 = vmatprep.subr.bf16.mxu0 0
  %686 = vmatpush1.bf16.msra.mxu0 0
  %687 = vmatprep.subr.bf16.mxu0 0
  %688 = vmatpush1.bf16.msra.mxu0 0
  %689 = vmatprep.mubr.bf16.mxu0 0
  %690 = vmatmul.mubr.bf16.gmra.mrb[0].mxu0 %v537
  %v691 = vpop.f32.mrb[0].mxu0
  %v692 = vadd.f32 %v595, %v691
  %v693 = vpop.f32.mrb[0].mxu0
  %v694 = vpop.f32.mrb[0].mxu0
  %v695 = vadd.f32 %v598, %v694
  %v696 = vpop.f32.mrb[0].mxu0
  %697 = vmatprep.mubr.bf16.mxu0 0
  %698 = vmatmul.mubr.bf16.gmra.mrb[0].mxu0 %v540
  %v699 = vpop.f32.mrb[0].mxu0
  %v700 = vadd.f32 %v603, %v699
  %v701 = vpop.f32.mrb[0].mxu0
  %v702 = vpop.f32.mrb[0].mxu0
  %v703 = vadd.f32 %v606, %v702
  %v704 = vpop.f32.mrb[0].mxu0
  %705 = vmatprep.mubr.bf16.mxu0 0
  %706 = vmatmul.mubr.bf16.gmra.mrb[0].mxu0 %v543
  %v707 = vpop.f32.mrb[0].mxu0
  %v708 = vadd.f32 %v611, %v707
  %v709 = vpop.f32.mrb[0].mxu0
  %v710 = vpop.f32.mrb[0].mxu0
  %v711 = vadd.f32 %v614, %v710
  %v712 = vpop.f32.mrb[0].mxu0
  %713 = vmatprep.mubr.bf16.mxu0 0
  %714 = vmatmul.mubr.bf16.gmra.mrb[0].mxu0 %v546
  %v715 = vpop.f32.mrb[0].mxu0
  %v716 = vadd.f32 %v619, %v715
  %v717 = vpop.f32.mrb[0].mxu0
  %v718 = vpop.f32.mrb[0].mxu0
  %v719 = vadd.f32 %v622, %v718
  %v720 = vpop.f32.mrb[0].mxu0
  %721 = vmatprep.mubr.bf16.mxu0 0
  %722 = vmatmul.mubr.bf16.gmra.mrb[0].mxu0 %v549
  %v723 = vpop.f32.mrb[0].mxu0
  %v724 = vadd.f32 %v627, %v723
  %v725 = vpop.f32.mrb[0].mxu0
  %v726 = vpop.f32.mrb[0].mxu0
  %v727 = vadd.f32 %v630, %v726
  %v728 = vpop.f32.mrb[0].mxu0
  %729 = vmatprep.mubr.bf16.mxu0 0
  %730 = vmatmul.mubr.bf16.gmra.mrb[0].mxu0 %v552
  %v731 = vpop.f32.mrb[0].mxu0
  %v732 = vadd.f32 %v635, %v731
  %v733 = vpop.f32.mrb[0].mxu0
  %v734 = vpop.f32.mrb[0].mxu0
  %v735 = vadd.f32 %v638, %v734
  %v736 = vpop.f32.mrb[0].mxu0
  %737 = vmatprep.mubr.bf16.mxu0 0
  %738 = vmatmul.mubr.bf16.gmra.mrb[0].mxu0 %v555
  %v739 = vpop.f32.mrb[0].mxu0
  %v740 = vadd.f32 %v643, %v739
  %v741 = vpop.f32.mrb[0].mxu0
  %v742 = vpop.f32.mrb[0].mxu0
  %v743 = vadd.f32 %v646, %v742
  %v744 = vpop.f32.mrb[0].mxu0
  %745 = vmatprep.mubr.bf16.mxu0 0
  %746 = vmatmul.mubr.bf16.gmra.mrb[0].mxu0 %v558
  %v747 = vpop.f32.mrb[0].mxu0
  %v748 = vadd.f32 %v651, %v747
  %v749 = vpop.f32.mrb[0].mxu0
  %v750 = vpop.f32.mrb[0].mxu0
  %v751 = vadd.f32 %v654, %v750
  %v752 = vpop.f32.mrb[0].mxu0
  %753 = vdwg.mxu0
  %v754 = vld [vmem:[%s4] sm:$0x1]
  %v756 = vlaneseq
  %v757 = vshrl.u32 %v756, 7
  %v758 = vsub.s32 0, %v757
  %v759 = vrot.slane %v754, %v758
  %v761 = vadd.f32 %v692, %v759
  %v762 = vadd.f32 %v695, %v759
  %v763 = vadd.f32 %v700, %v759
  %v764 = vadd.f32 %v703, %v759
  %v765 = vadd.f32 %v708, %v759
  %v766 = vadd.f32 %v711, %v759
  %v767 = vadd.f32 %v716, %v759
  %v768 = vadd.f32 %v719, %v759
  %v769 = vadd.f32 %v724, %v759
  %v770 = vadd.f32 %v727, %v759
  %v771 = vadd.f32 %v732, %v759
  %v772 = vadd.f32 %v735, %v759
  %v773 = vadd.f32 %v740, %v759
  %v774 = vadd.f32 %v743, %v759
  %v775 = vadd.f32 %v748, %v759
  %v776 = vadd.f32 %v751, %v759
  %777 = vst [vmem:[%s5] sm:$0xff] %v761
  %778 = vst [vmem:[%s5 + $0x8] sm:$0xff] %v762
  %779 = vst [vmem:[%s5 + $0x10] sm:$0xff] %v763
  %780 = vst [vmem:[%s5 + $0x18] sm:$0xff] %v764
  %781 = vst [vmem:[%s5 + $0x20] sm:$0xff] %v765
  %782 = vst [vmem:[%s5 + $0x28] sm:$0xff] %v766
  %783 = vst [vmem:[%s5 + $0x30] sm:$0xff] %v767
  %784 = vst [vmem:[%s5 + $0x38] sm:$0xff] %v768
  %785 = vst [vmem:[%s5 + $0x40] sm:$0xff] %v769
  %786 = vst [vmem:[%s5 + $0x48] sm:$0xff] %v770
  %787 = vst [vmem:[%s5 + $0x50] sm:$0xff] %v771
  %788 = vst [vmem:[%s5 + $0x58] sm:$0xff] %v772
  %789 = vst [vmem:[%s5 + $0x60] sm:$0xff] %v773
  %790 = vst [vmem:[%s5 + $0x68] sm:$0xff] %v774
  %791 = vst [vmem:[%s5 + $0x70] sm:$0xff] %v775
  %792 = vst [vmem:[%s5 + $0x78] sm:$0xff] %v776
  // Predicated region
  $region22: #{closed_call.54} parent=0 // pred_check
    _
  $region23: #{closed_call.54} parent=0 // pred_check_branch
    %794 = sbr.rel (0) target = $region25
  $region24: #{closed_call.54} parent=0 // pred_region
    _
  $region25: #{closed_call.54} parent=0 // pred_fallthru
    _
  // Predicated region
  $region26: #{closed_call.54} parent=0 // pred_check
    _
  $region27: #{closed_call.54} parent=0 // pred_check_branch
    %796 = sbr.rel (0) target = $region29
  $region28: #{closed_call.54} parent=0 // pred_region
    _
  $region29: #{closed_call.54} parent=0 // pred_fallthru
    _

// kernel: forward.8
$region0: #{forward.8}
  #allocation0 [shape = 'u32[]', space=smem, size = 0x4, offset = 0x4, fixed_abs, tag = 'smem constant byte address 0x4 - core index']
  #allocation1 [shape = 'u32[144,128]{1,0:T(1,128)}', space=vmem, size = 0x12000, scoped, tag = 'internal scratch']
  %s0 = inlined_call_operand.vmem [shape: bf16[32,288], index: 0, kind: input, shape index: {}]
  %s1 = inlined_call_operand.vmem [shape: bf16[288,128], index: 1, kind: input, shape index: {}]
  %s2 = inlined_call_operand.vmem [shape: f32[1,128], index: 2, kind: input, shape index: {}]
  %s3 = inlined_call_operand.vmem [shape: f32[32,128], index: 3, kind: output, shape index: {}]
  %s4 = sld [smem:[#allocation0]]
  $region22: #{forward.8} parent=0
    _
  %s6 = ssub.s32 1, %s4
  %s7 = scalar_select 0, %s6, %s4
  // Predicated region
  $region2: #{forward.8} parent=0 // pred_check
    _
  $region3: #{forward.8} parent=0 // pred_check_branch
    %9 = sbr.rel (0) target = $region5
  $region4: #{forward.8} parent=0 // pred_region
    _
  $region5: #{forward.8} parent=0 // pred_fallthru
    _
  // Predicated region
  $region6: #{forward.8} parent=0 // pred_check
    _
  $region7: #{forward.8} parent=0 // pred_check_branch
    %11 = sbr.rel (0) target = $region9
  $region8: #{forward.8} parent=0 // pred_region
    _
  $region9: #{forward.8} parent=0 // pred_fallthru
    _
  // Predicated region
  $region10: #{forward.8} parent=0 // pred_check
    _
  $region11: #{forward.8} parent=0 // pred_check_branch
    %13 = sbr.rel (0) target = $region13
  $region12: #{forward.8} parent=0 // pred_region
    _
  $region13: #{forward.8} parent=0 // pred_fallthru
    _
  %v15 = vld [vmem:[%s0] sm:$0xff]
  %v16 = vld [vmem:[%s0 + $0x8] sm:$0xf]
  %v17 = vld [vmem:[%s0 + $0xc] sm:$0xff]
  %v18 = vld [vmem:[%s0 + $0x14] sm:$0xf]
  %v19 = vld [vmem:[%s0 + $0x18] sm:$0xff]
  %v20 = vld [vmem:[%s0 + $0x20] sm:$0xf]
  %v21 = vld [vmem:[%s0 + $0x24] sm:$0xff]
  %v22 = vld [vmem:[%s0 + $0x2c] sm:$0xf]
  %v23 = vmax.bf16 %v15, 0
  %v24 = vmax.bf16 %v16, 0
  %v25 = vmax.bf16 %v17, 0
  %v26 = vmax.bf16 %v18, 0
  %v27 = vmax.bf16 %v19, 0
  %v28 = vmax.bf16 %v20, 0
  %v29 = vmax.bf16 %v21, 0
  %v30 = vmax.bf16 %v22, 0
  %v31 = vld [vmem:[%s1] sm:$0xf]
  %v32 = vld [vmem:[%s1 + $0x4] sm:$0xf]
  %v33 = vld [vmem:[%s1 + $0x8] sm:$0xf]
  %v34 = vld [vmem:[%s1 + $0xc] sm:$0xf]
  %v35 = vld [vmem:[%s1 + $0x10] sm:$0xf]
  %v36 = vld [vmem:[%s1 + $0x14] sm:$0xf]
  %v37 = vld [vmem:[%s1 + $0x18] sm:$0xf]
  %v38 = vld [vmem:[%s1 + $0x1c] sm:$0xf]
  %v39 = vld [vmem:[%s1 + $0x20] sm:$0xf]
  %v40 = vld [vmem:[%s1 + $0x24] sm:$0xf]
  %v41 = vld [vmem:[%s1 + $0x28] sm:$0xf]
  %v42 = vld [vmem:[%s1 + $0x2c] sm:$0xf]
  %v43 = vld [vmem:[%s1 + $0x30] sm:$0xf]
  %v44 = vld [vmem:[%s1 + $0x34] sm:$0xf]
  %v45 = vld [vmem:[%s1 + $0x38] sm:$0xf]
  %v46 = vld [vmem:[%s1 + $0x3c] sm:$0xf]
  %v47 = vld [vmem:[%s1 + $0x40] sm:$0xf]
  %v48 = vld [vmem:[%s1 + $0x44] sm:$0xf]
  %v49 = vld [vmem:[%s1 + $0x48] sm:$0xf]
  %v50 = vld [vmem:[%s1 + $0x4c] sm:$0xf]
  %v51 = vld [vmem:[%s1 + $0x50] sm:$0xf]
  %v52 = vld [vmem:[%s1 + $0x54] sm:$0xf]
  %v53 = vld [vmem:[%s1 + $0x58] sm:$0xf]
  %v54 = vld [vmem:[%s1 + $0x5c] sm:$0xf]
  %v55 = vld [vmem:[%s1 + $0x60] sm:$0xf]
  %v56 = vld [vmem:[%s1 + $0x64] sm:$0xf]
  %v57 = vld [vmem:[%s1 + $0x68] sm:$0xf]
  %v58 = vld [vmem:[%s1 + $0x6c] sm:$0xf]
  %v59 = vld [vmem:[%s1 + $0x70] sm:$0xf]
  %v60 = vld [vmem:[%s1 + $0x74] sm:$0xf]
  %v61 = vld [vmem:[%s1 + $0x78] sm:$0xf]
  %v62 = vld [vmem:[%s1 + $0x7c] sm:$0xf]
  %v63 = vld [vmem:[%s1 + $0x80] sm:$0xf]
  %v64 = vld [vmem:[%s1 + $0x84] sm:$0xf]
  %v65 = vld [vmem:[%s1 + $0x88] sm:$0xf]
  %v66 = vld [vmem:[%s1 + $0x8c] sm:$0xf]
  %v67 = vld [vmem:[%s2] sm:$0x1]
  %v69 = vlaneseq
  %v70 = vshrl.u32 %v69, 7
  %v71 = vsub.s32 0, %v70
  %v72 = vrot.slane %v67, %v71
  %v82 = vunpack.c.l.b16 %v23
  %v83 = vunpack.c.h.b16 %v23
  %v84 = vunpack.c.l.b16 %v24
  %v85 = vunpack.c.l.b16 %v25
  %v86 = vunpack.c.h.b16 %v25
  %v87 = vunpack.c.l.b16 %v26
  %v88 = vunpack.c.l.b16 %v27
  %v89 = vunpack.c.h.b16 %v27
  %v90 = vunpack.c.l.b16 %v28
  %v91 = vunpack.c.l.b16 %v29
  %v92 = vunpack.c.h.b16 %v29
  %v93 = vunpack.c.l.b16 %v30
  %v94 = vpack.c.b16 %v85, %v82
  %v95 = vpack.c.b16 %v86, %v83
  %v96 = vpack.c.b16 %v87, %v84
  %v97 = vpack.c.b16 %v91, %v88
  %v98 = vpack.c.b16 %v92, %v89
  %v99 = vpack.c.b16 %v93, %v90
  %v140 = vunpack.c.l.b16 %v31
  %v141 = vunpack.c.l.b16 %v32
  %v142 = vunpack.c.l.b16 %v33
  %v143 = vunpack.c.l.b16 %v34
  %v144 = vunpack.c.l.b16 %v35
  %v145 = vunpack.c.l.b16 %v36
  %v146 = vunpack.c.l.b16 %v37
  %v147 = vunpack.c.l.b16 %v38
  %v148 = vunpack.c.l.b16 %v39
  %v149 = vunpack.c.l.b16 %v40
  %v150 = vunpack.c.l.b16 %v41
  %v151 = vunpack.c.l.b16 %v42
  %v152 = vunpack.c.l.b16 %v43
  %v153 = vunpack.c.l.b16 %v44
  %v154 = vunpack.c.l.b16 %v45
  %v155 = vunpack.c.l.b16 %v46
  %v156 = vunpack.c.l.b16 %v47
  %v157 = vunpack.c.l.b16 %v48
  %v158 = vunpack.c.l.b16 %v49
  %v159 = vunpack.c.l.b16 %v50
  %v160 = vunpack.c.l.b16 %v51
  %v161 = vunpack.c.l.b16 %v52
  %v162 = vunpack.c.l.b16 %v53
  %v163 = vunpack.c.l.b16 %v54
  %v164 = vunpack.c.l.b16 %v55
  %v165 = vunpack.c.l.b16 %v56
  %v166 = vunpack.c.l.b16 %v57
  %v167 = vunpack.c.l.b16 %v58
  %v168 = vunpack.c.l.b16 %v59
  %v169 = vunpack.c.l.b16 %v60
  %v170 = vunpack.c.l.b16 %v61
  %v171 = vunpack.c.l.b16 %v62
  %v172 = vunpack.c.l.b16 %v63
  %v173 = vunpack.c.l.b16 %v64
  %v174 = vunpack.c.l.b16 %v65
  %v175 = vunpack.c.l.b16 %v66
  %v176 = vpack.c.b16 %v141, %v140
  %v177 = vpack.c.b16 %v143, %v142
  %v178 = vpack.c.b16 %v145, %v144
  %v179 = vpack.c.b16 %v147, %v146
  %v180 = vpack.c.b16 %v149, %v148
  %v181 = vpack.c.b16 %v151, %v150
  %v182 = vpack.c.b16 %v153, %v152
  %v183 = vpack.c.b16 %v155, %v154
  %v184 = vpack.c.b16 %v157, %v156
  %v185 = vpack.c.b16 %v159, %v158
  %v186 = vpack.c.b16 %v161, %v160
  %v187 = vpack.c.b16 %v163, %v162
  %v188 = vpack.c.b16 %v165, %v164
  %v189 = vpack.c.b16 %v167, %v166
  %v190 = vpack.c.b16 %v169, %v168
  %v191 = vpack.c.b16 %v171, %v170
  %v192 = vpack.c.b16 %v173, %v172
  %v193 = vpack.c.b16 %v175, %v174
  %vm212 = vcmask 261120
  %v214 = vsel %vm212, %v96, 0
  %v217 = vsel %vm212, %v99, 0
  %219 = vmatprep.subr.bf16.mxu0 0
  %220 = vmatpush1.bf16.msra.mxu0 %v176
  %221 = vmatprep.subr.bf16.mxu0 0
  %222 = vmatpush1.bf16.msra.mxu0 %v177
  %223 = vmatprep.subr.bf16.mxu0 0
  %224 = vmatpush1.bf16.msra.mxu0 %v178
  %225 = vmatprep.subr.bf16.mxu0 0
  %226 = vmatpush1.bf16.msra.mxu0 %v179
  %227 = vmatprep.subr.bf16.mxu0 0
  %228 = vmatpush1.bf16.msra.mxu0 %v180
  %229 = vmatprep.subr.bf16.mxu0 0
  %230 = vmatpush1.bf16.msra.mxu0 %v181
  %231 = vmatprep.subr.bf16.mxu0 0
  %232 = vmatpush1.bf16.msra.mxu0 %v182
  %233 = vmatprep.subr.bf16.mxu0 0
  %234 = vmatpush1.bf16.msra.mxu0 %v183
  %235 = vmatprep.subr.bf16.mxu0 0
  %236 = vmatpush1.bf16.msra.mxu0 %v184
  %237 = vmatprep.subr.bf16.mxu0 0
  %238 = vmatpush1.bf16.msra.mxu0 %v185
  %239 = vmatprep.subr.bf16.mxu0 0
  %240 = vmatpush1.bf16.msra.mxu0 %v186
  %241 = vmatprep.subr.bf16.mxu0 0
  %242 = vmatpush1.bf16.msra.mxu0 %v187
  %243 = vmatprep.subr.bf16.mxu0 0
  %244 = vmatpush1.bf16.msra.mxu0 %v188
  %245 = vmatprep.subr.bf16.mxu0 0
  %246 = vmatpush1.bf16.msra.mxu0 %v189
  %247 = vmatprep.subr.bf16.mxu0 0
  %248 = vmatpush1.bf16.msra.mxu0 %v190
  %249 = vmatprep.subr.bf16.mxu0 0
  %250 = vmatpush1.bf16.msra.mxu0 %v191
  %251 = vmatprep.mubr.bf16.mxu0 %v95
  %252 = vmatmul.mubr.bf16.gmra.mrb[0].mxu0 %v94
  %v253 = vpop.f32.mrb[0].mxu0
  %v254 = vadd.f32 %v72, %v253
  %v255 = vpop.f32.mrb[0].mxu0
  %v256 = vpop.f32.mrb[0].mxu0
  %v257 = vadd.f32 %v72, %v256
  %v258 = vpop.f32.mrb[0].mxu0
  %259 = vmatprep.mubr.bf16.mxu0 %v98
  %260 = vmatmul.mubr.bf16.gmra.mrb[0].mxu0 %v97
  %v261 = vpop.f32.mrb[0].mxu0
  %v262 = vadd.f32 %v72, %v261
  %v263 = vpop.f32.mrb[0].mxu0
  %v264 = vpop.f32.mrb[0].mxu0
  %v265 = vadd.f32 %v72, %v264
  %v266 = vpop.f32.mrb[0].mxu0
  %267 = vdwg.mxu0
  %268 = vmatprep.subr.bf16.mxu0 0
  %269 = vmatpush1.bf16.msra.mxu0 %v192
  %270 = vmatprep.subr.bf16.mxu0 0
  %271 = vmatpush1.bf16.msra.mxu0 %v193
  %272 = vmatprep.subr.bf16.mxu0 0
  %273 = vmatpush1.bf16.msra.mxu0 0
  %274 = vmatprep.subr.bf16.mxu0 0
  %275 = vmatpush1.bf16.msra.mxu0 0
  %276 = vmatprep.subr.bf16.mxu0 0
  %277 = vmatpush1.bf16.msra.mxu0 0
  %278 = vmatprep.subr.bf16.mxu0 0
  %279 = vmatpush1.bf16.msra.mxu0 0
  %280 = vmatprep.subr.bf16.mxu0 0
  %281 = vmatpush1.bf16.msra.mxu0 0
  %282 = vmatprep.subr.bf16.mxu0 0
  %283 = vmatpush1.bf16.msra.mxu0 0
  %284 = vmatprep.subr.bf16.mxu0 0
  %285 = vmatpush1.bf16.msra.mxu0 0
  %286 = vmatprep.subr.bf16.mxu0 0
  %287 = vmatpush1.bf16.msra.mxu0 0
  %288 = vmatprep.subr.bf16.mxu0 0
  %289 = vmatpush1.bf16.msra.mxu0 0
  %290 = vmatprep.subr.bf16.mxu0 0
  %291 = vmatpush1.bf16.msra.mxu0 0
  %292 = vmatprep.subr.bf16.mxu0 0
  %293 = vmatpush1.bf16.msra.mxu0 0
  %294 = vmatprep.subr.bf16.mxu0 0
  %295 = vmatpush1.bf16.msra.mxu0 0
  %296 = vmatprep.subr.bf16.mxu0 0
  %297 = vmatpush1.bf16.msra.mxu0 0
  %298 = vmatprep.subr.bf16.mxu0 0
  %299 = vmatpush1.bf16.msra.mxu0 0
  %300 = vmatprep.mubr.bf16.mxu0 0
  %301 = vmatmul.mubr.bf16.gmra.mrb[0].mxu0 %v214
  %v302 = vpop.f32.mrb[0].mxu0
  %v303 = vadd.f32 %v254, %v302
  %v304 = vpop.f32.mrb[0].mxu0
  %v305 = vpop.f32.mrb[0].mxu0
  %v306 = vadd.f32 %v257, %v305
  %v307 = vpop.f32.mrb[0].mxu0
  %308 = vmatprep.mubr.bf16.mxu0 0
  %309 = vmatmul.mubr.bf16.gmra.mrb[0].mxu0 %v217
  %v310 = vpop.f32.mrb[0].mxu0
  %v311 = vadd.f32 %v262, %v310
  %v312 = vpop.f32.mrb[0].mxu0
  %v313 = vpop.f32.mrb[0].mxu0
  %v314 = vadd.f32 %v265, %v313
  %v315 = vpop.f32.mrb[0].mxu0
  %316 = vdwg.mxu0
  %317 = vst [vmem:[%s3] sm:$0xff] %v303
  %318 = vst [vmem:[%s3 + $0x8] sm:$0xff] %v306
  %319 = vst [vmem:[%s3 + $0x10] sm:$0xff] %v311
  %320 = vst [vmem:[%s3 + $0x18] sm:$0xff] %v314
  // Predicated region
  $region14: #{forward.8} parent=0 // pred_check
    _
  $region15: #{forward.8} parent=0 // pred_check_branch
    %322 = sbr.rel (0) target = $region17
  $region16: #{forward.8} parent=0 // pred_region
    _
  $region17: #{forward.8} parent=0 // pred_fallthru
    _
  // Predicated region
  $region18: #{forward.8} parent=0 // pred_check
    _
  $region19: #{forward.8} parent=0 // pred_check_branch
    %324 = sbr.rel (0) target = $region21
  $region20: #{forward.8} parent=0 // pred_region
    _
  $region21: #{forward.8} parent=0 // pred_fallthru
    _

// kernel: forward.9
$region0: #{forward.9}
  #allocation0 [shape = 'u32[]', space=smem, size = 0x4, offset = 0x4, fixed_abs, tag = 'smem constant byte address 0x4 - core index']
  #allocation1 [shape = 'u32[144,128]{1,0:T(1,128)}', space=vmem, size = 0x12000, scoped, tag = 'internal scratch']
  %s0 = inlined_call_operand.vmem [shape: bf16[32,576], index: 0, kind: input, shape index: {}]
  %s1 = inlined_call_operand.vmem [shape: bf16[576,128], index: 1, kind: input, shape index: {}]
  %s2 = inlined_call_operand.vmem [shape: f32[1,128], index: 2, kind: input, shape index: {}]
  %s3 = inlined_call_operand.vmem [shape: f32[32,128], index: 3, kind: output, shape index: {}]
  %s4 = sld [smem:[#allocation0]]
  $region22: #{forward.9} parent=0
    _
  %s6 = ssub.s32 1, %s4
  %s7 = scalar_select 0, %s6, %s4
  // Predicated region
  $region2: #{forward.9} parent=0 // pred_check
    _
  $region3: #{forward.9} parent=0 // pred_check_branch
    %9 = sbr.rel (0) target = $region5
  $region4: #{forward.9} parent=0 // pred_region
    _
  $region5: #{forward.9} parent=0 // pred_fallthru
    _
  // Predicated region
  $region6: #{forward.9} parent=0 // pred_check
    _
  $region7: #{forward.9} parent=0 // pred_check_branch
    %11 = sbr.rel (0) target = $region9
  $region8: #{forward.9} parent=0 // pred_region
    _
  $region9: #{forward.9} parent=0 // pred_fallthru
    _
  // Predicated region
  $region10: #{forward.9} parent=0 // pred_check
    _
  $region11: #{forward.9} parent=0 // pred_check_branch
    %13 = sbr.rel (0) target = $region13
  $region12: #{forward.9} parent=0 // pred_region
    _
  $region13: #{forward.9} parent=0 // pred_fallthru
    _
  %v15 = vld [vmem:[%s0] sm:$0xff]
  %v16 = vld [vmem:[%s0 + $0x8] sm:$0xff]
  %v17 = vld [vmem:[%s0 + $0x10] sm:$0xf]
  %v18 = vld [vmem:[%s0 + $0x14] sm:$0xff]
  %v19 = vld [vmem:[%s0 + $0x1c] sm:$0xff]
  %v20 = vld [vmem:[%s0 + $0x24] sm:$0xf]
  %v21 = vld [vmem:[%s0 + $0x28] sm:$0xff]
  %v22 = vld [vmem:[%s0 + $0x30] sm:$0xff]
  %v23 = vld [vmem:[%s0 + $0x38] sm:$0xf]
  %v24 = vld [vmem:[%s0 + $0x3c] sm:$0xff]
  %v25 = vld [vmem:[%s0 + $0x44] sm:$0xff]
  %v26 = vld [vmem:[%s0 + $0x4c] sm:$0xf]
  %v27 = vmax.bf16 %v15, 0
  %v28 = vmax.bf16 %v16, 0
  %v29 = vmax.bf16 %v17, 0
  %v30 = vmax.bf16 %v18, 0
  %v31 = vmax.bf16 %v19, 0
  %v32 = vmax.bf16 %v20, 0
  %v33 = vmax.bf16 %v21, 0
  %v34 = vmax.bf16 %v22, 0
  %v35 = vmax.bf16 %v23, 0
  %v36 = vmax.bf16 %v24, 0
  %v37 = vmax.bf16 %v25, 0
  %v38 = vmax.bf16 %v26, 0
  %v39 = vld [vmem:[%s1] sm:$0xf]
  %v40 = vld [vmem:[%s1 + $0x4] sm:$0xf]
  %v41 = vld [vmem:[%s1 + $0x8] sm:$0xf]
  %v42 = vld [vmem:[%s1 + $0xc] sm:$0xf]
  %v43 = vld [vmem:[%s1 + $0x10] sm:$0xf]
  %v44 = vld [vmem:[%s1 + $0x14] sm:$0xf]
  %v45 = vld [vmem:[%s1 + $0x18] sm:$0xf]
  %v46 = vld [vmem:[%s1 + $0x1c] sm:$0xf]
  %v47 = vld [vmem:[%s1 + $0x20] sm:$0xf]
  %v48 = vld [vmem:[%s1 + $0x24] sm:$0xf]
  %v49 = vld [vmem:[%s1 + $0x28] sm:$0xf]
  %v50 = vld [vmem:[%s1 + $0x2c] sm:$0xf]
  %v51 = vld [vmem:[%s1 + $0x30] sm:$0xf]
  %v52 = vld [vmem:[%s1 + $0x34] sm:$0xf]
  %v53 = vld [vmem:[%s1 + $0x38] sm:$0xf]
  %v54 = vld [vmem:[%s1 + $0x3c] sm:$0xf]
  %v55 = vld [vmem:[%s1 + $0x40] sm:$0xf]
  %v56 = vld [vmem:[%s1 + $0x44] sm:$0xf]
  %v57 = vld [vmem:[%s1 + $0x48] sm:$0xf]
  %v58 = vld [vmem:[%s1 + $0x4c] sm:$0xf]
  %v59 = vld [vmem:[%s1 + $0x50] sm:$0xf]
  %v60 = vld [vmem:[%s1 + $0x54] sm:$0xf]
  %v61 = vld [vmem:[%s1 + $0x58] sm:$0xf]
  %v62 = vld [vmem:[%s1 + $0x5c] sm:$0xf]
  %v63 = vld [vmem:[%s1 + $0x60] sm:$0xf]
  %v64 = vld [vmem:[%s1 + $0x64] sm:$0xf]
  %v65 = vld [vmem:[%s1 + $0x68] sm:$0xf]
  %v66 = vld [vmem:[%s1 + $0x6c] sm:$0xf]
  %v67 = vld [vmem:[%s1 + $0x70] sm:$0xf]
  %v68 = vld [vmem:[%s1 + $0x74] sm:$0xf]
  %v69 = vld [vmem:[%s1 + $0x78] sm:$0xf]
  %v70 = vld [vmem:[%s1 + $0x7c] sm:$0xf]
  %v71 = vld [vmem:[%s1 + $0x80] sm:$0xf]
  %v72 = vld [vmem:[%s1 + $0x84] sm:$0xf]
  %v73 = vld [vmem:[%s1 + $0x88] sm:$0xf]
  %v74 = vld [vmem:[%s1 + $0x8c] sm:$0xf]
  %v75 = vld [vmem:[%s1 + $0x90] sm:$0xf]
  %v76 = vld [vmem:[%s1 + $0x94] sm:$0xf]
  %v77 = vld [vmem:[%s1 + $0x98] sm:$0xf]
  %v78 = vld [vmem:[%s1 + $0x9c] sm:$0xf]
  %v79 = vld [vmem:[%s1 + $0xa0] sm:$0xf]
  %v80 = vld [vmem:[%s1 + $0xa4] sm:$0xf]
  %v81 = vld [vmem:[%s1 + $0xa8] sm:$0xf]
  %v82 = vld [vmem:[%s1 + $0xac] sm:$0xf]
  %v83 = vld [vmem:[%s1 + $0xb0] sm:$0xf]
  %v84 = vld [vmem:[%s1 + $0xb4] sm:$0xf]
  %v85 = vld [vmem:[%s1 + $0xb8] sm:$0xf]
  %v86 = vld [vmem:[%s1 + $0xbc] sm:$0xf]
  %v87 = vld [vmem:[%s1 + $0xc0] sm:$0xf]
  %v88 = vld [vmem:[%s1 + $0xc4] sm:$0xf]
  %v89 = vld [vmem:[%s1 + $0xc8] sm:$0xf]
  %v90 = vld [vmem:[%s1 + $0xcc] sm:$0xf]
  %v91 = vld [vmem:[%s1 + $0xd0] sm:$0xf]
  %v92 = vld [vmem:[%s1 + $0xd4] sm:$0xf]
  %v93 = vld [vmem:[%s1 + $0xd8] sm:$0xf]
  %v94 = vld [vmem:[%s1 + $0xdc] sm:$0xf]
  %v95 = vld [vmem:[%s1 + $0xe0] sm:$0xf]
  %v96 = vld [vmem:[%s1 + $0xe4] sm:$0xf]
  %v97 = vld [vmem:[%s1 + $0xe8] sm:$0xf]
  %v98 = vld [vmem:[%s1 + $0xec] sm:$0xf]
  %v99 = vld [vmem:[%s1 + $0xf0] sm:$0xf]
  %v100 = vld [vmem:[%s1 + $0xf4] sm:$0xf]
  %v101 = vld [vmem:[%s1 + $0xf8] sm:$0xf]
  %v102 = vld [vmem:[%s1 + $0xfc] sm:$0xf]
  %v103 = vld [vmem:[%s1 + $0x100] sm:$0xf]
  %v104 = vld [vmem:[%s1 + $0x104] sm:$0xf]
  %v105 = vld [vmem:[%s1 + $0x108] sm:$0xf]
  %v106 = vld [vmem:[%s1 + $0x10c] sm:$0xf]
  %v107 = vld [vmem:[%s1 + $0x110] sm:$0xf]
  %v108 = vld [vmem:[%s1 + $0x114] sm:$0xf]
  %v109 = vld [vmem:[%s1 + $0x118] sm:$0xf]
  %v110 = vld [vmem:[%s1 + $0x11c] sm:$0xf]
  %v111 = vld [vmem:[%s2] sm:$0x1]
  %v113 = vlaneseq
  %v114 = vshrl.u32 %v113, 7
  %v115 = vsub.s32 0, %v114
  %v116 = vrot.slane %v111, %v115
  %v130 = vunpack.c.l.b16 %v27
  %v131 = vunpack.c.h.b16 %v27
  %v132 = vunpack.c.l.b16 %v28
  %v133 = vunpack.c.h.b16 %v28
  %v134 = vunpack.c.l.b16 %v29
  %v135 = vunpack.c.l.b16 %v30
  %v136 = vunpack.c.h.b16 %v30
  %v137 = vunpack.c.l.b16 %v31
  %v138 = vunpack.c.h.b16 %v31
  %v139 = vunpack.c.l.b16 %v32
  %v140 = vunpack.c.l.b16 %v33
  %v141 = vunpack.c.h.b16 %v33
  %v142 = vunpack.c.l.b16 %v34
  %v143 = vunpack.c.h.b16 %v34
  %v144 = vunpack.c.l.b16 %v35
  %v145 = vunpack.c.l.b16 %v36
  %v146 = vunpack.c.h.b16 %v36
  %v147 = vunpack.c.l.b16 %v37
  %v148 = vunpack.c.h.b16 %v37
  %v149 = vunpack.c.l.b16 %v38
  %v150 = vpack.c.b16 %v135, %v130
  %v151 = vpack.c.b16 %v136, %v131
  %v152 = vpack.c.b16 %v137, %v132
  %v153 = vpack.c.b16 %v138, %v133
  %v154 = vpack.c.b16 %v139, %v134
  %v155 = vpack.c.b16 %v145, %v140
  %v156 = vpack.c.b16 %v146, %v141
  %v157 = vpack.c.b16 %v147, %v142
  %v158 = vpack.c.b16 %v148, %v143
  %v159 = vpack.c.b16 %v149, %v144
  %v240 = vunpack.c.l.b16 %v39
  %v241 = vunpack.c.l.b16 %v40
  %v242 = vunpack.c.l.b16 %v41
  %v243 = vunpack.c.l.b16 %v42
  %v244 = vunpack.c.l.b16 %v43
  %v245 = vunpack.c.l.b16 %v44
  %v246 = vunpack.c.l.b16 %v45
  %v247 = vunpack.c.l.b16 %v46
  %v248 = vunpack.c.l.b16 %v47
  %v249 = vunpack.c.l.b16 %v48
  %v250 = vunpack.c.l.b16 %v49
  %v251 = vunpack.c.l.b16 %v50
  %v252 = vunpack.c.l.b16 %v51
  %v253 = vunpack.c.l.b16 %v52
  %v254 = vunpack.c.l.b16 %v53
  %v255 = vunpack.c.l.b16 %v54
  %v256 = vunpack.c.l.b16 %v55
  %v257 = vunpack.c.l.b16 %v56
  %v258 = vunpack.c.l.b16 %v57
  %v259 = vunpack.c.l.b16 %v58
  %v260 = vunpack.c.l.b16 %v59
  %v261 = vunpack.c.l.b16 %v60
  %v262 = vunpack.c.l.b16 %v61
  %v263 = vunpack.c.l.b16 %v62
  %v264 = vunpack.c.l.b16 %v63
  %v265 = vunpack.c.l.b16 %v64
  %v266 = vunpack.c.l.b16 %v65
  %v267 = vunpack.c.l.b16 %v66
  %v268 = vunpack.c.l.b16 %v67
  %v269 = vunpack.c.l.b16 %v68
  %v270 = vunpack.c.l.b16 %v69
  %v271 = vunpack.c.l.b16 %v70
  %v272 = vunpack.c.l.b16 %v71
  %v273 = vunpack.c.l.b16 %v72
  %v274 = vunpack.c.l.b16 %v73
  %v275 = vunpack.c.l.b16 %v74
  %v276 = vunpack.c.l.b16 %v75
  %v277 = vunpack.c.l.b16 %v76
  %v278 = vunpack.c.l.b16 %v77
  %v279 = vunpack.c.l.b16 %v78
  %v280 = vunpack.c.l.b16 %v79
  %v281 = vunpack.c.l.b16 %v80
  %v282 = vunpack.c.l.b16 %v81
  %v283 = vunpack.c.l.b16 %v82
  %v284 = vunpack.c.l.b16 %v83
  %v285 = vunpack.c.l.b16 %v84
  %v286 = vunpack.c.l.b16 %v85
  %v287 = vunpack.c.l.b16 %v86
  %v288 = vunpack.c.l.b16 %v87
  %v289 = vunpack.c.l.b16 %v88
  %v290 = vunpack.c.l.b16 %v89
  %v291 = vunpack.c.l.b16 %v90
  %v292 = vunpack.c.l.b16 %v91
  %v293 = vunpack.c.l.b16 %v92
  %v294 = vunpack.c.l.b16 %v93
  %v295 = vunpack.c.l.b16 %v94
  %v296 = vunpack.c.l.b16 %v95
  %v297 = vunpack.c.l.b16 %v96
  %v298 = vunpack.c.l.b16 %v97
  %v299 = vunpack.c.l.b16 %v98
  %v300 = vunpack.c.l.b16 %v99
  %v301 = vunpack.c.l.b16 %v100
  %v302 = vunpack.c.l.b16 %v101
  %v303 = vunpack.c.l.b16 %v102
  %v304 = vunpack.c.l.b16 %v103
  %v305 = vunpack.c.l.b16 %v104
  %v306 = vunpack.c.l.b16 %v105
  %v307 = vunpack.c.l.b16 %v106
  %v308 = vunpack.c.l.b16 %v107
  %v309 = vunpack.c.l.b16 %v108
  %v310 = vunpack.c.l.b16 %v109
  %v311 = vunpack.c.l.b16 %v110
  %v312 = vpack.c.b16 %v241, %v240
  %v313 = vpack.c.b16 %v243, %v242
  %v314 = vpack.c.b16 %v245, %v244
  %v315 = vpack.c.b16 %v247, %v246
  %v316 = vpack.c.b16 %v249, %v248
  %v317 = vpack.c.b16 %v251, %v250
  %v318 = vpack.c.b16 %v253, %v252
  %v319 = vpack.c.b16 %v255, %v254
  %v320 = vpack.c.b16 %v257, %v256
  %v321 = vpack.c.b16 %v259, %v258
  %v322 = vpack.c.b16 %v261, %v260
  %v323 = vpack.c.b16 %v263, %v262
  %v324 = vpack.c.b16 %v265, %v264
  %v325 = vpack.c.b16 %v267, %v266
  %v326 = vpack.c.b16 %v269, %v268
  %v327 = vpack.c.b16 %v271, %v270
  %v328 = vpack.c.b16 %v273, %v272
  %v329 = vpack.c.b16 %v275, %v274
  %v330 = vpack.c.b16 %v277, %v276
  %v331 = vpack.c.b16 %v279, %v278
  %v332 = vpack.c.b16 %v281, %v280
  %v333 = vpack.c.b16 %v283, %v282
  %v334 = vpack.c.b16 %v285, %v284
  %v335 = vpack.c.b16 %v287, %v286
  %v336 = vpack.c.b16 %v289, %v288
  %v337 = vpack.c.b16 %v291, %v290
  %v338 = vpack.c.b16 %v293, %v292
  %v339 = vpack.c.b16 %v295, %v294
  %v340 = vpack.c.b16 %v297, %v296
  %v341 = vpack.c.b16 %v299, %v298
  %v342 = vpack.c.b16 %v301, %v300
  %v343 = vpack.c.b16 %v303, %v302
  %v344 = vpack.c.b16 %v305, %v304
  %v345 = vpack.c.b16 %v307, %v306
  %v346 = vpack.c.b16 %v309, %v308
  %v347 = vpack.c.b16 %v311, %v310
  %vm384 = vcmask 523264
  %v386 = vsel %vm384, %v154, 0
  %v389 = vsel %vm384, %v159, 0
  %391 = vmatprep.subr.bf16.mxu0 0
  %392 = vmatpush1.bf16.msra.mxu0 %v312
  %393 = vmatprep.subr.bf16.mxu0 0
  %394 = vmatpush1.bf16.msra.mxu0 %v313
  %395 = vmatprep.subr.bf16.mxu0 0
  %396 = vmatpush1.bf16.msra.mxu0 %v314
  %397 = vmatprep.subr.bf16.mxu0 0
  %398 = vmatpush1.bf16.msra.mxu0 %v315
  %399 = vmatprep.subr.bf16.mxu0 0
  %400 = vmatpush1.bf16.msra.mxu0 %v316
  %401 = vmatprep.subr.bf16.mxu0 0
  %402 = vmatpush1.bf16.msra.mxu0 %v317
  %403 = vmatprep.subr.bf16.mxu0 0
  %404 = vmatpush1.bf16.msra.mxu0 %v318
  %405 = vmatprep.subr.bf16.mxu0 0
  %406 = vmatpush1.bf16.msra.mxu0 %v319
  %407 = vmatprep.subr.bf16.mxu0 0
  %408 = vmatpush1.bf16.msra.mxu0 %v320
  %409 = vmatprep.subr.bf16.mxu0 0
  %410 = vmatpush1.bf16.msra.mxu0 %v321
  %411 = vmatprep.subr.bf16.mxu0 0
  %412 = vmatpush1.bf16.msra.mxu0 %v322
  %413 = vmatprep.subr.bf16.mxu0 0
  %414 = vmatpush1.bf16.msra.mxu0 %v323
  %415 = vmatprep.subr.bf16.mxu0 0
  %416 = vmatpush1.bf16.msra.mxu0 %v324
  %417 = vmatprep.subr.bf16.mxu0 0
  %418 = vmatpush1.bf16.msra.mxu0 %v325
  %419 = vmatprep.subr.bf16.mxu0 0
  %420 = vmatpush1.bf16.msra.mxu0 %v326
  %421 = vmatprep.subr.bf16.mxu0 0
  %422 = vmatpush1.bf16.msra.mxu0 %v327
  %423 = vmatprep.mubr.bf16.mxu0 %v151
  %424 = vmatmul.mubr.bf16.gmra.mrb[0].mxu0 %v150
  %v425 = vpop.f32.mrb[0].mxu0
  %v426 = vadd.f32 %v116, %v425
  %v427 = vpop.f32.mrb[0].mxu0
  %v428 = vpop.f32.mrb[0].mxu0
  %v429 = vadd.f32 %v116, %v428
  %v430 = vpop.f32.mrb[0].mxu0
  %431 = vmatprep.mubr.bf16.mxu0 %v156
  %432 = vmatmul.mubr.bf16.gmra.mrb[0].mxu0 %v155
  %v433 = vpop.f32.mrb[0].mxu0
  %v434 = vadd.f32 %v116, %v433
  %v435 = vpop.f32.mrb[0].mxu0
  %v436 = vpop.f32.mrb[0].mxu0
  %v437 = vadd.f32 %v116, %v436
  %v438 = vpop.f32.mrb[0].mxu0
  %439 = vdwg.mxu0
  %440 = vmatprep.subr.bf16.mxu0 0
  %441 = vmatpush1.bf16.msra.mxu0 %v328
  %442 = vmatprep.subr.bf16.mxu0 0
  %443 = vmatpush1.bf16.msra.mxu0 %v329
  %444 = vmatprep.subr.bf16.mxu0 0
  %445 = vmatpush1.bf16.msra.mxu0 %v330
  %446 = vmatprep.subr.bf16.mxu0 0
  %447 = vmatpush1.bf16.msra.mxu0 %v331
  %448 = vmatprep.subr.bf16.mxu0 0
  %449 = vmatpush1.bf16.msra.mxu0 %v332
  %450 = vmatprep.subr.bf16.mxu0 0
  %451 = vmatpush1.bf16.msra.mxu0 %v333
  %452 = vmatprep.subr.bf16.mxu0 0
  %453 = vmatpush1.bf16.msra.mxu0 %v334
  %454 = vmatprep.subr.bf16.mxu0 0
  %455 = vmatpush1.bf16.msra.mxu0 %v335
  %456 = vmatprep.subr.bf16.mxu0 0
  %457 = vmatpush1.bf16.msra.mxu0 %v336
  %458 = vmatprep.subr.bf16.mxu0 0
  %459 = vmatpush1.bf16.msra.mxu0 %v337
  %460 = vmatprep.subr.bf16.mxu0 0
  %461 = vmatpush1.bf16.msra.mxu0 %v338
  %462 = vmatprep.subr.bf16.mxu0 0
  %463 = vmatpush1.bf16.msra.mxu0 %v339
  %464 = vmatprep.subr.bf16.mxu0 0
  %465 = vmatpush1.bf16.msra.mxu0 %v340
  %466 = vmatprep.subr.bf16.mxu0 0
  %467 = vmatpush1.bf16.msra.mxu0 %v341
  %468 = vmatprep.subr.bf16.mxu0 0
  %469 = vmatpush1.bf16.msra.mxu0 %v342
  %470 = vmatprep.subr.bf16.mxu0 0
  %471 = vmatpush1.bf16.msra.mxu0 %v343
  %472 = vmatprep.mubr.bf16.mxu0 %v153
  %473 = vmatmul.mubr.bf16.gmra.mrb[0].mxu0 %v152
  %v474 = vpop.f32.mrb[0].mxu0
  %v475 = vadd.f32 %v426, %v474
  %v476 = vpop.f32.mrb[0].mxu0
  %v477 = vpop.f32.mrb[0].mxu0
  %v478 = vadd.f32 %v429, %v477
  %v479 = vpop.f32.mrb[0].mxu0
  %480 = vmatprep.mubr.bf16.mxu0 %v158
  %481 = vmatmul.mubr.bf16.gmra.mrb[0].mxu0 %v157
  %v482 = vpop.f32.mrb[0].mxu0
  %v483 = vadd.f32 %v434, %v482
  %v484 = vpop.f32.mrb[0].mxu0
  %v485 = vpop.f32.mrb[0].mxu0
  %v486 = vadd.f32 %v437, %v485
  %v487 = vpop.f32.mrb[0].mxu0
  %488 = vdwg.mxu0
  %489 = vmatprep.subr.bf16.mxu0 0
  %490 = vmatpush1.bf16.msra.mxu0 %v344
  %491 = vmatprep.subr.bf16.mxu0 0
  %492 = vmatpush1.bf16.msra.mxu0 %v345
  %493 = vmatprep.subr.bf16.mxu0 0
  %494 = vmatpush1.bf16.msra.mxu0 %v346
  %495 = vmatprep.subr.bf16.mxu0 0
  %496 = vmatpush1.bf16.msra.mxu0 %v347
  %497 = vmatprep.subr.bf16.mxu0 0
  %498 = vmatpush1.bf16.msra.mxu0 0
  %499 = vmatprep.subr.bf16.mxu0 0
  %500 = vmatpush1.bf16.msra.mxu0 0
  %501 = vmatprep.subr.bf16.mxu0 0
  %502 = vmatpush1.bf16.msra.mxu0 0
  %503 = vmatprep.subr.bf16.mxu0 0
  %504 = vmatpush1.bf16.msra.mxu0 0
  %505 = vmatprep.subr.bf16.mxu0 0
  %506 = vmatpush1.bf16.msra.mxu0 0
  %507 = vmatprep.subr.bf16.mxu0 0
  %508 = vmatpush1.bf16.msra.mxu0 0
  %509 = vmatprep.subr.bf16.mxu0 0
  %510 = vmatpush1.bf16.msra.mxu0 0
  %511 = vmatprep.subr.bf16.mxu0 0
  %512 = vmatpush1.bf16.msra.mxu0 0
  %513 = vmatprep.subr.bf16.mxu0 0
  %514 = vmatpush1.bf16.msra.mxu0 0
  %515 = vmatprep.subr.bf16.mxu0 0
  %516 = vmatpush1.bf16.msra.mxu0 0
  %517 = vmatprep.subr.bf16.mxu0 0
  %518 = vmatpush1.bf16.msra.mxu0 0
  %519 = vmatprep.subr.bf16.mxu0 0
  %520 = vmatpush1.bf16.msra.mxu0 0
  %521 = vmatprep.mubr.bf16.mxu0 0
  %522 = vmatmul.mubr.bf16.gmra.mrb[0].mxu0 %v386
  %v523 = vpop.f32.mrb[0].mxu0
  %v524 = vadd.f32 %v475, %v523
  %v525 = vpop.f32.mrb[0].mxu0
  %v526 = vpop.f32.mrb[0].mxu0
  %v527 = vadd.f32 %v478, %v526
  %v528 = vpop.f32.mrb[0].mxu0
  %529 = vmatprep.mubr.bf16.mxu0 0
  %530 = vmatmul.mubr.bf16.gmra.mrb[0].mxu0 %v389
  %v531 = vpop.f32.mrb[0].mxu0
  %v532 = vadd.f32 %v483, %v531
  %v533 = vpop.f32.mrb[0].mxu0
  %v534 = vpop.f32.mrb[0].mxu0
  %v535 = vadd.f32 %v486, %v534
  %v536 = vpop.f32.mrb[0].mxu0
  %537 = vdwg.mxu0
  %538 = vst [vmem:[%s3] sm:$0xff] %v524
  %539 = vst [vmem:[%s3 + $0x8] sm:$0xff] %v527
  %540 = vst [vmem:[%s3 + $0x10] sm:$0xff] %v532
  %541 = vst [vmem:[%s3 + $0x18] sm:$0xff] %v535
  // Predicated region
  $region14: #{forward.9} parent=0 // pred_check
    _
  $region15: #{forward.9} parent=0 // pred_check_branch
    %543 = sbr.rel (0) target = $region17
  $region16: #{forward.9} parent=0 // pred_region
    _
  $region17: #{forward.9} parent=0 // pred_fallthru
    _
  // Predicated region
  $region18: #{forward.9} parent=0 // pred_check
    _
  $region19: #{forward.9} parent=0 // pred_check_branch
    %545 = sbr.rel (0) target = $region21
  $region20: #{forward.9} parent=0 // pred_region
    _
  $region21: #{forward.9} parent=0 // pred_fallthru
    _

// kernel: closed_call.57
$region0: #{closed_call.57}
  #allocation0 [shape = 'u32[]', space=smem, size = 0x4, offset = 0x4, fixed_abs, tag = 'smem constant byte address 0x4 - core index']
  #allocation1 [shape = 'u32[144,128]{1,0:T(1,128)}', space=vmem, size = 0x12000, scoped, tag = 'internal scratch']
  %s0 = inlined_call_operand.vmem [shape: bf16[32,576], index: 0, kind: input, shape index: {}]
  %s1 = inlined_call_operand.vmem [shape: bf16[576,256], index: 1, kind: input, shape index: {}]
  %s2 = inlined_call_operand.vmem [shape: f32[32,128], index: 2, kind: input, shape index: {}]
  %s3 = inlined_call_operand.vmem [shape: f32[128,256], index: 3, kind: input, shape index: {}]
  %s4 = inlined_call_operand.vmem [shape: f32[1,256], index: 4, kind: input, shape index: {}]
  %s5 = inlined_call_operand.vmem [shape: f32[32,256], index: 5, kind: output, shape index: {}]
  %s6 = sld [smem:[#allocation0]]
  $region30: #{closed_call.57} parent=0
    _
  %s8 = ssub.s32 1, %s6
  %s9 = scalar_select 0, %s8, %s6
  // Predicated region
  $region2: #{closed_call.57} parent=0 // pred_check
    _
  $region3: #{closed_call.57} parent=0 // pred_check_branch
    %11 = sbr.rel (0) target = $region5
  $region4: #{closed_call.57} parent=0 // pred_region
    _
  $region5: #{closed_call.57} parent=0 // pred_fallthru
    _
  // Predicated region
  $region6: #{closed_call.57} parent=0 // pred_check
    _
  $region7: #{closed_call.57} parent=0 // pred_check_branch
    %13 = sbr.rel (0) target = $region9
  $region8: #{closed_call.57} parent=0 // pred_region
    _
  $region9: #{closed_call.57} parent=0 // pred_fallthru
    _
  // Predicated region
  $region10: #{closed_call.57} parent=0 // pred_check
    _
  $region11: #{closed_call.57} parent=0 // pred_check_branch
    %15 = sbr.rel (0) target = $region13
  $region12: #{closed_call.57} parent=0 // pred_region
    _
  $region13: #{closed_call.57} parent=0 // pred_fallthru
    _
  // Predicated region
  $region14: #{closed_call.57} parent=0 // pred_check
    _
  $region15: #{closed_call.57} parent=0 // pred_check_branch
    %17 = sbr.rel (0) target = $region17
  $region16: #{closed_call.57} parent=0 // pred_region
    _
  $region17: #{closed_call.57} parent=0 // pred_fallthru
    _
  // Predicated region
  $region18: #{closed_call.57} parent=0 // pred_check
    _
  $region19: #{closed_call.57} parent=0 // pred_check_branch
    %19 = sbr.rel (0) target = $region21
  $region20: #{closed_call.57} parent=0 // pred_region
    _
  $region21: #{closed_call.57} parent=0 // pred_fallthru
    _
  %v21 = vld [vmem:[%s0] sm:$0xff]
  %v22 = vld [vmem:[%s0 + $0x8] sm:$0xff]
  %v23 = vld [vmem:[%s0 + $0x10] sm:$0xf]
  %v24 = vld [vmem:[%s0 + $0x14] sm:$0xff]
  %v25 = vld [vmem:[%s0 + $0x1c] sm:$0xff]
  %v26 = vld [vmem:[%s0 + $0x24] sm:$0xf]
  %v27 = vld [vmem:[%s0 + $0x28] sm:$0xff]
  %v28 = vld [vmem:[%s0 + $0x30] sm:$0xff]
  %v29 = vld [vmem:[%s0 + $0x38] sm:$0xf]
  %v30 = vld [vmem:[%s0 + $0x3c] sm:$0xff]
  %v31 = vld [vmem:[%s0 + $0x44] sm:$0xff]
  %v32 = vld [vmem:[%s0 + $0x4c] sm:$0xf]
  %v33 = vld [vmem:[%s1] sm:$0xff]
  %v34 = vld [vmem:[%s1 + $0x8] sm:$0xff]
  %v35 = vld [vmem:[%s1 + $0x10] sm:$0xff]
  %v36 = vld [vmem:[%s1 + $0x18] sm:$0xff]
  %v37 = vld [vmem:[%s1 + $0x20] sm:$0xff]
  %v38 = vld [vmem:[%s1 + $0x28] sm:$0xff]
  %v39 = vld [vmem:[%s1 + $0x30] sm:$0xff]
  %v40 = vld [vmem:[%s1 + $0x38] sm:$0xff]
  %v41 = vld [vmem:[%s1 + $0x40] sm:$0xff]
  %v42 = vld [vmem:[%s1 + $0x48] sm:$0xff]
  %v43 = vld [vmem:[%s1 + $0x50] sm:$0xff]
  %v44 = vld [vmem:[%s1 + $0x58] sm:$0xff]
  %v45 = vld [vmem:[%s1 + $0x60] sm:$0xff]
  %v46 = vld [vmem:[%s1 + $0x68] sm:$0xff]
  %v47 = vld [vmem:[%s1 + $0x70] sm:$0xff]
  %v48 = vld [vmem:[%s1 + $0x78] sm:$0xff]
  %v49 = vld [vmem:[%s1 + $0x80] sm:$0xff]
  %v50 = vld [vmem:[%s1 + $0x88] sm:$0xff]
  %v51 = vld [vmem:[%s1 + $0x90] sm:$0xff]
  %v52 = vld [vmem:[%s1 + $0x98] sm:$0xff]
  %v53 = vld [vmem:[%s1 + $0xa0] sm:$0xff]
  %v54 = vld [vmem:[%s1 + $0xa8] sm:$0xff]
  %v55 = vld [vmem:[%s1 + $0xb0] sm:$0xff]
  %v56 = vld [vmem:[%s1 + $0xb8] sm:$0xff]
  %v57 = vld [vmem:[%s1 + $0xc0] sm:$0xff]
  %v58 = vld [vmem:[%s1 + $0xc8] sm:$0xff]
  %v59 = vld [vmem:[%s1 + $0xd0] sm:$0xff]
  %v60 = vld [vmem:[%s1 + $0xd8] sm:$0xff]
  %v61 = vld [vmem:[%s1 + $0xe0] sm:$0xff]
  %v62 = vld [vmem:[%s1 + $0xe8] sm:$0xff]
  %v63 = vld [vmem:[%s1 + $0xf0] sm:$0xff]
  %v64 = vld [vmem:[%s1 + $0xf8] sm:$0xff]
  %v65 = vld [vmem:[%s1 + $0x100] sm:$0xff]
  %v66 = vld [vmem:[%s1 + $0x108] sm:$0xff]
  %v67 = vld [vmem:[%s1 + $0x110] sm:$0xff]
  %v68 = vld [vmem:[%s1 + $0x118] sm:$0xff]
  %v69 = vld [vmem:[%s1 + $0x120] sm:$0xff]
  %v70 = vld [vmem:[%s1 + $0x128] sm:$0xff]
  %v71 = vld [vmem:[%s1 + $0x130] sm:$0xff]
  %v72 = vld [vmem:[%s1 + $0x138] sm:$0xff]
  %v73 = vld [vmem:[%s1 + $0x140] sm:$0xff]
  %v74 = vld [vmem:[%s1 + $0x148] sm:$0xff]
  %v75 = vld [vmem:[%s1 + $0x150] sm:$0xff]
  %v76 = vld [vmem:[%s1 + $0x158] sm:$0xff]
  %v77 = vld [vmem:[%s1 + $0x160] sm:$0xff]
  %v78 = vld [vmem:[%s1 + $0x168] sm:$0xff]
  %v79 = vld [vmem:[%s1 + $0x170] sm:$0xff]
  %v80 = vld [vmem:[%s1 + $0x178] sm:$0xff]
  %v81 = vld [vmem:[%s1 + $0x180] sm:$0xff]
  %v82 = vld [vmem:[%s1 + $0x188] sm:$0xff]
  %v83 = vld [vmem:[%s1 + $0x190] sm:$0xff]
  %v84 = vld [vmem:[%s1 + $0x198] sm:$0xff]
  %v85 = vld [vmem:[%s1 + $0x1a0] sm:$0xff]
  %v86 = vld [vmem:[%s1 + $0x1a8] sm:$0xff]
  %v87 = vld [vmem:[%s1 + $0x1b0] sm:$0xff]
  %v88 = vld [vmem:[%s1 + $0x1b8] sm:$0xff]
  %v89 = vld [vmem:[%s1 + $0x1c0] sm:$0xff]
  %v90 = vld [vmem:[%s1 + $0x1c8] sm:$0xff]
  %v91 = vld [vmem:[%s1 + $0x1d0] sm:$0xff]
  %v92 = vld [vmem:[%s1 + $0x1d8] sm:$0xff]
  %v93 = vld [vmem:[%s1 + $0x1e0] sm:$0xff]
  %v94 = vld [vmem:[%s1 + $0x1e8] sm:$0xff]
  %v95 = vld [vmem:[%s1 + $0x1f0] sm:$0xff]
  %v96 = vld [vmem:[%s1 + $0x1f8] sm:$0xff]
  %v97 = vld [vmem:[%s1 + $0x200] sm:$0xff]
  %v98 = vld [vmem:[%s1 + $0x208] sm:$0xff]
  %v99 = vld [vmem:[%s1 + $0x210] sm:$0xff]
  %v100 = vld [vmem:[%s1 + $0x218] sm:$0xff]
  %v101 = vld [vmem:[%s1 + $0x220] sm:$0xff]
  %v102 = vld [vmem:[%s1 + $0x228] sm:$0xff]
  %v103 = vld [vmem:[%s1 + $0x230] sm:$0xff]
  %v104 = vld [vmem:[%s1 + $0x238] sm:$0xff]
  %v105 = vld [vmem:[%s2] sm:$0xff]
  %v106 = vld [vmem:[%s2 + $0x8] sm:$0xff]
  %v107 = vld [vmem:[%s2 + $0x10] sm:$0xff]
  %v108 = vld [vmem:[%s2 + $0x18] sm:$0xff]
  %v109 = vld [vmem:[%s3] sm:$0xff]
  %v110 = vld [vmem:[%s3 + $0x8] sm:$0xff]
  %v111 = vld [vmem:[%s3 + $0x10] sm:$0xff]
  %v112 = vld [vmem:[%s3 + $0x18] sm:$0xff]
  %v113 = vld [vmem:[%s3 + $0x20] sm:$0xff]
  %v114 = vld [vmem:[%s3 + $0x28] sm:$0xff]
  %v115 = vld [vmem:[%s3 + $0x30] sm:$0xff]
  %v116 = vld [vmem:[%s3 + $0x38] sm:$0xff]
  %v117 = vld [vmem:[%s3 + $0x40] sm:$0xff]
  %v118 = vld [vmem:[%s3 + $0x48] sm:$0xff]
  %v119 = vld [vmem:[%s3 + $0x50] sm:$0xff]
  %v120 = vld [vmem:[%s3 + $0x58] sm:$0xff]
  %v121 = vld [vmem:[%s3 + $0x60] sm:$0xff]
  %v122 = vld [vmem:[%s3 + $0x68] sm:$0xff]
  %v123 = vld [vmem:[%s3 + $0x70] sm:$0xff]
  %v124 = vld [vmem:[%s3 + $0x78] sm:$0xff]
  %v125 = vld [vmem:[%s3 + $0x80] sm:$0xff]
  %v126 = vld [vmem:[%s3 + $0x88] sm:$0xff]
  %v127 = vld [vmem:[%s3 + $0x90] sm:$0xff]
  %v128 = vld [vmem:[%s3 + $0x98] sm:$0xff]
  %v129 = vld [vmem:[%s3 + $0xa0] sm:$0xff]
  %v130 = vld [vmem:[%s3 + $0xa8] sm:$0xff]
  %v131 = vld [vmem:[%s3 + $0xb0] sm:$0xff]
  %v132 = vld [vmem:[%s3 + $0xb8] sm:$0xff]
  %v133 = vld [vmem:[%s3 + $0xc0] sm:$0xff]
  %v134 = vld [vmem:[%s3 + $0xc8] sm:$0xff]
  %v135 = vld [vmem:[%s3 + $0xd0] sm:$0xff]
  %v136 = vld [vmem:[%s3 + $0xd8] sm:$0xff]
  %v137 = vld [vmem:[%s3 + $0xe0] sm:$0xff]
  %v138 = vld [vmem:[%s3 + $0xe8] sm:$0xff]
  %v139 = vld [vmem:[%s3 + $0xf0] sm:$0xff]
  %v140 = vld [vmem:[%s3 + $0xf8] sm:$0xff]
  %141 = vmatprep.subr.mxu0 %v110
  %142 = vmatpush1.msra.mxu0 %v109
  %143 = vmatprep.subr.mxu0 %v112
  %144 = vmatpush1.msra.mxu0 %v111
  %145 = vmatprep.subr.mxu0 %v114
  %146 = vmatpush1.msra.mxu0 %v113
  %147 = vmatprep.subr.mxu0 %v116
  %148 = vmatpush1.msra.mxu0 %v115
  %149 = vmatprep.subr.mxu0 %v118
  %150 = vmatpush1.msra.mxu0 %v117
  %151 = vmatprep.subr.mxu0 %v120
  %152 = vmatpush1.msra.mxu0 %v119
  %153 = vmatprep.subr.mxu0 %v122
  %154 = vmatpush1.msra.mxu0 %v121
  %155 = vmatprep.subr.mxu0 %v124
  %156 = vmatpush1.msra.mxu0 %v123
  %157 = vmatprep.subr.mxu0 %v126
  %158 = vmatpush1.msra.mxu0 %v125
  %159 = vmatprep.subr.mxu0 %v128
  %160 = vmatpush1.msra.mxu0 %v127
  %161 = vmatprep.subr.mxu0 %v130
  %162 = vmatpush1.msra.mxu0 %v129
  %163 = vmatprep.subr.mxu0 %v132
  %164 = vmatpush1.msra.mxu0 %v131
  %165 = vmatprep.subr.mxu0 %v134
  %166 = vmatpush1.msra.mxu0 %v133
  %167 = vmatprep.subr.mxu0 %v136
  %168 = vmatpush1.msra.mxu0 %v135
  %169 = vmatprep.subr.mxu0 %v138
  %170 = vmatpush1.msra.mxu0 %v137
  %171 = vmatprep.subr.mxu0 %v140
  %172 = vmatpush1.msra.mxu0 %v139
  %173 = vmatprep.subr.mxu0 0.0
  %174 = vmatpush1.msra.mxu0 0.0
  %175 = vmatprep.subr.mxu0 0.0
  %176 = vmatpush1.msra.mxu0 0.0
  %177 = vmatprep.subr.mxu0 0.0
  %178 = vmatpush1.msra.mxu0 0.0
  %179 = vmatprep.subr.mxu0 0.0
  %180 = vmatpush1.msra.mxu0 0.0
  %181 = vmatprep.subr.mxu0 0.0
  %182 = vmatpush1.msra.mxu0 0.0
  %183 = vmatprep.subr.mxu0 0.0
  %184 = vmatpush1.msra.mxu0 0.0
  %185 = vmatprep.subr.mxu0 0.0
  %186 = vmatpush1.msra.mxu0 0.0
  %187 = vmatprep.subr.mxu0 0.0
  %188 = vmatpush1.msra.mxu0 0.0
  %189 = vmatprep.subr.mxu0 0.0
  %190 = vmatpush1.msra.mxu0 0.0
  %191 = vmatprep.subr.mxu0 0.0
  %192 = vmatpush1.msra.mxu0 0.0
  %193 = vmatprep.subr.mxu0 0.0
  %194 = vmatpush1.msra.mxu0 0.0
  %195 = vmatprep.subr.mxu0 0.0
  %196 = vmatpush1.msra.mxu0 0.0
  %197 = vmatprep.subr.mxu0 0.0
  %198 = vmatpush1.msra.mxu0 0.0
  %199 = vmatprep.subr.mxu0 0.0
  %200 = vmatpush1.msra.mxu0 0.0
  %201 = vmatprep.subr.mxu0 0.0
  %202 = vmatpush1.msra.mxu0 0.0
  %203 = vmatprep.subr.mxu0 0.0
  %204 = vmatpush1.msra.mxu0 0.0
  %205 = vmatprep.mubr.f32.mxu0 0.0
  %206 = vmatmul.mubr.f32.gmra.mrb[0].mxu0 %v105
  %v207 = vpop.f32.mrb[0].mxu0
  %v208 = vadd.f32 0.0, %v207
  %v209 = vpop.f32.mrb[0].mxu0
  %v210 = vadd.f32 0.0, %v209
  %211 = vmatprep.mubr.f32.mxu0 0.0
  %212 = vmatmul.mubr.f32.gmra.mrb[0].mxu0 %v106
  %v213 = vpop.f32.mrb[0].mxu0
  %v214 = vadd.f32 0.0, %v213
  %v215 = vpop.f32.mrb[0].mxu0
  %v216 = vadd.f32 0.0, %v215
  %217 = vmatprep.mubr.f32.mxu0 0.0
  %218 = vmatmul.mubr.f32.gmra.mrb[0].mxu0 %v107
  %v219 = vpop.f32.mrb[0].mxu0
  %v220 = vadd.f32 0.0, %v219
  %v221 = vpop.f32.mrb[0].mxu0
  %v222 = vadd.f32 0.0, %v221
  %223 = vmatprep.mubr.f32.mxu0 0.0
  %224 = vmatmul.mubr.f32.gmra.mrb[0].mxu0 %v108
  %v225 = vpop.f32.mrb[0].mxu0
  %v226 = vadd.f32 0.0, %v225
  %v227 = vpop.f32.mrb[0].mxu0
  %v228 = vadd.f32 0.0, %v227
  %229 = vdwg.mxu0
  %v242 = vunpack.c.l.b16 %v21
  %v243 = vunpack.c.h.b16 %v21
  %v244 = vunpack.c.l.b16 %v22
  %v245 = vunpack.c.h.b16 %v22
  %v246 = vunpack.c.l.b16 %v23
  %v247 = vunpack.c.l.b16 %v24
  %v248 = vunpack.c.h.b16 %v24
  %v249 = vunpack.c.l.b16 %v25
  %v250 = vunpack.c.h.b16 %v25
  %v251 = vunpack.c.l.b16 %v26
  %v252 = vunpack.c.l.b16 %v27
  %v253 = vunpack.c.h.b16 %v27
  %v254 = vunpack.c.l.b16 %v28
  %v255 = vunpack.c.h.b16 %v28
  %v256 = vunpack.c.l.b16 %v29
  %v257 = vunpack.c.l.b16 %v30
  %v258 = vunpack.c.h.b16 %v30
  %v259 = vunpack.c.l.b16 %v31
  %v260 = vunpack.c.h.b16 %v31
  %v261 = vunpack.c.l.b16 %v32
  %v262 = vpack.c.b16 %v247, %v242
  %v263 = vpack.c.b16 %v248, %v243
  %v264 = vpack.c.b16 %v249, %v244
  %v265 = vpack.c.b16 %v250, %v245
  %v266 = vpack.c.b16 %v251, %v246
  %v267 = vpack.c.b16 %v257, %v252
  %v268 = vpack.c.b16 %v258, %v253
  %v269 = vpack.c.b16 %v259, %v254
  %v270 = vpack.c.b16 %v260, %v255
  %v271 = vpack.c.b16 %v261, %v256
  %v352 = vunpack.c.l.b16 %v33
  %v353 = vunpack.c.h.b16 %v33
  %v354 = vunpack.c.l.b16 %v34
  %v355 = vunpack.c.h.b16 %v34
  %v356 = vunpack.c.l.b16 %v35
  %v357 = vunpack.c.h.b16 %v35
  %v358 = vunpack.c.l.b16 %v36
  %v359 = vunpack.c.h.b16 %v36
  %v360 = vunpack.c.l.b16 %v37
  %v361 = vunpack.c.h.b16 %v37
  %v362 = vunpack.c.l.b16 %v38
  %v363 = vunpack.c.h.b16 %v38
  %v364 = vunpack.c.l.b16 %v39
  %v365 = vunpack.c.h.b16 %v39
  %v366 = vunpack.c.l.b16 %v40
  %v367 = vunpack.c.h.b16 %v40
  %v368 = vunpack.c.l.b16 %v41
  %v369 = vunpack.c.h.b16 %v41
  %v370 = vunpack.c.l.b16 %v42
  %v371 = vunpack.c.h.b16 %v42
  %v372 = vunpack.c.l.b16 %v43
  %v373 = vunpack.c.h.b16 %v43
  %v374 = vunpack.c.l.b16 %v44
  %v375 = vunpack.c.h.b16 %v44
  %v376 = vunpack.c.l.b16 %v45
  %v377 = vunpack.c.h.b16 %v45
  %v378 = vunpack.c.l.b16 %v46
  %v379 = vunpack.c.h.b16 %v46
  %v380 = vunpack.c.l.b16 %v47
  %v381 = vunpack.c.h.b16 %v47
  %v382 = vunpack.c.l.b16 %v48
  %v383 = vunpack.c.h.b16 %v48
  %v384 = vunpack.c.l.b16 %v49
  %v385 = vunpack.c.h.b16 %v49
  %v386 = vunpack.c.l.b16 %v50
  %v387 = vunpack.c.h.b16 %v50
  %v388 = vunpack.c.l.b16 %v51
  %v389 = vunpack.c.h.b16 %v51
  %v390 = vunpack.c.l.b16 %v52
  %v391 = vunpack.c.h.b16 %v52
  %v392 = vunpack.c.l.b16 %v53
  %v393 = vunpack.c.h.b16 %v53
  %v394 = vunpack.c.l.b16 %v54
  %v395 = vunpack.c.h.b16 %v54
  %v396 = vunpack.c.l.b16 %v55
  %v397 = vunpack.c.h.b16 %v55
  %v398 = vunpack.c.l.b16 %v56
  %v399 = vunpack.c.h.b16 %v56
  %v400 = vunpack.c.l.b16 %v57
  %v401 = vunpack.c.h.b16 %v57
  %v402 = vunpack.c.l.b16 %v58
  %v403 = vunpack.c.h.b16 %v58
  %v404 = vunpack.c.l.b16 %v59
  %v405 = vunpack.c.h.b16 %v59
  %v406 = vunpack.c.l.b16 %v60
  %v407 = vunpack.c.h.b16 %v60
  %v408 = vunpack.c.l.b16 %v61
  %v409 = vunpack.c.h.b16 %v61
  %v410 = vunpack.c.l.b16 %v62
  %v411 = vunpack.c.h.b16 %v62
  %v412 = vunpack.c.l.b16 %v63
  %v413 = vunpack.c.h.b16 %v63
  %v414 = vunpack.c.l.b16 %v64
  %v415 = vunpack.c.h.b16 %v64
  %v416 = vunpack.c.l.b16 %v65
  %v417 = vunpack.c.h.b16 %v65
  %v418 = vunpack.c.l.b16 %v66
  %v419 = vunpack.c.h.b16 %v66
  %v420 = vunpack.c.l.b16 %v67
  %v421 = vunpack.c.h.b16 %v67
  %v422 = vunpack.c.l.b16 %v68
  %v423 = vunpack.c.h.b16 %v68
  %v424 = vunpack.c.l.b16 %v69
  %v425 = vunpack.c.h.b16 %v69
  %v426 = vunpack.c.l.b16 %v70
  %v427 = vunpack.c.h.b16 %v70
  %v428 = vunpack.c.l.b16 %v71
  %v429 = vunpack.c.h.b16 %v71
  %v430 = vunpack.c.l.b16 %v72
  %v431 = vunpack.c.h.b16 %v72
  %v432 = vunpack.c.l.b16 %v73
  %v433 = vunpack.c.h.b16 %v73
  %v434 = vunpack.c.l.b16 %v74
  %v435 = vunpack.c.h.b16 %v74
  %v436 = vunpack.c.l.b16 %v75
  %v437 = vunpack.c.h.b16 %v75
  %v438 = vunpack.c.l.b16 %v76
  %v439 = vunpack.c.h.b16 %v76
  %v440 = vunpack.c.l.b16 %v77
  %v441 = vunpack.c.h.b16 %v77
  %v442 = vunpack.c.l.b16 %v78
  %v443 = vunpack.c.h.b16 %v78
  %v444 = vunpack.c.l.b16 %v79
  %v445 = vunpack.c.h.b16 %v79
  %v446 = vunpack.c.l.b16 %v80
  %v447 = vunpack.c.h.b16 %v80
  %v448 = vunpack.c.l.b16 %v81
  %v449 = vunpack.c.h.b16 %v81
  %v450 = vunpack.c.l.b16 %v82
  %v451 = vunpack.c.h.b16 %v82
  %v452 = vunpack.c.l.b16 %v83
  %v453 = vunpack.c.h.b16 %v83
  %v454 = vunpack.c.l.b16 %v84
  %v455 = vunpack.c.h.b16 %v84
  %v456 = vunpack.c.l.b16 %v85
  %v457 = vunpack.c.h.b16 %v85
  %v458 = vunpack.c.l.b16 %v86
  %v459 = vunpack.c.h.b16 %v86
  %v460 = vunpack.c.l.b16 %v87
  %v461 = vunpack.c.h.b16 %v87
  %v462 = vunpack.c.l.b16 %v88
  %v463 = vunpack.c.h.b16 %v88
  %v464 = vunpack.c.l.b16 %v89
  %v465 = vunpack.c.h.b16 %v89
  %v466 = vunpack.c.l.b16 %v90
  %v467 = vunpack.c.h.b16 %v90
  %v468 = vunpack.c.l.b16 %v91
  %v469 = vunpack.c.h.b16 %v91
  %v470 = vunpack.c.l.b16 %v92
  %v471 = vunpack.c.h.b16 %v92
  %v472 = vunpack.c.l.b16 %v93
  %v473 = vunpack.c.h.b16 %v93
  %v474 = vunpack.c.l.b16 %v94
  %v475 = vunpack.c.h.b16 %v94
  %v476 = vunpack.c.l.b16 %v95
  %v477 = vunpack.c.h.b16 %v95
  %v478 = vunpack.c.l.b16 %v96
  %v479 = vunpack.c.h.b16 %v96
  %v480 = vunpack.c.l.b16 %v97
  %v481 = vunpack.c.h.b16 %v97
  %v482 = vunpack.c.l.b16 %v98
  %v483 = vunpack.c.h.b16 %v98
  %v484 = vunpack.c.l.b16 %v99
  %v485 = vunpack.c.h.b16 %v99
  %v486 = vunpack.c.l.b16 %v100
  %v487 = vunpack.c.h.b16 %v100
  %v488 = vunpack.c.l.b16 %v101
  %v489 = vunpack.c.h.b16 %v101
  %v490 = vunpack.c.l.b16 %v102
  %v491 = vunpack.c.h.b16 %v102
  %v492 = vunpack.c.l.b16 %v103
  %v493 = vunpack.c.h.b16 %v103
  %v494 = vunpack.c.l.b16 %v104
  %v495 = vunpack.c.h.b16 %v104
  %v496 = vpack.c.b16 %v354, %v352
  %v497 = vpack.c.b16 %v355, %v353
  %v498 = vpack.c.b16 %v358, %v356
  %v499 = vpack.c.b16 %v359, %v357
  %v500 = vpack.c.b16 %v362, %v360
  %v501 = vpack.c.b16 %v363, %v361
  %v502 = vpack.c.b16 %v366, %v364
  %v503 = vpack.c.b16 %v367, %v365
  %v504 = vpack.c.b16 %v370, %v368
  %v505 = vpack.c.b16 %v371, %v369
  %v506 = vpack.c.b16 %v374, %v372
  %v507 = vpack.c.b16 %v375, %v373
  %v508 = vpack.c.b16 %v378, %v376
  %v509 = vpack.c.b16 %v379, %v377
  %v510 = vpack.c.b16 %v382, %v380
  %v511 = vpack.c.b16 %v383, %v381
  %v512 = vpack.c.b16 %v386, %v384
  %v513 = vpack.c.b16 %v387, %v385
  %v514 = vpack.c.b16 %v390, %v388
  %v515 = vpack.c.b16 %v391, %v389
  %v516 = vpack.c.b16 %v394, %v392
  %v517 = vpack.c.b16 %v395, %v393
  %v518 = vpack.c.b16 %v398, %v396
  %v519 = vpack.c.b16 %v399, %v397
  %v520 = vpack.c.b16 %v402, %v400
  %v521 = vpack.c.b16 %v403, %v401
  %v522 = vpack.c.b16 %v406, %v404
  %v523 = vpack.c.b16 %v407, %v405
  %v524 = vpack.c.b16 %v410, %v408
  %v525 = vpack.c.b16 %v411, %v409
  %v526 = vpack.c.b16 %v414, %v412
  %v527 = vpack.c.b16 %v415, %v413
  %v528 = vpack.c.b16 %v418, %v416
  %v529 = vpack.c.b16 %v419, %v417
  %v530 = vpack.c.b16 %v422, %v420
  %v531 = vpack.c.b16 %v423, %v421
  %v532 = vpack.c.b16 %v426, %v424
  %v533 = vpack.c.b16 %v427, %v425
  %v534 = vpack.c.b16 %v430, %v428
  %v535 = vpack.c.b16 %v431, %v429
  %v536 = vpack.c.b16 %v434, %v432
  %v537 = vpack.c.b16 %v435, %v433
  %v538 = vpack.c.b16 %v438, %v436
  %v539 = vpack.c.b16 %v439, %v437
  %v540 = vpack.c.b16 %v442, %v440
  %v541 = vpack.c.b16 %v443, %v441
  %v542 = vpack.c.b16 %v446, %v444
  %v543 = vpack.c.b16 %v447, %v445
  %v544 = vpack.c.b16 %v450, %v448
  %v545 = vpack.c.b16 %v451, %v449
  %v546 = vpack.c.b16 %v454, %v452
  %v547 = vpack.c.b16 %v455, %v453
  %v548 = vpack.c.b16 %v458, %v456
  %v549 = vpack.c.b16 %v459, %v457
  %v550 = vpack.c.b16 %v462, %v460
  %v551 = vpack.c.b16 %v463, %v461
  %v552 = vpack.c.b16 %v466, %v464
  %v553 = vpack.c.b16 %v467, %v465
  %v554 = vpack.c.b16 %v470, %v468
  %v555 = vpack.c.b16 %v471, %v469
  %v556 = vpack.c.b16 %v474, %v472
  %v557 = vpack.c.b16 %v475, %v473
  %v558 = vpack.c.b16 %v478, %v476
  %v559 = vpack.c.b16 %v479, %v477
  %v560 = vpack.c.b16 %v482, %v480
  %v561 = vpack.c.b16 %v483, %v481
  %v562 = vpack.c.b16 %v486, %v484
  %v563 = vpack.c.b16 %v487, %v485
  %v564 = vpack.c.b16 %v490, %v488
  %v565 = vpack.c.b16 %v491, %v489
  %v566 = vpack.c.b16 %v494, %v492
  %v567 = vpack.c.b16 %v495, %v493
  %vm640 = vcmask 523264
  %v642 = vsel %vm640, %v266, 0
  %v645 = vsel %vm640, %v271, 0
  %647 = vmatprep.subr.bf16.mxu0 %v497
  %648 = vmatpush1.bf16.msra.mxu0 %v496
  %649 = vmatprep.subr.bf16.mxu0 %v499
  %650 = vmatpush1.bf16.msra.mxu0 %v498
  %651 = vmatprep.subr.bf16.mxu0 %v501
  %652 = vmatpush1.bf16.msra.mxu0 %v500
  %653 = vmatprep.subr.bf16.mxu0 %v503
  %654 = vmatpush1.bf16.msra.mxu0 %v502
  %655 = vmatprep.subr.bf16.mxu0 %v505
  %656 = vmatpush1.bf16.msra.mxu0 %v504
  %657 = vmatprep.subr.bf16.mxu0 %v507
  %658 = vmatpush1.bf16.msra.mxu0 %v506
  %659 = vmatprep.subr.bf16.mxu0 %v509
  %660 = vmatpush1.bf16.msra.mxu0 %v508
  %661 = vmatprep.subr.bf16.mxu0 %v511
  %662 = vmatpush1.bf16.msra.mxu0 %v510
  %663 = vmatprep.subr.bf16.mxu0 %v513
  %664 = vmatpush1.bf16.msra.mxu0 %v512
  %665 = vmatprep.subr.bf16.mxu0 %v515
  %666 = vmatpush1.bf16.msra.mxu0 %v514
  %667 = vmatprep.subr.bf16.mxu0 %v517
  %668 = vmatpush1.bf16.msra.mxu0 %v516
  %669 = vmatprep.subr.bf16.mxu0 %v519
  %670 = vmatpush1.bf16.msra.mxu0 %v518
  %671 = vmatprep.subr.bf16.mxu0 %v521
  %672 = vmatpush1.bf16.msra.mxu0 %v520
  %673 = vmatprep.subr.bf16.mxu0 %v523
  %674 = vmatpush1.bf16.msra.mxu0 %v522
  %675 = vmatprep.subr.bf16.mxu0 %v525
  %676 = vmatpush1.bf16.msra.mxu0 %v524
  %677 = vmatprep.subr.bf16.mxu0 %v527
  %678 = vmatpush1.bf16.msra.mxu0 %v526
  %679 = vmatprep.mubr.bf16.mxu0 %v263
  %680 = vmatmul.mubr.bf16.gmra.mrb[0].mxu0 %v262
  %v681 = vpop.f32.mrb[0].mxu0
  %v682 = vadd.f32 %v208, %v681
  %v683 = vpop.f32.mrb[0].mxu0
  %v684 = vadd.f32 %v210, %v683
  %v685 = vpop.f32.mrb[0].mxu0
  %v686 = vadd.f32 %v214, %v685
  %v687 = vpop.f32.mrb[0].mxu0
  %v688 = vadd.f32 %v216, %v687
  %689 = vmatprep.mubr.bf16.mxu0 %v268
  %690 = vmatmul.mubr.bf16.gmra.mrb[0].mxu0 %v267
  %v691 = vpop.f32.mrb[0].mxu0
  %v692 = vadd.f32 %v220, %v691
  %v693 = vpop.f32.mrb[0].mxu0
  %v694 = vadd.f32 %v222, %v693
  %v695 = vpop.f32.mrb[0].mxu0
  %v696 = vadd.f32 %v226, %v695
  %v697 = vpop.f32.mrb[0].mxu0
  %v698 = vadd.f32 %v228, %v697
  %699 = vdwg.mxu0
  %700 = vmatprep.subr.bf16.mxu0 %v529
  %701 = vmatpush1.bf16.msra.mxu0 %v528
  %702 = vmatprep.subr.bf16.mxu0 %v531
  %703 = vmatpush1.bf16.msra.mxu0 %v530
  %704 = vmatprep.subr.bf16.mxu0 %v533
  %705 = vmatpush1.bf16.msra.mxu0 %v532
  %706 = vmatprep.subr.bf16.mxu0 %v535
  %707 = vmatpush1.bf16.msra.mxu0 %v534
  %708 = vmatprep.subr.bf16.mxu0 %v537
  %709 = vmatpush1.bf16.msra.mxu0 %v536
  %710 = vmatprep.subr.bf16.mxu0 %v539
  %711 = vmatpush1.bf16.msra.mxu0 %v538
  %712 = vmatprep.subr.bf16.mxu0 %v541
  %713 = vmatpush1.bf16.msra.mxu0 %v540
  %714 = vmatprep.subr.bf16.mxu0 %v543
  %715 = vmatpush1.bf16.msra.mxu0 %v542
  %716 = vmatprep.subr.bf16.mxu0 %v545
  %717 = vmatpush1.bf16.msra.mxu0 %v544
  %718 = vmatprep.subr.bf16.mxu0 %v547
  %719 = vmatpush1.bf16.msra.mxu0 %v546
  %720 = vmatprep.subr.bf16.mxu0 %v549
  %721 = vmatpush1.bf16.msra.mxu0 %v548
  %722 = vmatprep.subr.bf16.mxu0 %v551
  %723 = vmatpush1.bf16.msra.mxu0 %v550
  %724 = vmatprep.subr.bf16.mxu0 %v553
  %725 = vmatpush1.bf16.msra.mxu0 %v552
  %726 = vmatprep.subr.bf16.mxu0 %v555
  %727 = vmatpush1.bf16.msra.mxu0 %v554
  %728 = vmatprep.subr.bf16.mxu0 %v557
  %729 = vmatpush1.bf16.msra.mxu0 %v556
  %730 = vmatprep.subr.bf16.mxu0 %v559
  %731 = vmatpush1.bf16.msra.mxu0 %v558
  %732 = vmatprep.mubr.bf16.mxu0 %v265
  %733 = vmatmul.mubr.bf16.gmra.mrb[0].mxu0 %v264
  %v734 = vpop.f32.mrb[0].mxu0
  %v735 = vadd.f32 %v682, %v734
  %v736 = vpop.f32.mrb[0].mxu0
  %v737 = vadd.f32 %v684, %v736
  %v738 = vpop.f32.mrb[0].mxu0
  %v739 = vadd.f32 %v686, %v738
  %v740 = vpop.f32.mrb[0].mxu0
  %v741 = vadd.f32 %v688, %v740
  %742 = vmatprep.mubr.bf16.mxu0 %v270
  %743 = vmatmul.mubr.bf16.gmra.mrb[0].mxu0 %v269
  %v744 = vpop.f32.mrb[0].mxu0
  %v745 = vadd.f32 %v692, %v744
  %v746 = vpop.f32.mrb[0].mxu0
  %v747 = vadd.f32 %v694, %v746
  %v748 = vpop.f32.mrb[0].mxu0
  %v749 = vadd.f32 %v696, %v748
  %v750 = vpop.f32.mrb[0].mxu0
  %v751 = vadd.f32 %v698, %v750
  %752 = vdwg.mxu0
  %753 = vmatprep.subr.bf16.mxu0 %v561
  %754 = vmatpush1.bf16.msra.mxu0 %v560
  %755 = vmatprep.subr.bf16.mxu0 %v563
  %756 = vmatpush1.bf16.msra.mxu0 %v562
  %757 = vmatprep.subr.bf16.mxu0 %v565
  %758 = vmatpush1.bf16.msra.mxu0 %v564
  %759 = vmatprep.subr.bf16.mxu0 %v567
  %760 = vmatpush1.bf16.msra.mxu0 %v566
  %761 = vmatprep.subr.bf16.mxu0 0
  %762 = vmatpush1.bf16.msra.mxu0 0
  %763 = vmatprep.subr.bf16.mxu0 0
  %764 = vmatpush1.bf16.msra.mxu0 0
  %765 = vmatprep.subr.bf16.mxu0 0
  %766 = vmatpush1.bf16.msra.mxu0 0
  %767 = vmatprep.subr.bf16.mxu0 0
  %768 = vmatpush1.bf16.msra.mxu0 0
  %769 = vmatprep.subr.bf16.mxu0 0
  %770 = vmatpush1.bf16.msra.mxu0 0
  %771 = vmatprep.subr.bf16.mxu0 0
  %772 = vmatpush1.bf16.msra.mxu0 0
  %773 = vmatprep.subr.bf16.mxu0 0
  %774 = vmatpush1.bf16.msra.mxu0 0
  %775 = vmatprep.subr.bf16.mxu0 0
  %776 = vmatpush1.bf16.msra.mxu0 0
  %777 = vmatprep.subr.bf16.mxu0 0
  %778 = vmatpush1.bf16.msra.mxu0 0
  %779 = vmatprep.subr.bf16.mxu0 0
  %780 = vmatpush1.bf16.msra.mxu0 0
  %781 = vmatprep.subr.bf16.mxu0 0
  %782 = vmatpush1.bf16.msra.mxu0 0
  %783 = vmatprep.subr.bf16.mxu0 0
  %784 = vmatpush1.bf16.msra.mxu0 0
  %785 = vmatprep.mubr.bf16.mxu0 0
  %786 = vmatmul.mubr.bf16.gmra.mrb[0].mxu0 %v642
  %v787 = vpop.f32.mrb[0].mxu0
  %v788 = vadd.f32 %v735, %v787
  %v789 = vpop.f32.mrb[0].mxu0
  %v790 = vadd.f32 %v737, %v789
  %v791 = vpop.f32.mrb[0].mxu0
  %v792 = vadd.f32 %v739, %v791
  %v793 = vpop.f32.mrb[0].mxu0
  %v794 = vadd.f32 %v741, %v793
  %795 = vmatprep.mubr.bf16.mxu0 0
  %796 = vmatmul.mubr.bf16.gmra.mrb[0].mxu0 %v645
  %v797 = vpop.f32.mrb[0].mxu0
  %v798 = vadd.f32 %v745, %v797
  %v799 = vpop.f32.mrb[0].mxu0
  %v800 = vadd.f32 %v747, %v799
  %v801 = vpop.f32.mrb[0].mxu0
  %v802 = vadd.f32 %v749, %v801
  %v803 = vpop.f32.mrb[0].mxu0
  %v804 = vadd.f32 %v751, %v803
  %805 = vdwg.mxu0
  %v806 = vld [vmem:[%s4] sm:$0x3]
  %v808 = vlaneseq
  %v809 = vshrl.u32 %v808, 7
  %v810 = vsub.s32 0, %v809
  %v811 = vrot.slane %v806, %v810
  %v812 = vlaneseq
  %v813 = vshrl.u32 %v812, 7
  %v814 = vsub.s32 1, %v813
  %v815 = vrot.slane %v806, %v814
  %v818 = vadd.f32 %v788, %v811
  %v819 = vadd.f32 %v790, %v815
  %v820 = vadd.f32 %v792, %v811
  %v821 = vadd.f32 %v794, %v815
  %v822 = vadd.f32 %v798, %v811
  %v823 = vadd.f32 %v800, %v815
  %v824 = vadd.f32 %v802, %v811
  %v825 = vadd.f32 %v804, %v815
  %826 = vst [vmem:[%s5] sm:$0xff] %v818
  %827 = vst [vmem:[%s5 + $0x8] sm:$0xff] %v819
  %828 = vst [vmem:[%s5 + $0x10] sm:$0xff] %v820
  %829 = vst [vmem:[%s5 + $0x18] sm:$0xff] %v821
  %830 = vst [vmem:[%s5 + $0x20] sm:$0xff] %v822
  %831 = vst [vmem:[%s5 + $0x28] sm:$0xff] %v823
  %832 = vst [vmem:[%s5 + $0x30] sm:$0xff] %v824
  %833 = vst [vmem:[%s5 + $0x38] sm:$0xff] %v825
  // Predicated region
  $region22: #{closed_call.57} parent=0 // pred_check
    _
  $region23: #{closed_call.57} parent=0 // pred_check_branch
    %835 = sbr.rel (0) target = $region25
  $region24: #{closed_call.57} parent=0 // pred_region
    _
  $region25: #{closed_call.57} parent=0 // pred_fallthru
    _
  // Predicated region
  $region26: #{closed_call.57} parent=0 // pred_check
    _
  $region27: #{closed_call.57} parent=0 // pred_check_branch
    %837 = sbr.rel (0) target = $region29
  $region28: #{closed_call.57} parent=0 // pred_region
    _
  $region29: #{closed_call.57} parent=0 // pred_fallthru
    _

// kernel: closed_call.58
$region0: #{closed_call.58}
  #allocation0 [shape = 'u32[]', space=smem, size = 0x4, offset = 0x4, fixed_abs, tag = 'smem constant byte address 0x4 - core index']
  #allocation1 [shape = 'u32[144,128]{1,0:T(1,128)}', space=vmem, size = 0x12000, scoped, tag = 'internal scratch']
  %s0 = inlined_call_operand.vmem [shape: bf16[32,576], index: 0, kind: input, shape index: {}]
  %s1 = inlined_call_operand.vmem [shape: bf16[576,128], index: 1, kind: input, shape index: {}]
  %s2 = inlined_call_operand.vmem [shape: f32[32,128], index: 2, kind: input, shape index: {}]
  %s3 = inlined_call_operand.vmem [shape: f32[128,128], index: 3, kind: input, shape index: {}]
  %s4 = inlined_call_operand.vmem [shape: f32[1,128], index: 4, kind: input, shape index: {}]
  %s5 = inlined_call_operand.vmem [shape: f32[32,128], index: 5, kind: output, shape index: {}]
  %s6 = sld [smem:[#allocation0]]
  $region30: #{closed_call.58} parent=0
    _
  %s8 = ssub.s32 1, %s6
  %s9 = scalar_select 0, %s8, %s6
  // Predicated region
  $region2: #{closed_call.58} parent=0 // pred_check
    _
  $region3: #{closed_call.58} parent=0 // pred_check_branch
    %11 = sbr.rel (0) target = $region5
  $region4: #{closed_call.58} parent=0 // pred_region
    _
  $region5: #{closed_call.58} parent=0 // pred_fallthru
    _
  // Predicated region
  $region6: #{closed_call.58} parent=0 // pred_check
    _
  $region7: #{closed_call.58} parent=0 // pred_check_branch
    %13 = sbr.rel (0) target = $region9
  $region8: #{closed_call.58} parent=0 // pred_region
    _
  $region9: #{closed_call.58} parent=0 // pred_fallthru
    _
  // Predicated region
  $region10: #{closed_call.58} parent=0 // pred_check
    _
  $region11: #{closed_call.58} parent=0 // pred_check_branch
    %15 = sbr.rel (0) target = $region13
  $region12: #{closed_call.58} parent=0 // pred_region
    _
  $region13: #{closed_call.58} parent=0 // pred_fallthru
    _
  // Predicated region
  $region14: #{closed_call.58} parent=0 // pred_check
    _
  $region15: #{closed_call.58} parent=0 // pred_check_branch
    %17 = sbr.rel (0) target = $region17
  $region16: #{closed_call.58} parent=0 // pred_region
    _
  $region17: #{closed_call.58} parent=0 // pred_fallthru
    _
  // Predicated region
  $region18: #{closed_call.58} parent=0 // pred_check
    _
  $region19: #{closed_call.58} parent=0 // pred_check_branch
    %19 = sbr.rel (0) target = $region21
  $region20: #{closed_call.58} parent=0 // pred_region
    _
  $region21: #{closed_call.58} parent=0 // pred_fallthru
    _
  %v21 = vld [vmem:[%s0] sm:$0xff]
  %v22 = vld [vmem:[%s0 + $0x8] sm:$0xff]
  %v23 = vld [vmem:[%s0 + $0x10] sm:$0xf]
  %v24 = vld [vmem:[%s0 + $0x14] sm:$0xff]
  %v25 = vld [vmem:[%s0 + $0x1c] sm:$0xff]
  %v26 = vld [vmem:[%s0 + $0x24] sm:$0xf]
  %v27 = vld [vmem:[%s0 + $0x28] sm:$0xff]
  %v28 = vld [vmem:[%s0 + $0x30] sm:$0xff]
  %v29 = vld [vmem:[%s0 + $0x38] sm:$0xf]
  %v30 = vld [vmem:[%s0 + $0x3c] sm:$0xff]
  %v31 = vld [vmem:[%s0 + $0x44] sm:$0xff]
  %v32 = vld [vmem:[%s0 + $0x4c] sm:$0xf]
  %v33 = vld [vmem:[%s1] sm:$0xf]
  %v34 = vld [vmem:[%s1 + $0x4] sm:$0xf]
  %v35 = vld [vmem:[%s1 + $0x8] sm:$0xf]
  %v36 = vld [vmem:[%s1 + $0xc] sm:$0xf]
  %v37 = vld [vmem:[%s1 + $0x10] sm:$0xf]
  %v38 = vld [vmem:[%s1 + $0x14] sm:$0xf]
  %v39 = vld [vmem:[%s1 + $0x18] sm:$0xf]
  %v40 = vld [vmem:[%s1 + $0x1c] sm:$0xf]
  %v41 = vld [vmem:[%s1 + $0x20] sm:$0xf]
  %v42 = vld [vmem:[%s1 + $0x24] sm:$0xf]
  %v43 = vld [vmem:[%s1 + $0x28] sm:$0xf]
  %v44 = vld [vmem:[%s1 + $0x2c] sm:$0xf]
  %v45 = vld [vmem:[%s1 + $0x30] sm:$0xf]
  %v46 = vld [vmem:[%s1 + $0x34] sm:$0xf]
  %v47 = vld [vmem:[%s1 + $0x38] sm:$0xf]
  %v48 = vld [vmem:[%s1 + $0x3c] sm:$0xf]
  %v49 = vld [vmem:[%s1 + $0x40] sm:$0xf]
  %v50 = vld [vmem:[%s1 + $0x44] sm:$0xf]
  %v51 = vld [vmem:[%s1 + $0x48] sm:$0xf]
  %v52 = vld [vmem:[%s1 + $0x4c] sm:$0xf]
  %v53 = vld [vmem:[%s1 + $0x50] sm:$0xf]
  %v54 = vld [vmem:[%s1 + $0x54] sm:$0xf]
  %v55 = vld [vmem:[%s1 + $0x58] sm:$0xf]
  %v56 = vld [vmem:[%s1 + $0x5c] sm:$0xf]
  %v57 = vld [vmem:[%s1 + $0x60] sm:$0xf]
  %v58 = vld [vmem:[%s1 + $0x64] sm:$0xf]
  %v59 = vld [vmem:[%s1 + $0x68] sm:$0xf]
  %v60 = vld [vmem:[%s1 + $0x6c] sm:$0xf]
  %v61 = vld [vmem:[%s1 + $0x70] sm:$0xf]
  %v62 = vld [vmem:[%s1 + $0x74] sm:$0xf]
  %v63 = vld [vmem:[%s1 + $0x78] sm:$0xf]
  %v64 = vld [vmem:[%s1 + $0x7c] sm:$0xf]
  %v65 = vld [vmem:[%s1 + $0x80] sm:$0xf]
  %v66 = vld [vmem:[%s1 + $0x84] sm:$0xf]
  %v67 = vld [vmem:[%s1 + $0x88] sm:$0xf]
  %v68 = vld [vmem:[%s1 + $0x8c] sm:$0xf]
  %v69 = vld [vmem:[%s1 + $0x90] sm:$0xf]
  %v70 = vld [vmem:[%s1 + $0x94] sm:$0xf]
  %v71 = vld [vmem:[%s1 + $0x98] sm:$0xf]
  %v72 = vld [vmem:[%s1 + $0x9c] sm:$0xf]
  %v73 = vld [vmem:[%s1 + $0xa0] sm:$0xf]
  %v74 = vld [vmem:[%s1 + $0xa4] sm:$0xf]
  %v75 = vld [vmem:[%s1 + $0xa8] sm:$0xf]
  %v76 = vld [vmem:[%s1 + $0xac] sm:$0xf]
  %v77 = vld [vmem:[%s1 + $0xb0] sm:$0xf]
  %v78 = vld [vmem:[%s1 + $0xb4] sm:$0xf]
  %v79 = vld [vmem:[%s1 + $0xb8] sm:$0xf]
  %v80 = vld [vmem:[%s1 + $0xbc] sm:$0xf]
  %v81 = vld [vmem:[%s1 + $0xc0] sm:$0xf]
  %v82 = vld [vmem:[%s1 + $0xc4] sm:$0xf]
  %v83 = vld [vmem:[%s1 + $0xc8] sm:$0xf]
  %v84 = vld [vmem:[%s1 + $0xcc] sm:$0xf]
  %v85 = vld [vmem:[%s1 + $0xd0] sm:$0xf]
  %v86 = vld [vmem:[%s1 + $0xd4] sm:$0xf]
  %v87 = vld [vmem:[%s1 + $0xd8] sm:$0xf]
  %v88 = vld [vmem:[%s1 + $0xdc] sm:$0xf]
  %v89 = vld [vmem:[%s1 + $0xe0] sm:$0xf]
  %v90 = vld [vmem:[%s1 + $0xe4] sm:$0xf]
  %v91 = vld [vmem:[%s1 + $0xe8] sm:$0xf]
  %v92 = vld [vmem:[%s1 + $0xec] sm:$0xf]
  %v93 = vld [vmem:[%s1 + $0xf0] sm:$0xf]
  %v94 = vld [vmem:[%s1 + $0xf4] sm:$0xf]
  %v95 = vld [vmem:[%s1 + $0xf8] sm:$0xf]
  %v96 = vld [vmem:[%s1 + $0xfc] sm:$0xf]
  %v97 = vld [vmem:[%s1 + $0x100] sm:$0xf]
  %v98 = vld [vmem:[%s1 + $0x104] sm:$0xf]
  %v99 = vld [vmem:[%s1 + $0x108] sm:$0xf]
  %v100 = vld [vmem:[%s1 + $0x10c] sm:$0xf]
  %v101 = vld [vmem:[%s1 + $0x110] sm:$0xf]
  %v102 = vld [vmem:[%s1 + $0x114] sm:$0xf]
  %v103 = vld [vmem:[%s1 + $0x118] sm:$0xf]
  %v104 = vld [vmem:[%s1 + $0x11c] sm:$0xf]
  %v105 = vld [vmem:[%s2] sm:$0xff]
  %v106 = vld [vmem:[%s2 + $0x8] sm:$0xff]
  %v107 = vld [vmem:[%s2 + $0x10] sm:$0xff]
  %v108 = vld [vmem:[%s2 + $0x18] sm:$0xff]
  %v109 = vld [vmem:[%s3] sm:$0xff]
  %v110 = vld [vmem:[%s3 + $0x8] sm:$0xff]
  %v111 = vld [vmem:[%s3 + $0x10] sm:$0xff]
  %v112 = vld [vmem:[%s3 + $0x18] sm:$0xff]
  %v113 = vld [vmem:[%s3 + $0x20] sm:$0xff]
  %v114 = vld [vmem:[%s3 + $0x28] sm:$0xff]
  %v115 = vld [vmem:[%s3 + $0x30] sm:$0xff]
  %v116 = vld [vmem:[%s3 + $0x38] sm:$0xff]
  %v117 = vld [vmem:[%s3 + $0x40] sm:$0xff]
  %v118 = vld [vmem:[%s3 + $0x48] sm:$0xff]
  %v119 = vld [vmem:[%s3 + $0x50] sm:$0xff]
  %v120 = vld [vmem:[%s3 + $0x58] sm:$0xff]
  %v121 = vld [vmem:[%s3 + $0x60] sm:$0xff]
  %v122 = vld [vmem:[%s3 + $0x68] sm:$0xff]
  %v123 = vld [vmem:[%s3 + $0x70] sm:$0xff]
  %v124 = vld [vmem:[%s3 + $0x78] sm:$0xff]
  %125 = vmatprep.subr.mxu0 0.0
  %126 = vmatpush1.msra.mxu0 %v109
  %127 = vmatprep.subr.mxu0 0.0
  %128 = vmatpush1.msra.mxu0 %v110
  %129 = vmatprep.subr.mxu0 0.0
  %130 = vmatpush1.msra.mxu0 %v111
  %131 = vmatprep.subr.mxu0 0.0
  %132 = vmatpush1.msra.mxu0 %v112
  %133 = vmatprep.subr.mxu0 0.0
  %134 = vmatpush1.msra.mxu0 %v113
  %135 = vmatprep.subr.mxu0 0.0
  %136 = vmatpush1.msra.mxu0 %v114
  %137 = vmatprep.subr.mxu0 0.0
  %138 = vmatpush1.msra.mxu0 %v115
  %139 = vmatprep.subr.mxu0 0.0
  %140 = vmatpush1.msra.mxu0 %v116
  %141 = vmatprep.subr.mxu0 0.0
  %142 = vmatpush1.msra.mxu0 %v117
  %143 = vmatprep.subr.mxu0 0.0
  %144 = vmatpush1.msra.mxu0 %v118
  %145 = vmatprep.subr.mxu0 0.0
  %146 = vmatpush1.msra.mxu0 %v119
  %147 = vmatprep.subr.mxu0 0.0
  %148 = vmatpush1.msra.mxu0 %v120
  %149 = vmatprep.subr.mxu0 0.0
  %150 = vmatpush1.msra.mxu0 %v121
  %151 = vmatprep.subr.mxu0 0.0
  %152 = vmatpush1.msra.mxu0 %v122
  %153 = vmatprep.subr.mxu0 0.0
  %154 = vmatpush1.msra.mxu0 %v123
  %155 = vmatprep.subr.mxu0 0.0
  %156 = vmatpush1.msra.mxu0 %v124
  %157 = vmatprep.subr.mxu0 0.0
  %158 = vmatpush1.msra.mxu0 0.0
  %159 = vmatprep.subr.mxu0 0.0
  %160 = vmatpush1.msra.mxu0 0.0
  %161 = vmatprep.subr.mxu0 0.0
  %162 = vmatpush1.msra.mxu0 0.0
  %163 = vmatprep.subr.mxu0 0.0
  %164 = vmatpush1.msra.mxu0 0.0
  %165 = vmatprep.subr.mxu0 0.0
  %166 = vmatpush1.msra.mxu0 0.0
  %167 = vmatprep.subr.mxu0 0.0
  %168 = vmatpush1.msra.mxu0 0.0
  %169 = vmatprep.subr.mxu0 0.0
  %170 = vmatpush1.msra.mxu0 0.0
  %171 = vmatprep.subr.mxu0 0.0
  %172 = vmatpush1.msra.mxu0 0.0
  %173 = vmatprep.subr.mxu0 0.0
  %174 = vmatpush1.msra.mxu0 0.0
  %175 = vmatprep.subr.mxu0 0.0
  %176 = vmatpush1.msra.mxu0 0.0
  %177 = vmatprep.subr.mxu0 0.0
  %178 = vmatpush1.msra.mxu0 0.0
  %179 = vmatprep.subr.mxu0 0.0
  %180 = vmatpush1.msra.mxu0 0.0
  %181 = vmatprep.subr.mxu0 0.0
  %182 = vmatpush1.msra.mxu0 0.0
  %183 = vmatprep.subr.mxu0 0.0
  %184 = vmatpush1.msra.mxu0 0.0
  %185 = vmatprep.subr.mxu0 0.0
  %186 = vmatpush1.msra.mxu0 0.0
  %187 = vmatprep.subr.mxu0 0.0
  %188 = vmatpush1.msra.mxu0 0.0
  %189 = vmatprep.mubr.f32.mxu0 0.0
  %190 = vmatmul.mubr.f32.gmra.mrb[0].mxu0 %v105
  %v191 = vpop.f32.mrb[0].mxu0
  %v192 = vadd.f32 0.0, %v191
  %v193 = vpop.f32.mrb[0].mxu0
  %194 = vmatprep.mubr.f32.mxu0 0.0
  %195 = vmatmul.mubr.f32.gmra.mrb[0].mxu0 %v106
  %v196 = vpop.f32.mrb[0].mxu0
  %v197 = vadd.f32 0.0, %v196
  %v198 = vpop.f32.mrb[0].mxu0
  %199 = vmatprep.mubr.f32.mxu0 0.0
  %200 = vmatmul.mubr.f32.gmra.mrb[0].mxu0 %v107
  %v201 = vpop.f32.mrb[0].mxu0
  %v202 = vadd.f32 0.0, %v201
  %v203 = vpop.f32.mrb[0].mxu0
  %204 = vmatprep.mubr.f32.mxu0 0.0
  %205 = vmatmul.mubr.f32.gmra.mrb[0].mxu0 %v108
  %v206 = vpop.f32.mrb[0].mxu0
  %v207 = vadd.f32 0.0, %v206
  %v208 = vpop.f32.mrb[0].mxu0
  %209 = vdwg.mxu0
  %v222 = vunpack.c.l.b16 %v21
  %v223 = vunpack.c.h.b16 %v21
  %v224 = vunpack.c.l.b16 %v22
  %v225 = vunpack.c.h.b16 %v22
  %v226 = vunpack.c.l.b16 %v23
  %v227 = vunpack.c.l.b16 %v24
  %v228 = vunpack.c.h.b16 %v24
  %v229 = vunpack.c.l.b16 %v25
  %v230 = vunpack.c.h.b16 %v25
  %v231 = vunpack.c.l.b16 %v26
  %v232 = vunpack.c.l.b16 %v27
  %v233 = vunpack.c.h.b16 %v27
  %v234 = vunpack.c.l.b16 %v28
  %v235 = vunpack.c.h.b16 %v28
  %v236 = vunpack.c.l.b16 %v29
  %v237 = vunpack.c.l.b16 %v30
  %v238 = vunpack.c.h.b16 %v30
  %v239 = vunpack.c.l.b16 %v31
  %v240 = vunpack.c.h.b16 %v31
  %v241 = vunpack.c.l.b16 %v32
  %v242 = vpack.c.b16 %v227, %v222
  %v243 = vpack.c.b16 %v228, %v223
  %v244 = vpack.c.b16 %v229, %v224
  %v245 = vpack.c.b16 %v230, %v225
  %v246 = vpack.c.b16 %v231, %v226
  %v247 = vpack.c.b16 %v237, %v232
  %v248 = vpack.c.b16 %v238, %v233
  %v249 = vpack.c.b16 %v239, %v234
  %v250 = vpack.c.b16 %v240, %v235
  %v251 = vpack.c.b16 %v241, %v236
  %v332 = vunpack.c.l.b16 %v33
  %v333 = vunpack.c.l.b16 %v34
  %v334 = vunpack.c.l.b16 %v35
  %v335 = vunpack.c.l.b16 %v36
  %v336 = vunpack.c.l.b16 %v37
  %v337 = vunpack.c.l.b16 %v38
  %v338 = vunpack.c.l.b16 %v39
  %v339 = vunpack.c.l.b16 %v40
  %v340 = vunpack.c.l.b16 %v41
  %v341 = vunpack.c.l.b16 %v42
  %v342 = vunpack.c.l.b16 %v43
  %v343 = vunpack.c.l.b16 %v44
  %v344 = vunpack.c.l.b16 %v45
  %v345 = vunpack.c.l.b16 %v46
  %v346 = vunpack.c.l.b16 %v47
  %v347 = vunpack.c.l.b16 %v48
  %v348 = vunpack.c.l.b16 %v49
  %v349 = vunpack.c.l.b16 %v50
  %v350 = vunpack.c.l.b16 %v51
  %v351 = vunpack.c.l.b16 %v52
  %v352 = vunpack.c.l.b16 %v53
  %v353 = vunpack.c.l.b16 %v54
  %v354 = vunpack.c.l.b16 %v55
  %v355 = vunpack.c.l.b16 %v56
  %v356 = vunpack.c.l.b16 %v57
  %v357 = vunpack.c.l.b16 %v58
  %v358 = vunpack.c.l.b16 %v59
  %v359 = vunpack.c.l.b16 %v60
  %v360 = vunpack.c.l.b16 %v61
  %v361 = vunpack.c.l.b16 %v62
  %v362 = vunpack.c.l.b16 %v63
  %v363 = vunpack.c.l.b16 %v64
  %v364 = vunpack.c.l.b16 %v65
  %v365 = vunpack.c.l.b16 %v66
  %v366 = vunpack.c.l.b16 %v67
  %v367 = vunpack.c.l.b16 %v68
  %v368 = vunpack.c.l.b16 %v69
  %v369 = vunpack.c.l.b16 %v70
  %v370 = vunpack.c.l.b16 %v71
  %v371 = vunpack.c.l.b16 %v72
  %v372 = vunpack.c.l.b16 %v73
  %v373 = vunpack.c.l.b16 %v74
  %v374 = vunpack.c.l.b16 %v75
  %v375 = vunpack.c.l.b16 %v76
  %v376 = vunpack.c.l.b16 %v77
  %v377 = vunpack.c.l.b16 %v78
  %v378 = vunpack.c.l.b16 %v79
  %v379 = vunpack.c.l.b16 %v80
  %v380 = vunpack.c.l.b16 %v81
  %v381 = vunpack.c.l.b16 %v82
  %v382 = vunpack.c.l.b16 %v83
  %v383 = vunpack.c.l.b16 %v84
  %v384 = vunpack.c.l.b16 %v85
  %v385 = vunpack.c.l.b16 %v86
  %v386 = vunpack.c.l.b16 %v87
  %v387 = vunpack.c.l.b16 %v88
  %v388 = vunpack.c.l.b16 %v89
  %v389 = vunpack.c.l.b16 %v90
  %v390 = vunpack.c.l.b16 %v91
  %v391 = vunpack.c.l.b16 %v92
  %v392 = vunpack.c.l.b16 %v93
  %v393 = vunpack.c.l.b16 %v94
  %v394 = vunpack.c.l.b16 %v95
  %v395 = vunpack.c.l.b16 %v96
  %v396 = vunpack.c.l.b16 %v97
  %v397 = vunpack.c.l.b16 %v98
  %v398 = vunpack.c.l.b16 %v99
  %v399 = vunpack.c.l.b16 %v100
  %v400 = vunpack.c.l.b16 %v101
  %v401 = vunpack.c.l.b16 %v102
  %v402 = vunpack.c.l.b16 %v103
  %v403 = vunpack.c.l.b16 %v104
  %v404 = vpack.c.b16 %v333, %v332
  %v405 = vpack.c.b16 %v335, %v334
  %v406 = vpack.c.b16 %v337, %v336
  %v407 = vpack.c.b16 %v339, %v338
  %v408 = vpack.c.b16 %v341, %v340
  %v409 = vpack.c.b16 %v343, %v342
  %v410 = vpack.c.b16 %v345, %v344
  %v411 = vpack.c.b16 %v347, %v346
  %v412 = vpack.c.b16 %v349, %v348
  %v413 = vpack.c.b16 %v351, %v350
  %v414 = vpack.c.b16 %v353, %v352
  %v415 = vpack.c.b16 %v355, %v354
  %v416 = vpack.c.b16 %v357, %v356
  %v417 = vpack.c.b16 %v359, %v358
  %v418 = vpack.c.b16 %v361, %v360
  %v419 = vpack.c.b16 %v363, %v362
  %v420 = vpack.c.b16 %v365, %v364
  %v421 = vpack.c.b16 %v367, %v366
  %v422 = vpack.c.b16 %v369, %v368
  %v423 = vpack.c.b16 %v371, %v370
  %v424 = vpack.c.b16 %v373, %v372
  %v425 = vpack.c.b16 %v375, %v374
  %v426 = vpack.c.b16 %v377, %v376
  %v427 = vpack.c.b16 %v379, %v378
  %v428 = vpack.c.b16 %v381, %v380
  %v429 = vpack.c.b16 %v383, %v382
  %v430 = vpack.c.b16 %v385, %v384
  %v431 = vpack.c.b16 %v387, %v386
  %v432 = vpack.c.b16 %v389, %v388
  %v433 = vpack.c.b16 %v391, %v390
  %v434 = vpack.c.b16 %v393, %v392
  %v435 = vpack.c.b16 %v395, %v394
  %v436 = vpack.c.b16 %v397, %v396
  %v437 = vpack.c.b16 %v399, %v398
  %v438 = vpack.c.b16 %v401, %v400
  %v439 = vpack.c.b16 %v403, %v402
  %vm476 = vcmask 523264
  %v478 = vsel %vm476, %v246, 0
  %v481 = vsel %vm476, %v251, 0
  %483 = vmatprep.subr.bf16.mxu0 0
  %484 = vmatpush1.bf16.msra.mxu0 %v404
  %485 = vmatprep.subr.bf16.mxu0 0
  %486 = vmatpush1.bf16.msra.mxu0 %v405
  %487 = vmatprep.subr.bf16.mxu0 0
  %488 = vmatpush1.bf16.msra.mxu0 %v406
  %489 = vmatprep.subr.bf16.mxu0 0
  %490 = vmatpush1.bf16.msra.mxu0 %v407
  %491 = vmatprep.subr.bf16.mxu0 0
  %492 = vmatpush1.bf16.msra.mxu0 %v408
  %493 = vmatprep.subr.bf16.mxu0 0
  %494 = vmatpush1.bf16.msra.mxu0 %v409
  %495 = vmatprep.subr.bf16.mxu0 0
  %496 = vmatpush1.bf16.msra.mxu0 %v410
  %497 = vmatprep.subr.bf16.mxu0 0
  %498 = vmatpush1.bf16.msra.mxu0 %v411
  %499 = vmatprep.subr.bf16.mxu0 0
  %500 = vmatpush1.bf16.msra.mxu0 %v412
  %501 = vmatprep.subr.bf16.mxu0 0
  %502 = vmatpush1.bf16.msra.mxu0 %v413
  %503 = vmatprep.subr.bf16.mxu0 0
  %504 = vmatpush1.bf16.msra.mxu0 %v414
  %505 = vmatprep.subr.bf16.mxu0 0
  %506 = vmatpush1.bf16.msra.mxu0 %v415
  %507 = vmatprep.subr.bf16.mxu0 0
  %508 = vmatpush1.bf16.msra.mxu0 %v416
  %509 = vmatprep.subr.bf16.mxu0 0
  %510 = vmatpush1.bf16.msra.mxu0 %v417
  %511 = vmatprep.subr.bf16.mxu0 0
  %512 = vmatpush1.bf16.msra.mxu0 %v418
  %513 = vmatprep.subr.bf16.mxu0 0
  %514 = vmatpush1.bf16.msra.mxu0 %v419
  %515 = vmatprep.mubr.bf16.mxu0 %v243
  %516 = vmatmul.mubr.bf16.gmra.mrb[0].mxu0 %v242
  %v517 = vpop.f32.mrb[0].mxu0
  %v518 = vadd.f32 %v192, %v517
  %v519 = vpop.f32.mrb[0].mxu0
  %v520 = vpop.f32.mrb[0].mxu0
  %v521 = vadd.f32 %v197, %v520
  %v522 = vpop.f32.mrb[0].mxu0
  %523 = vmatprep.mubr.bf16.mxu0 %v248
  %524 = vmatmul.mubr.bf16.gmra.mrb[0].mxu0 %v247
  %v525 = vpop.f32.mrb[0].mxu0
  %v526 = vadd.f32 %v202, %v525
  %v527 = vpop.f32.mrb[0].mxu0
  %v528 = vpop.f32.mrb[0].mxu0
  %v529 = vadd.f32 %v207, %v528
  %v530 = vpop.f32.mrb[0].mxu0
  %531 = vdwg.mxu0
  %532 = vmatprep.subr.bf16.mxu0 0
  %533 = vmatpush1.bf16.msra.mxu0 %v420
  %534 = vmatprep.subr.bf16.mxu0 0
  %535 = vmatpush1.bf16.msra.mxu0 %v421
  %536 = vmatprep.subr.bf16.mxu0 0
  %537 = vmatpush1.bf16.msra.mxu0 %v422
  %538 = vmatprep.subr.bf16.mxu0 0
  %539 = vmatpush1.bf16.msra.mxu0 %v423
  %540 = vmatprep.subr.bf16.mxu0 0
  %541 = vmatpush1.bf16.msra.mxu0 %v424
  %542 = vmatprep.subr.bf16.mxu0 0
  %543 = vmatpush1.bf16.msra.mxu0 %v425
  %544 = vmatprep.subr.bf16.mxu0 0
  %545 = vmatpush1.bf16.msra.mxu0 %v426
  %546 = vmatprep.subr.bf16.mxu0 0
  %547 = vmatpush1.bf16.msra.mxu0 %v427
  %548 = vmatprep.subr.bf16.mxu0 0
  %549 = vmatpush1.bf16.msra.mxu0 %v428
  %550 = vmatprep.subr.bf16.mxu0 0
  %551 = vmatpush1.bf16.msra.mxu0 %v429
  %552 = vmatprep.subr.bf16.mxu0 0
  %553 = vmatpush1.bf16.msra.mxu0 %v430
  %554 = vmatprep.subr.bf16.mxu0 0
  %555 = vmatpush1.bf16.msra.mxu0 %v431
  %556 = vmatprep.subr.bf16.mxu0 0
  %557 = vmatpush1.bf16.msra.mxu0 %v432
  %558 = vmatprep.subr.bf16.mxu0 0
  %559 = vmatpush1.bf16.msra.mxu0 %v433
  %560 = vmatprep.subr.bf16.mxu0 0
  %561 = vmatpush1.bf16.msra.mxu0 %v434
  %562 = vmatprep.subr.bf16.mxu0 0
  %563 = vmatpush1.bf16.msra.mxu0 %v435
  %564 = vmatprep.mubr.bf16.mxu0 %v245
  %565 = vmatmul.mubr.bf16.gmra.mrb[0].mxu0 %v244
  %v566 = vpop.f32.mrb[0].mxu0
  %v567 = vadd.f32 %v518, %v566
  %v568 = vpop.f32.mrb[0].mxu0
  %v569 = vpop.f32.mrb[0].mxu0
  %v570 = vadd.f32 %v521, %v569
  %v571 = vpop.f32.mrb[0].mxu0
  %572 = vmatprep.mubr.bf16.mxu0 %v250
  %573 = vmatmul.mubr.bf16.gmra.mrb[0].mxu0 %v249
  %v574 = vpop.f32.mrb[0].mxu0
  %v575 = vadd.f32 %v526, %v574
  %v576 = vpop.f32.mrb[0].mxu0
  %v577 = vpop.f32.mrb[0].mxu0
  %v578 = vadd.f32 %v529, %v577
  %v579 = vpop.f32.mrb[0].mxu0
  %580 = vdwg.mxu0
  %581 = vmatprep.subr.bf16.mxu0 0
  %582 = vmatpush1.bf16.msra.mxu0 %v436
  %583 = vmatprep.subr.bf16.mxu0 0
  %584 = vmatpush1.bf16.msra.mxu0 %v437
  %585 = vmatprep.subr.bf16.mxu0 0
  %586 = vmatpush1.bf16.msra.mxu0 %v438
  %587 = vmatprep.subr.bf16.mxu0 0
  %588 = vmatpush1.bf16.msra.mxu0 %v439
  %589 = vmatprep.subr.bf16.mxu0 0
  %590 = vmatpush1.bf16.msra.mxu0 0
  %591 = vmatprep.subr.bf16.mxu0 0
  %592 = vmatpush1.bf16.msra.mxu0 0
  %593 = vmatprep.subr.bf16.mxu0 0
  %594 = vmatpush1.bf16.msra.mxu0 0
  %595 = vmatprep.subr.bf16.mxu0 0
  %596 = vmatpush1.bf16.msra.mxu0 0
  %597 = vmatprep.subr.bf16.mxu0 0
  %598 = vmatpush1.bf16.msra.mxu0 0
  %599 = vmatprep.subr.bf16.mxu0 0
  %600 = vmatpush1.bf16.msra.mxu0 0
  %601 = vmatprep.subr.bf16.mxu0 0
  %602 = vmatpush1.bf16.msra.mxu0 0
  %603 = vmatprep.subr.bf16.mxu0 0
  %604 = vmatpush1.bf16.msra.mxu0 0
  %605 = vmatprep.subr.bf16.mxu0 0
  %606 = vmatpush1.bf16.msra.mxu0 0
  %607 = vmatprep.subr.bf16.mxu0 0
  %608 = vmatpush1.bf16.msra.mxu0 0
  %609 = vmatprep.subr.bf16.mxu0 0
  %610 = vmatpush1.bf16.msra.mxu0 0
  %611 = vmatprep.subr.bf16.mxu0 0
  %612 = vmatpush1.bf16.msra.mxu0 0
  %613 = vmatprep.mubr.bf16.mxu0 0
  %614 = vmatmul.mubr.bf16.gmra.mrb[0].mxu0 %v478
  %v615 = vpop.f32.mrb[0].mxu0
  %v616 = vadd.f32 %v567, %v615
  %v617 = vpop.f32.mrb[0].mxu0
  %v618 = vpop.f32.mrb[0].mxu0
  %v619 = vadd.f32 %v570, %v618
  %v620 = vpop.f32.mrb[0].mxu0
  %621 = vmatprep.mubr.bf16.mxu0 0
  %622 = vmatmul.mubr.bf16.gmra.mrb[0].mxu0 %v481
  %v623 = vpop.f32.mrb[0].mxu0
  %v624 = vadd.f32 %v575, %v623
  %v625 = vpop.f32.mrb[0].mxu0
  %v626 = vpop.f32.mrb[0].mxu0
  %v627 = vadd.f32 %v578, %v626
  %v628 = vpop.f32.mrb[0].mxu0
  %629 = vdwg.mxu0
  %v630 = vld [vmem:[%s4] sm:$0x1]
  %v632 = vlaneseq
  %v633 = vshrl.u32 %v632, 7
  %v634 = vsub.s32 0, %v633
  %v635 = vrot.slane %v630, %v634
  %v637 = vadd.f32 %v616, %v635
  %v638 = vadd.f32 %v619, %v635
  %v639 = vadd.f32 %v624, %v635
  %v640 = vadd.f32 %v627, %v635
  %641 = vst [vmem:[%s5] sm:$0xff] %v637
  %642 = vst [vmem:[%s5 + $0x8] sm:$0xff] %v638
  %643 = vst [vmem:[%s5 + $0x10] sm:$0xff] %v639
  %644 = vst [vmem:[%s5 + $0x18] sm:$0xff] %v640
  // Predicated region
  $region22: #{closed_call.58} parent=0 // pred_check
    _
  $region23: #{closed_call.58} parent=0 // pred_check_branch
    %646 = sbr.rel (0) target = $region25
  $region24: #{closed_call.58} parent=0 // pred_region
    _
  $region25: #{closed_call.58} parent=0 // pred_fallthru
    _
  // Predicated region
  $region26: #{closed_call.58} parent=0 // pred_check
    _
  $region27: #{closed_call.58} parent=0 // pred_check_branch
    %648 = sbr.rel (0) target = $region29
  $region28: #{closed_call.58} parent=0 // pred_region
    _
  $region29: #{closed_call.58} parent=0 // pred_fallthru
    _

</llo_original>
